<compile_context>
chip_gen: v5e
topology: v5e:2x2
jax: 0.10.0
libtpu: 0.0.40
codegen_flags: <defaults>
</compile_context>

<pallas_src>
import math

import numpy as np
import jax
import jax.numpy as jnp
from jax.experimental import pallas as pl
from jax.experimental.pallas import tpu as pltpu

# ----------------------------- model configuration -----------------------------
CFG = dict(
    image_size=32,    # small synthetic size (PyTorch default would be 224)
    patch_size=16,
    in_chans=3,
    embed_dim=32,     # ViT hidden dim (768 in vit_b_16)
    num_heads=4,
    num_layers=2,     # 12 in vit_b_16
    mlp_dim=64,
    head_embed_dim=64,   # SimpleMLPHead.embed_dim
    head_out_dim=32,     # SimpleMLPHead.output_embed_dim
    num_classes=8,
)

VW = 128  # lane width of the packed vector slab (one 128-lane tile)


# --------------------------- in-kernel helpers (values) -------------------------
def _erf(x):
    # Abramowitz & Stegun 7.1.26; float32-accurate approximation of erf.
    a1, a2, a3, a4, a5 = 0.254829592, -0.284496736, 1.421413741, -1.453152027, 1.061405429
    p = 0.3275911
    s = jnp.where(x >= 0.0, 1.0, -1.0)
    ax = jnp.abs(x)
    t = 1.0 / (1.0 + p * ax)
    poly = ((((a5 * t + a4) * t + a3) * t + a2) * t + a1) * t
    return s * (1.0 - poly * jnp.exp(-ax * ax))


def _gelu(x):
    # exact GELU (PyTorch nn.GELU default): 0.5*x*(1+erf(x/sqrt(2)))
    return 0.5 * x * (1.0 + _erf(x * 0.7071067811865476))


def _layernorm(x, g, b, eps):
    mu = jnp.mean(x, axis=-1, keepdims=True)
    xc = x - mu
    var = jnp.mean(xc * xc, axis=-1, keepdims=True)
    return xc * jax.lax.rsqrt(var + eps) * g + b


def _mm(a, b):
    return jnp.dot(a, b, preferred_element_type=jnp.float32)


def _mm_nt(a, b):  # a @ b.T (contract last dims) without an explicit transpose op
    return jax.lax.dot_general(a, b, (((1,), (1,)), ((), ())),
                               preferred_element_type=jnp.float32)


def _mm_tn(a, b):  # a.T @ b (contract first dims) without an explicit transpose op
    return jax.lax.dot_general(a, b, (((0,), (0,)), ((), ())),
                               preferred_element_type=jnp.float32)


# --------------------------------- parameters -----------------------------------
def init_params(key):
    D = CFG["embed_dim"]
    P = CFG["patch_size"]
    C = CFG["in_chans"]
    keys = iter(jax.random.split(key, 128))

    def w(shape, scale=0.02):
        return (scale * jax.random.normal(next(keys), shape)).astype(jnp.float32)

    def bias(n, scale=0.01):
        return (scale * jax.random.normal(next(keys), (1, n))).astype(jnp.float32)

    n_patches = (CFG["image_size"] // P) ** 2
    S = n_patches + 1
    params = {
        # conv_proj as flattened matmul weight: (C*P*P, D)
        "conv_w": w((C * P * P, D)),
        "conv_b": bias(D),
        "cls": w((1, D)),
        "pos": w((S, D)),
        "ln_f_g": jnp.ones((1, D), jnp.float32),
        "ln_f_b": jnp.zeros((1, D), jnp.float32),
    }
    blocks = []
    for _ in range(CFG["num_layers"]):
        blocks.append(
            dict(
                ln1_g=jnp.ones((1, D), jnp.float32), ln1_b=jnp.zeros((1, D), jnp.float32),
                wqkv=w((D, 3 * D)), bqkv=bias(3 * D),      # fused QKV projection
                wo=w((D, D)), bo=bias(D),
                ln2_g=jnp.ones((1, D), jnp.float32), ln2_b=jnp.zeros((1, D), jnp.float32),
                w1=w((D, CFG["mlp_dim"])), b1=bias(CFG["mlp_dim"]),
                w2=w((CFG["mlp_dim"], D)), b2=bias(D),
            )
        )
    params["blocks"] = blocks

    E1, E2, NC = CFG["head_embed_dim"], CFG["head_out_dim"], CFG["num_classes"]
    params.update(
        h_w1=w((D, E1)), h_b1=bias(E1),
        h_ln1_g=jnp.ones((1, E1), jnp.float32), h_ln1_b=jnp.zeros((1, E1), jnp.float32),
        h_w2=w((E1, E2)), h_b2=bias(E2),
        h_ln2_g=jnp.ones((1, E2), jnp.float32), h_ln2_b=jnp.zeros((1, E2), jnp.float32),
        h_wf=w((E2, NC)), h_bf=bias(NC),
    )
    return params


def _bilinear_matrix(in_size, out_size):
    # PyTorch F.interpolate(mode='bilinear', align_corners=False) weights, 1-D.
    scale = in_size / out_size
    i = np.arange(out_size, dtype=np.float64)
    src = (i + 0.5) * scale - 0.5
    src = np.maximum(src, 0.0)
    x0 = np.minimum(np.floor(src), in_size - 1).astype(np.int64)
    x1 = np.minimum(x0 + 1, in_size - 1)
    lam = (src - x0).astype(np.float32)
    Wm = np.zeros((out_size, in_size), dtype=np.float32)
    Wm[np.arange(out_size), x0] += 1.0 - lam
    Wm[np.arange(out_size), x1] += lam
    return Wm


def _upsample_matrix(hp, wp, H, W):
    # K[i*wp + j, y*W + x] = Wh[y, i] * Ww[x, j]  so that
    # (logits^T @ K)[c, y*W + x] = bilinear_upsample(logit_grid[c])[y, x]
    Wh = _bilinear_matrix(hp, H)   # (H, hp)
    Ww = _bilinear_matrix(wp, W)   # (W, wp)
    K = np.einsum("yi,xj->ijyx", Wh, Ww).reshape(hp * wp, H * W)
    return jnp.asarray(K, dtype=jnp.float32)


def _pack_params(params, B):
    """Pack all parameters into a few dense slabs (perf-review item #1).

    Returns:
      vec_slab: (n_rows, 128) f32 -- every bias/LN vector, the (B*S, D)
                embedding-bias rows, and the (B*S, B*S) block-diag attn mask.
      mats:     dict of bf16 weight matrices / stacked per-layer weights.
    Row order here MUST match the take() order inside the kernel.
    """
    D = CFG["embed_dim"]
    S = (CFG["image_size"] // CFG["patch_size"]) ** 2 + 1
    BS = B * S

    rows = []

    def add(v):
        v = jnp.asarray(v, jnp.float32)
        rows.append(jnp.pad(v, ((0, 0), (0, VW - v.shape[1]))))

    # embedding bias: per sample [cls + pos[0]; pos[1:] + conv_b]  -> (B*S, D)
    eb = jnp.concatenate([params["cls"] + params["pos"][0:1, :],
                          params["pos"][1:, :] + params["conv_b"]], axis=0)
    add(jnp.tile(eb, (B, 1)))

    # block-diagonal additive attention mask (keeps per-sample attention exact
    # while all samples' tokens are stacked into one (B*S, D) working set)
    sid = np.repeat(np.arange(B), S)
    mask = np.where(sid[:, None] == sid[None, :], 0.0, -1e30).astype(np.float32)
    add(jnp.asarray(mask))                                   # (B*S, B*S)

    for blk in params["blocks"]:
        add(blk["ln1_g"]); add(blk["ln1_b"]); add(blk["bqkv"]); add(blk["bo"])
        add(blk["ln2_g"]); add(blk["ln2_b"]); add(blk["b1"]); add(blk["b2"])

    add(params["ln_f_g"]); add(params["ln_f_b"])
    add(params["h_b1"]); add(params["h_ln1_g"]); add(params["h_ln1_b"])
    add(params["h_b2"]); add(params["h_ln2_g"]); add(params["h_ln2_b"])
    add(params["h_bf"])

    vec_slab = jnp.concatenate(rows, axis=0)

    bf = jnp.bfloat16
    mats = dict(
        conv_w=params["conv_w"].astype(bf),
        wqkv_all=jnp.stack([b["wqkv"] for b in params["blocks"]]).astype(bf),
        wo_all=jnp.stack([b["wo"] for b in params["blocks"]]).astype(bf),
        w1_all=jnp.stack([b["w1"] for b in params["blocks"]]).astype(bf),
        w2_all=jnp.stack([b["w2"] for b in params["blocks"]]).astype(bf),
        h_w1=params["h_w1"].astype(bf),
        h_w2=params["h_w2"].astype(bf),
        h_wf=params["h_wf"].astype(bf),
    )
    return vec_slab, mats


# --------------------------------- forward pass ----------------------------------
def forward(params, x):
    """x: (B, C, H, W) float32 NCHW; returns (B, num_classes, H, W) logits."""
    B, C, H, W = x.shape
    P = CFG["patch_size"]
    D = CFG["embed_dim"]
    Hn = CFG["num_heads"]
    Dh = D // Hn
    NC = CFG["num_classes"]
    MLP = CFG["mlp_dim"]
    E1, E2 = CFG["head_embed_dim"], CFG["head_out_dim"]
    hp, wp = H // P, W // P
    n = hp * wp
    S = n + 1
    BS = B * S
    CPP = C * P * P
    HW = H * W
    scale = 1.0 / math.sqrt(Dh)
    L = len(params["blocks"])

    # One-off XLA-side layout plumbing: conv_proj (kernel=stride=P) == patchify
    # + matmul.  A zero row is inserted at each sample's cls position so the
    # in-kernel patch-embed matmul directly yields the (B*S, D) token matrix and
    # cls/pos/conv-bias fold into one added bias slab (no scratch, no concat).
    patches = (x.reshape(B, C, hp, P, wp, P)
                 .transpose(0, 2, 4, 1, 3, 5)
                 .reshape(B, n, CPP))
    patches = jnp.concatenate([jnp.zeros((B, 1, CPP), x.dtype), patches], axis=1)
    patches = patches.reshape(BS, CPP).astype(jnp.bfloat16)   # bf16 MXU operand

    vec_slab, mats = _pack_params(params, B)
    K_up = _upsample_matrix(hp, wp, H, W)                      # (n, H*W) f32 constant

    def kernel(patches_ref, vec_ref, conv_w_ref, wqkv_ref, wo_ref, w1_ref,
               w2_ref, h_w1_ref, h_w2_ref, h_wf_ref, kup_ref, out_ref):
        bf = jnp.bfloat16
        vecs = vec_ref[...]                                    # (n_rows, 128) f32
        cur = [0]

        def take(width, nrows=1):                              # static-offset slab reads
            r0 = cur[0]
            cur[0] = r0 + nrows
            return vecs[r0:r0 + nrows, :width]

        # ---- patch embedding + cls token + positional embedding (fused) ----
        embed_bias = take(D, BS)                               # (BS, D) f32
        attn_mask = take(BS, BS)                               # (BS, BS) f32 block-diag
        xs = _mm(patches_ref[...], conv_w_ref[...]) + embed_bias   # f32 residual stream
        # dropout = identity (eval mode)

        # ---- transformer encoder blocks (pre-LN, eps=1e-6) ----
        for l in range(L):
            ln1_g = take(D); ln1_b = take(D); bqkv = take(3 * D); bo = take(D)
            ln2_g = take(D); ln2_b = take(D); b1 = take(MLP); b2 = take(D)

            # --- self-attention sublayer (all samples stacked, masked) ---
            y = _layernorm(xs, ln1_g, ln1_b, 1e-6)
            qkv = _mm(y.astype(bf), wqkv_ref[l]) + bqkv        # (BS, 3D) f32, fused QKV
            heads = []
            for h in range(Hn):
                qh = qkv[:, h * Dh:(h + 1) * Dh]
                kh = qkv[:, D + h * Dh:D + (h + 1) * Dh]
                vh = qkv[:, 2 * D + h * Dh:2 * D + (h + 1) * Dh]
                s = _mm_nt(qh.astype(bf), kh.astype(bf)) * scale + attn_mask
                m = jnp.max(s, axis=-1, keepdims=True)
                p = jnp.exp(s - m)
                p = p * pl.reciprocal(jnp.sum(p, axis=-1, keepdims=True), approx=True)
                heads.append(_mm(p.astype(bf), vh.astype(bf)))  # (BS, Dh) f32
            # lane-concat of heads, then ONE K=D matmul against full Wo
            o = jnp.concatenate(heads, axis=-1)                 # (BS, D) f32
            xs = xs + _mm(o.astype(bf), wo_ref[l]) + bo         # residual + out-proj bias

            # --- MLP sublayer ---
            z = _layernorm(xs, ln2_g, ln2_b, 1e-6)
            hmid = _gelu(_mm(z.astype(bf), w1_ref[l]) + b1)
            xs = xs + _mm(hmid.astype(bf), w2_ref[l]) + b2

        # ---- final encoder LayerNorm ----
        ln_f_g = take(D); ln_f_b = take(D)
        feats = _layernorm(xs, ln_f_g, ln_f_b, 1e-6)            # (BS, D)

        # ---- SimpleMLPHead (row-wise; cls rows ride along, dropped below) ----
        h_b1 = take(E1); h_ln1_g = take(E1); h_ln1_b = take(E1)
        h_b2 = take(E2); h_ln2_g = take(E2); h_ln2_b = take(E2)
        h_bf = take(NC)
        h1 = _gelu(_layernorm(_mm(feats.astype(bf), h_w1_ref[...]) + h_b1,
                              h_ln1_g, h_ln1_b, 1e-5))
        h2 = _gelu(_layernorm(_mm(h1.astype(bf), h_w2_ref[...]) + h_b2,
                              h_ln2_g, h_ln2_b, 1e-5))
        logits = _mm(h2.astype(bf), h_wf_ref[...]) + h_bf       # (BS, NC) f32

        # ---- fused permute(0,2,1)+reshape+bilinear upsample (align_corners=False)
        # out[b*NC + c, y*W + x] = sum_p logits[b*S+1+p, c] * K[p, y*W + x]
        # (kept f32: tiny lhs-transposed contraction; stores are sublane-aligned
        #  NC=8-row blocks over a lane-dense 1024-wide output.)
        K = kup_ref[...]                                        # (n, HW) f32
        for b in range(B):
            lg = logits[b * S + 1:b * S + S, :]                 # (n, NC), drops cls row
            out_ref[b * NC:(b + 1) * NC, :] = _mm_tn(lg, K)     # (NC, HW)

    inputs = [patches, vec_slab, mats["conv_w"], mats["wqkv_all"], mats["wo_all"],
              mats["w1_all"], mats["w2_all"], mats["h_w1"], mats["h_w2"],
              mats["h_wf"], K_up]
    in_specs = [pl.BlockSpec(a.shape, lambda i, nd=a.ndim: (0,) * nd) for a in inputs]

    out_flat = pl.pallas_call(
        kernel,
        out_shape=jax.ShapeDtypeStruct((B * NC, HW), jnp.float32),
        # grid=(1,): all samples token-stacked into one step => weights fetched
        # exactly once, no duplicated per-core weight DMA, M=B*S for every matmul.
        grid=(1,),
        in_specs=in_specs,
        out_specs=pl.BlockSpec((B * NC, HW), lambda i: (0, 0)),
        compiler_params=pltpu.CompilerParams(
            dimension_semantics=("arbitrary",)),
    )(*inputs)

    # (B*NC, H*W) -> (B, NC, H, W): pure reshape, no transpose / extra HBM traffic.
    return out_flat.reshape(B, NC, H, W)


# ------------------------------------ main ----------------------------------------
if __name__ == "__main__":
    key = jax.random.PRNGKey(0)
    pkey, xkey = jax.random.split(key)
    params = init_params(pkey)
    x = jax.random.normal(
        xkey, (2, CFG["in_chans"], CFG["image_size"], CFG["image_size"]), dtype=jnp.float32
    )
    out = jax.jit(forward)(params, x)
    out = jax.block_until_ready(out)
    assert out.shape == (2, CFG["num_classes"], CFG["image_size"], CFG["image_size"]), out.shape
    assert bool(jnp.all(jnp.isfinite(out)))
    print("KERNEL_OK")
</pallas_src>

<mosaic_0001>
module attributes {stable_mosaic.version = 11 : i64} {
  func.func @kernel(%arg0: i32, %arg1: memref<10x768xbf16, #tpu.memory_space<vmem>>, %arg2: memref<45x128xf32, #tpu.memory_space<vmem>>, %arg3: memref<768x32xbf16, #tpu.memory_space<vmem>>, %arg4: memref<2x32x96xbf16, #tpu.memory_space<vmem>>, %arg5: memref<2x32x32xbf16, #tpu.memory_space<vmem>>, %arg6: memref<2x32x64xbf16, #tpu.memory_space<vmem>>, %arg7: memref<2x64x32xbf16, #tpu.memory_space<vmem>>, %arg8: memref<32x64xbf16, #tpu.memory_space<vmem>>, %arg9: memref<64x32xbf16, #tpu.memory_space<vmem>>, %arg10: memref<32x8xbf16, #tpu.memory_space<vmem>>, %arg11: memref<4x1024xf32, #tpu.memory_space<vmem>>, %arg12: memref<16x1024xf32, #tpu.memory_space<vmem>>) attributes {dimension_semantics = [#tpu.dimension_semantics<arbitrary>], iteration_bounds = array<i64: 1>, scalar_prefetch = 0 : i64, scratch_operands = 0 : i64, tpu.core_type = #tpu.core_type<tc>, window_params = [{pipeline_mode = #tpu.pipeline_mode<synchronous>, transform_indices = @transform_0, window_bounds = array<i64: 10, 768>}, {pipeline_mode = #tpu.pipeline_mode<synchronous>, transform_indices = @transform_1, window_bounds = array<i64: 45, 128>}, {pipeline_mode = #tpu.pipeline_mode<synchronous>, transform_indices = @transform_2, window_bounds = array<i64: 768, 32>}, {pipeline_mode = #tpu.pipeline_mode<synchronous>, transform_indices = @transform_3, window_bounds = array<i64: 2, 32, 96>}, {pipeline_mode = #tpu.pipeline_mode<synchronous>, transform_indices = @transform_4, window_bounds = array<i64: 2, 32, 32>}, {pipeline_mode = #tpu.pipeline_mode<synchronous>, transform_indices = @transform_5, window_bounds = array<i64: 2, 32, 64>}, {pipeline_mode = #tpu.pipeline_mode<synchronous>, transform_indices = @transform_6, window_bounds = array<i64: 2, 64, 32>}, {pipeline_mode = #tpu.pipeline_mode<synchronous>, transform_indices = @transform_7, window_bounds = array<i64: 32, 64>}, {pipeline_mode = #tpu.pipeline_mode<synchronous>, transform_indices = @transform_8, window_bounds = array<i64: 64, 32>}, {pipeline_mode = #tpu.pipeline_mode<synchronous>, transform_indices = @transform_9, window_bounds = array<i64: 32, 8>}, {pipeline_mode = #tpu.pipeline_mode<synchronous>, transform_indices = @transform_10, window_bounds = array<i64: 4, 1024>}, {pipeline_mode = #tpu.pipeline_mode<synchronous>, transform_indices = @transform_11, window_bounds = array<i64: 16, 1024>}]} {
    %c0 = arith.constant 0 : index
    %c0_0 = arith.constant 0 : index
    %0 = vector.load %arg2[%c0, %c0_0] : memref<45x128xf32, #tpu.memory_space<vmem>>, vector<45x128xf32>
    %1 = vector.extract_strided_slice %0 {offsets = [0, 0], sizes = [10, 32], strides = [1, 1]} : vector<45x128xf32> to vector<10x32xf32>
    %2 = vector.extract_strided_slice %0 {offsets = [10, 0], sizes = [10, 10], strides = [1, 1]} : vector<45x128xf32> to vector<10x10xf32>
    %c0_1 = arith.constant 0 : index
    %c0_2 = arith.constant 0 : index
    %3 = vector.load %arg1[%c0_1, %c0_2] : memref<10x768xbf16, #tpu.memory_space<vmem>>, vector<10x768xbf16>
    %c0_3 = arith.constant 0 : index
    %c0_4 = arith.constant 0 : index
    %4 = vector.load %arg3[%c0_3, %c0_4] : memref<768x32xbf16, #tpu.memory_space<vmem>>, vector<768x32xbf16>
    %cst = arith.constant dense<0.000000e+00> : vector<10x32xf32>
    %5 = tpu.matmul %3, %4, %cst {dimension_numbers = #tpu.dot_dimension_numbers<[1], [0], [0], [1], [0, 0, 1, 1], [], []>} : vector<10x768xbf16>, vector<768x32xbf16>, vector<10x32xf32> -> vector<10x32xf32>
    %6 = arith.addf %5, %1 : vector<10x32xf32>
    %7 = vector.extract_strided_slice %0 {offsets = [20, 0], sizes = [1, 32], strides = [1, 1]} : vector<45x128xf32> to vector<1x32xf32>
    %8 = vector.extract_strided_slice %0 {offsets = [21, 0], sizes = [1, 32], strides = [1, 1]} : vector<45x128xf32> to vector<1x32xf32>
    %9 = vector.extract_strided_slice %0 {offsets = [22, 0], sizes = [1, 96], strides = [1, 1]} : vector<45x128xf32> to vector<1x96xf32>
    %10 = vector.extract_strided_slice %0 {offsets = [23, 0], sizes = [1, 32], strides = [1, 1]} : vector<45x128xf32> to vector<1x32xf32>
    %11 = vector.extract_strided_slice %0 {offsets = [24, 0], sizes = [1, 32], strides = [1, 1]} : vector<45x128xf32> to vector<1x32xf32>
    %12 = vector.extract_strided_slice %0 {offsets = [25, 0], sizes = [1, 32], strides = [1, 1]} : vector<45x128xf32> to vector<1x32xf32>
    %13 = vector.extract_strided_slice %0 {offsets = [26, 0], sizes = [1, 64], strides = [1, 1]} : vector<45x128xf32> to vector<1x64xf32>
    %14 = vector.extract_strided_slice %0 {offsets = [27, 0], sizes = [1, 32], strides = [1, 1]} : vector<45x128xf32> to vector<1x32xf32>
    %cst_5 = arith.constant dense<0.000000e+00> : vector<10xf32>
    %15 = vector.multi_reduction <add>, %6, %cst_5 [1] : vector<10x32xf32> to vector<10xf32>
    %16 = vector.shape_cast %15 : vector<10xf32> to vector<10x1xf32>
    %cst_6 = arith.constant 3.200000e+01 : f32
    %17 = vector.broadcast %cst_6 : f32 to vector<10x1xf32>
    %18 = arith.divf %16, %17 : vector<10x1xf32>
    %19 = vector.broadcast %18 : vector<10x1xf32> to vector<10x32xf32>
    %20 = arith.subf %6, %19 : vector<10x32xf32>
    %21 = arith.mulf %20, %20 : vector<10x32xf32>
    %cst_7 = arith.constant dense<0.000000e+00> : vector<10xf32>
    %22 = vector.multi_reduction <add>, %21, %cst_7 [1] : vector<10x32xf32> to vector<10xf32>
    %23 = vector.shape_cast %22 : vector<10xf32> to vector<10x1xf32>
    %cst_8 = arith.constant 3.200000e+01 : f32
    %24 = vector.broadcast %cst_8 : f32 to vector<10x1xf32>
    %25 = arith.divf %23, %24 : vector<10x1xf32>
    %cst_9 = arith.constant 9.99999997E-7 : f32
    %26 = vector.broadcast %cst_9 : f32 to vector<10x1xf32>
    %27 = arith.addf %25, %26 : vector<10x1xf32>
    %28 = math.rsqrt %27 : vector<10x1xf32>
    %29 = vector.broadcast %28 : vector<10x1xf32> to vector<10x32xf32>
    %30 = arith.mulf %20, %29 : vector<10x32xf32>
    %31 = vector.broadcast %7 : vector<1x32xf32> to vector<10x32xf32>
    %32 = arith.mulf %30, %31 : vector<10x32xf32>
    %33 = vector.broadcast %8 : vector<1x32xf32> to vector<10x32xf32>
    %34 = arith.addf %32, %33 : vector<10x32xf32>
    %35 = arith.truncf %34 : vector<10x32xf32> to vector<10x32xbf16>
    %c0_10 = arith.constant 0 : index
    %c0_11 = arith.constant 0 : index
    %c0_12 = arith.constant 0 : index
    %36 = vector.load %arg4[%c0_10, %c0_11, %c0_12] : memref<2x32x96xbf16, #tpu.memory_space<vmem>>, vector<1x32x96xbf16>
    %37 = vector.shape_cast %36 : vector<1x32x96xbf16> to vector<32x96xbf16>
    %cst_13 = arith.constant dense<0.000000e+00> : vector<10x96xf32>
    %38 = tpu.matmul %35, %37, %cst_13 {dimension_numbers = #tpu.dot_dimension_numbers<[1], [0], [0], [1], [0, 0, 1, 1], [], []>} : vector<10x32xbf16>, vector<32x96xbf16>, vector<10x96xf32> -> vector<10x96xf32>
    %39 = vector.broadcast %9 : vector<1x96xf32> to vector<10x96xf32>
    %40 = arith.addf %38, %39 : vector<10x96xf32>
    %41 = vector.extract_strided_slice %40 {offsets = [0, 0], sizes = [10, 8], strides = [1, 1]} : vector<10x96xf32> to vector<10x8xf32>
    %42 = vector.extract_strided_slice %40 {offsets = [0, 32], sizes = [10, 8], strides = [1, 1]} : vector<10x96xf32> to vector<10x8xf32>
    %43 = vector.extract_strided_slice %40 {offsets = [0, 64], sizes = [10, 8], strides = [1, 1]} : vector<10x96xf32> to vector<10x8xf32>
    %44 = arith.truncf %41 : vector<10x8xf32> to vector<10x8xbf16>
    %45 = arith.truncf %42 : vector<10x8xf32> to vector<10x8xbf16>
    %cst_14 = arith.constant dense<0.000000e+00> : vector<10x10xf32>
    %46 = tpu.matmul %44, %45, %cst_14 {dimension_numbers = #tpu.dot_dimension_numbers<[1], [1], [0], [0], [0, 0, 1, 0], [], []>} : vector<10x8xbf16>, vector<10x8xbf16>, vector<10x10xf32> -> vector<10x10xf32>
    %cst_15 = arith.constant 0.353553385 : f32
    %47 = vector.broadcast %cst_15 : f32 to vector<10x10xf32>
    %48 = arith.mulf %46, %47 : vector<10x10xf32>
    %49 = arith.addf %48, %2 : vector<10x10xf32>
    %cst_16 = arith.constant dense<0xFF800000> : vector<10xf32>
    %50 = vector.multi_reduction <maximumf>, %49, %cst_16 [1] : vector<10x10xf32> to vector<10xf32>
    %51 = vector.shape_cast %50 : vector<10xf32> to vector<10x1xf32>
    %52 = vector.broadcast %51 : vector<10x1xf32> to vector<10x10xf32>
    %53 = arith.subf %49, %52 : vector<10x10xf32>
    %54 = math.exp %53 : vector<10x10xf32>
    %cst_17 = arith.constant dense<0.000000e+00> : vector<10xf32>
    %55 = vector.multi_reduction <add>, %54, %cst_17 [1] : vector<10x10xf32> to vector<10xf32>
    %56 = vector.shape_cast %55 : vector<10xf32> to vector<10x1xf32>
    %57 = tpu.reciprocal %56 {approx = true} : vector<10x1xf32> -> vector<10x1xf32>
    %58 = vector.broadcast %57 : vector<10x1xf32> to vector<10x10xf32>
    %59 = arith.mulf %54, %58 : vector<10x10xf32>
    %60 = arith.truncf %59 : vector<10x10xf32> to vector<10x10xbf16>
    %61 = arith.truncf %43 : vector<10x8xf32> to vector<10x8xbf16>
    %cst_18 = arith.constant dense<0.000000e+00> : vector<10x8xf32>
    %62 = tpu.matmul %60, %61, %cst_18 {dimension_numbers = #tpu.dot_dimension_numbers<[1], [0], [0], [1], [0, 0, 1, 1], [], []>} : vector<10x10xbf16>, vector<10x8xbf16>, vector<10x8xf32> -> vector<10x8xf32>
    %63 = vector.extract_strided_slice %40 {offsets = [0, 8], sizes = [10, 8], strides = [1, 1]} : vector<10x96xf32> to vector<10x8xf32>
    %64 = vector.extract_strided_slice %40 {offsets = [0, 40], sizes = [10, 8], strides = [1, 1]} : vector<10x96xf32> to vector<10x8xf32>
    %65 = vector.extract_strided_slice %40 {offsets = [0, 72], sizes = [10, 8], strides = [1, 1]} : vector<10x96xf32> to vector<10x8xf32>
    %66 = arith.truncf %63 : vector<10x8xf32> to vector<10x8xbf16>
    %67 = arith.truncf %64 : vector<10x8xf32> to vector<10x8xbf16>
    %cst_19 = arith.constant dense<0.000000e+00> : vector<10x10xf32>
    %68 = tpu.matmul %66, %67, %cst_19 {dimension_numbers = #tpu.dot_dimension_numbers<[1], [1], [0], [0], [0, 0, 1, 0], [], []>} : vector<10x8xbf16>, vector<10x8xbf16>, vector<10x10xf32> -> vector<10x10xf32>
    %cst_20 = arith.constant 0.353553385 : f32
    %69 = vector.broadcast %cst_20 : f32 to vector<10x10xf32>
    %70 = arith.mulf %68, %69 : vector<10x10xf32>
    %71 = arith.addf %70, %2 : vector<10x10xf32>
    %cst_21 = arith.constant dense<0xFF800000> : vector<10xf32>
    %72 = vector.multi_reduction <maximumf>, %71, %cst_21 [1] : vector<10x10xf32> to vector<10xf32>
    %73 = vector.shape_cast %72 : vector<10xf32> to vector<10x1xf32>
    %74 = vector.broadcast %73 : vector<10x1xf32> to vector<10x10xf32>
    %75 = arith.subf %71, %74 : vector<10x10xf32>
    %76 = math.exp %75 : vector<10x10xf32>
    %cst_22 = arith.constant dense<0.000000e+00> : vector<10xf32>
    %77 = vector.multi_reduction <add>, %76, %cst_22 [1] : vector<10x10xf32> to vector<10xf32>
    %78 = vector.shape_cast %77 : vector<10xf32> to vector<10x1xf32>
    %79 = tpu.reciprocal %78 {approx = true} : vector<10x1xf32> -> vector<10x1xf32>
    %80 = vector.broadcast %79 : vector<10x1xf32> to vector<10x10xf32>
    %81 = arith.mulf %76, %80 : vector<10x10xf32>
    %82 = arith.truncf %81 : vector<10x10xf32> to vector<10x10xbf16>
    %83 = arith.truncf %65 : vector<10x8xf32> to vector<10x8xbf16>
    %cst_23 = arith.constant dense<0.000000e+00> : vector<10x8xf32>
    %84 = tpu.matmul %82, %83, %cst_23 {dimension_numbers = #tpu.dot_dimension_numbers<[1], [0], [0], [1], [0, 0, 1, 1], [], []>} : vector<10x10xbf16>, vector<10x8xbf16>, vector<10x8xf32> -> vector<10x8xf32>
    %85 = vector.extract_strided_slice %40 {offsets = [0, 16], sizes = [10, 8], strides = [1, 1]} : vector<10x96xf32> to vector<10x8xf32>
    %86 = vector.extract_strided_slice %40 {offsets = [0, 48], sizes = [10, 8], strides = [1, 1]} : vector<10x96xf32> to vector<10x8xf32>
    %87 = vector.extract_strided_slice %40 {offsets = [0, 80], sizes = [10, 8], strides = [1, 1]} : vector<10x96xf32> to vector<10x8xf32>
    %88 = arith.truncf %85 : vector<10x8xf32> to vector<10x8xbf16>
    %89 = arith.truncf %86 : vector<10x8xf32> to vector<10x8xbf16>
    %cst_24 = arith.constant dense<0.000000e+00> : vector<10x10xf32>
    %90 = tpu.matmul %88, %89, %cst_24 {dimension_numbers = #tpu.dot_dimension_numbers<[1], [1], [0], [0], [0, 0, 1, 0], [], []>} : vector<10x8xbf16>, vector<10x8xbf16>, vector<10x10xf32> -> vector<10x10xf32>
    %cst_25 = arith.constant 0.353553385 : f32
    %91 = vector.broadcast %cst_25 : f32 to vector<10x10xf32>
    %92 = arith.mulf %90, %91 : vector<10x10xf32>
    %93 = arith.addf %92, %2 : vector<10x10xf32>
    %cst_26 = arith.constant dense<0xFF800000> : vector<10xf32>
    %94 = vector.multi_reduction <maximumf>, %93, %cst_26 [1] : vector<10x10xf32> to vector<10xf32>
    %95 = vector.shape_cast %94 : vector<10xf32> to vector<10x1xf32>
    %96 = vector.broadcast %95 : vector<10x1xf32> to vector<10x10xf32>
    %97 = arith.subf %93, %96 : vector<10x10xf32>
    %98 = math.exp %97 : vector<10x10xf32>
    %cst_27 = arith.constant dense<0.000000e+00> : vector<10xf32>
    %99 = vector.multi_reduction <add>, %98, %cst_27 [1] : vector<10x10xf32> to vector<10xf32>
    %100 = vector.shape_cast %99 : vector<10xf32> to vector<10x1xf32>
    %101 = tpu.reciprocal %100 {approx = true} : vector<10x1xf32> -> vector<10x1xf32>
    %102 = vector.broadcast %101 : vector<10x1xf32> to vector<10x10xf32>
    %103 = arith.mulf %98, %102 : vector<10x10xf32>
    %104 = arith.truncf %103 : vector<10x10xf32> to vector<10x10xbf16>
    %105 = arith.truncf %87 : vector<10x8xf32> to vector<10x8xbf16>
    %cst_28 = arith.constant dense<0.000000e+00> : vector<10x8xf32>
    %106 = tpu.matmul %104, %105, %cst_28 {dimension_numbers = #tpu.dot_dimension_numbers<[1], [0], [0], [1], [0, 0, 1, 1], [], []>} : vector<10x10xbf16>, vector<10x8xbf16>, vector<10x8xf32> -> vector<10x8xf32>
    %107 = vector.extract_strided_slice %40 {offsets = [0, 24], sizes = [10, 8], strides = [1, 1]} : vector<10x96xf32> to vector<10x8xf32>
    %108 = vector.extract_strided_slice %40 {offsets = [0, 56], sizes = [10, 8], strides = [1, 1]} : vector<10x96xf32> to vector<10x8xf32>
    %109 = vector.extract_strided_slice %40 {offsets = [0, 88], sizes = [10, 8], strides = [1, 1]} : vector<10x96xf32> to vector<10x8xf32>
    %110 = arith.truncf %107 : vector<10x8xf32> to vector<10x8xbf16>
    %111 = arith.truncf %108 : vector<10x8xf32> to vector<10x8xbf16>
    %cst_29 = arith.constant dense<0.000000e+00> : vector<10x10xf32>
    %112 = tpu.matmul %110, %111, %cst_29 {dimension_numbers = #tpu.dot_dimension_numbers<[1], [1], [0], [0], [0, 0, 1, 0], [], []>} : vector<10x8xbf16>, vector<10x8xbf16>, vector<10x10xf32> -> vector<10x10xf32>
    %cst_30 = arith.constant 0.353553385 : f32
    %113 = vector.broadcast %cst_30 : f32 to vector<10x10xf32>
    %114 = arith.mulf %112, %113 : vector<10x10xf32>
    %115 = arith.addf %114, %2 : vector<10x10xf32>
    %cst_31 = arith.constant dense<0xFF800000> : vector<10xf32>
    %116 = vector.multi_reduction <maximumf>, %115, %cst_31 [1] : vector<10x10xf32> to vector<10xf32>
    %117 = vector.shape_cast %116 : vector<10xf32> to vector<10x1xf32>
    %118 = vector.broadcast %117 : vector<10x1xf32> to vector<10x10xf32>
    %119 = arith.subf %115, %118 : vector<10x10xf32>
    %120 = math.exp %119 : vector<10x10xf32>
    %cst_32 = arith.constant dense<0.000000e+00> : vector<10xf32>
    %121 = vector.multi_reduction <add>, %120, %cst_32 [1] : vector<10x10xf32> to vector<10xf32>
    %122 = vector.shape_cast %121 : vector<10xf32> to vector<10x1xf32>
    %123 = tpu.reciprocal %122 {approx = true} : vector<10x1xf32> -> vector<10x1xf32>
    %124 = vector.broadcast %123 : vector<10x1xf32> to vector<10x10xf32>
    %125 = arith.mulf %120, %124 : vector<10x10xf32>
    %126 = arith.truncf %125 : vector<10x10xf32> to vector<10x10xbf16>
    %127 = arith.truncf %109 : vector<10x8xf32> to vector<10x8xbf16>
    %cst_33 = arith.constant dense<0.000000e+00> : vector<10x8xf32>
    %128 = tpu.matmul %126, %127, %cst_33 {dimension_numbers = #tpu.dot_dimension_numbers<[1], [0], [0], [1], [0, 0, 1, 1], [], []>} : vector<10x10xbf16>, vector<10x8xbf16>, vector<10x8xf32> -> vector<10x8xf32>
    %129 = tpu.concatenate %62, %84, %106, %128 in 1 : vector<10x8xf32>, vector<10x8xf32>, vector<10x8xf32>, vector<10x8xf32> -> vector<10x32xf32>
    %130 = arith.truncf %129 : vector<10x32xf32> to vector<10x32xbf16>
    %c0_34 = arith.constant 0 : index
    %c0_35 = arith.constant 0 : index
    %c0_36 = arith.constant 0 : index
    %131 = vector.load %arg5[%c0_34, %c0_35, %c0_36] : memref<2x32x32xbf16, #tpu.memory_space<vmem>>, vector<1x32x32xbf16>
    %132 = vector.shape_cast %131 : vector<1x32x32xbf16> to vector<32x32xbf16>
    %cst_37 = arith.constant dense<0.000000e+00> : vector<10x32xf32>
    %133 = tpu.matmul %130, %132, %cst_37 {dimension_numbers = #tpu.dot_dimension_numbers<[1], [0], [0], [1], [0, 0, 1, 1], [], []>} : vector<10x32xbf16>, vector<32x32xbf16>, vector<10x32xf32> -> vector<10x32xf32>
    %134 = arith.addf %6, %133 : vector<10x32xf32>
    %135 = vector.broadcast %10 : vector<1x32xf32> to vector<10x32xf32>
    %136 = arith.addf %134, %135 : vector<10x32xf32>
    %cst_38 = arith.constant dense<0.000000e+00> : vector<10xf32>
    %137 = vector.multi_reduction <add>, %136, %cst_38 [1] : vector<10x32xf32> to vector<10xf32>
    %138 = vector.shape_cast %137 : vector<10xf32> to vector<10x1xf32>
    %cst_39 = arith.constant 3.200000e+01 : f32
    %139 = vector.broadcast %cst_39 : f32 to vector<10x1xf32>
    %140 = arith.divf %138, %139 : vector<10x1xf32>
    %141 = vector.broadcast %140 : vector<10x1xf32> to vector<10x32xf32>
    %142 = arith.subf %136, %141 : vector<10x32xf32>
    %143 = arith.mulf %142, %142 : vector<10x32xf32>
    %cst_40 = arith.constant dense<0.000000e+00> : vector<10xf32>
    %144 = vector.multi_reduction <add>, %143, %cst_40 [1] : vector<10x32xf32> to vector<10xf32>
    %145 = vector.shape_cast %144 : vector<10xf32> to vector<10x1xf32>
    %cst_41 = arith.constant 3.200000e+01 : f32
    %146 = vector.broadcast %cst_41 : f32 to vector<10x1xf32>
    %147 = arith.divf %145, %146 : vector<10x1xf32>
    %cst_42 = arith.constant 9.99999997E-7 : f32
    %148 = vector.broadcast %cst_42 : f32 to vector<10x1xf32>
    %149 = arith.addf %147, %148 : vector<10x1xf32>
    %150 = math.rsqrt %149 : vector<10x1xf32>
    %151 = vector.broadcast %150 : vector<10x1xf32> to vector<10x32xf32>
    %152 = arith.mulf %142, %151 : vector<10x32xf32>
    %153 = vector.broadcast %11 : vector<1x32xf32> to vector<10x32xf32>
    %154 = arith.mulf %152, %153 : vector<10x32xf32>
    %155 = vector.broadcast %12 : vector<1x32xf32> to vector<10x32xf32>
    %156 = arith.addf %154, %155 : vector<10x32xf32>
    %157 = arith.truncf %156 : vector<10x32xf32> to vector<10x32xbf16>
    %c0_43 = arith.constant 0 : index
    %c0_44 = arith.constant 0 : index
    %c0_45 = arith.constant 0 : index
    %158 = vector.load %arg6[%c0_43, %c0_44, %c0_45] : memref<2x32x64xbf16, #tpu.memory_space<vmem>>, vector<1x32x64xbf16>
    %159 = vector.shape_cast %158 : vector<1x32x64xbf16> to vector<32x64xbf16>
    %cst_46 = arith.constant dense<0.000000e+00> : vector<10x64xf32>
    %160 = tpu.matmul %157, %159, %cst_46 {dimension_numbers = #tpu.dot_dimension_numbers<[1], [0], [0], [1], [0, 0, 1, 1], [], []>} : vector<10x32xbf16>, vector<32x64xbf16>, vector<10x64xf32> -> vector<10x64xf32>
    %161 = vector.broadcast %13 : vector<1x64xf32> to vector<10x64xf32>
    %162 = arith.addf %160, %161 : vector<10x64xf32>
    %cst_47 = arith.constant 5.000000e-01 : f32
    %163 = vector.broadcast %cst_47 : f32 to vector<10x64xf32>
    %164 = arith.mulf %163, %162 : vector<10x64xf32>
    %cst_48 = arith.constant 0.707106769 : f32
    %165 = vector.broadcast %cst_48 : f32 to vector<10x64xf32>
    %166 = arith.mulf %162, %165 : vector<10x64xf32>
    %cst_49 = arith.constant 0.000000e+00 : f32
    %167 = vector.broadcast %cst_49 : f32 to vector<10x64xf32>
    %168 = arith.cmpf oge, %166, %167 : vector<10x64xf32>
    %cst_50 = arith.constant 1.000000e+00 : f32
    %cst_51 = arith.constant -1.000000e+00 : f32
    %169 = vector.broadcast %cst_50 : f32 to vector<10x64xf32>
    %170 = vector.broadcast %cst_51 : f32 to vector<10x64xf32>
    %171 = arith.select %168, %169, %170 : vector<10x64xi1>, vector<10x64xf32>
    %172 = math.absf %166 : vector<10x64xf32>
    %cst_52 = arith.constant 0.327591091 : f32
    %173 = vector.broadcast %cst_52 : f32 to vector<10x64xf32>
    %174 = arith.mulf %173, %172 : vector<10x64xf32>
    %cst_53 = arith.constant 1.000000e+00 : f32
    %175 = vector.broadcast %cst_53 : f32 to vector<10x64xf32>
    %176 = arith.addf %175, %174 : vector<10x64xf32>
    %cst_54 = arith.constant 1.000000e+00 : f32
    %177 = vector.broadcast %cst_54 : f32 to vector<10x64xf32>
    %178 = arith.divf %177, %176 : vector<10x64xf32>
    %cst_55 = arith.constant 1.06140542 : f32
    %179 = vector.broadcast %cst_55 : f32 to vector<10x64xf32>
    %180 = arith.mulf %179, %178 : vector<10x64xf32>
    %cst_56 = arith.constant -1.45315206 : f32
    %181 = vector.broadcast %cst_56 : f32 to vector<10x64xf32>
    %182 = arith.addf %180, %181 : vector<10x64xf32>
    %183 = arith.mulf %182, %178 : vector<10x64xf32>
    %cst_57 = arith.constant 1.42141378 : f32
    %184 = vector.broadcast %cst_57 : f32 to vector<10x64xf32>
    %185 = arith.addf %183, %184 : vector<10x64xf32>
    %186 = arith.mulf %185, %178 : vector<10x64xf32>
    %cst_58 = arith.constant -0.284496725 : f32
    %187 = vector.broadcast %cst_58 : f32 to vector<10x64xf32>
    %188 = arith.addf %186, %187 : vector<10x64xf32>
    %189 = arith.mulf %188, %178 : vector<10x64xf32>
    %cst_59 = arith.constant 0.254829586 : f32
    %190 = vector.broadcast %cst_59 : f32 to vector<10x64xf32>
    %191 = arith.addf %189, %190 : vector<10x64xf32>
    %192 = arith.mulf %191, %178 : vector<10x64xf32>
    %cst_60 = arith.constant 0.000000e+00 : f32
    %193 = vector.broadcast %cst_60 : f32 to vector<10x64xf32>
    %194 = arith.subf %193, %172 : vector<10x64xf32>
    %195 = arith.mulf %194, %172 : vector<10x64xf32>
    %196 = math.exp %195 : vector<10x64xf32>
    %197 = arith.mulf %192, %196 : vector<10x64xf32>
    %cst_61 = arith.constant 1.000000e+00 : f32
    %198 = vector.broadcast %cst_61 : f32 to vector<10x64xf32>
    %199 = arith.subf %198, %197 : vector<10x64xf32>
    %200 = arith.mulf %171, %199 : vector<10x64xf32>
    %cst_62 = arith.constant 1.000000e+00 : f32
    %201 = vector.broadcast %cst_62 : f32 to vector<10x64xf32>
    %202 = arith.addf %201, %200 : vector<10x64xf32>
    %203 = arith.mulf %164, %202 : vector<10x64xf32>
    %204 = arith.truncf %203 : vector<10x64xf32> to vector<10x64xbf16>
    %c0_63 = arith.constant 0 : index
    %c0_64 = arith.constant 0 : index
    %c0_65 = arith.constant 0 : index
    %205 = vector.load %arg7[%c0_63, %c0_64, %c0_65] : memref<2x64x32xbf16, #tpu.memory_space<vmem>>, vector<1x64x32xbf16>
    %206 = vector.shape_cast %205 : vector<1x64x32xbf16> to vector<64x32xbf16>
    %cst_66 = arith.constant dense<0.000000e+00> : vector<10x32xf32>
    %207 = tpu.matmul %204, %206, %cst_66 {dimension_numbers = #tpu.dot_dimension_numbers<[1], [0], [0], [1], [0, 0, 1, 1], [], []>} : vector<10x64xbf16>, vector<64x32xbf16>, vector<10x32xf32> -> vector<10x32xf32>
    %208 = arith.addf %136, %207 : vector<10x32xf32>
    %209 = vector.broadcast %14 : vector<1x32xf32> to vector<10x32xf32>
    %210 = arith.addf %208, %209 : vector<10x32xf32>
    %211 = vector.extract_strided_slice %0 {offsets = [28, 0], sizes = [1, 32], strides = [1, 1]} : vector<45x128xf32> to vector<1x32xf32>
    %212 = vector.extract_strided_slice %0 {offsets = [29, 0], sizes = [1, 32], strides = [1, 1]} : vector<45x128xf32> to vector<1x32xf32>
    %213 = vector.extract_strided_slice %0 {offsets = [30, 0], sizes = [1, 96], strides = [1, 1]} : vector<45x128xf32> to vector<1x96xf32>
    %214 = vector.extract_strided_slice %0 {offsets = [31, 0], sizes = [1, 32], strides = [1, 1]} : vector<45x128xf32> to vector<1x32xf32>
    %215 = vector.extract_strided_slice %0 {offsets = [32, 0], sizes = [1, 32], strides = [1, 1]} : vector<45x128xf32> to vector<1x32xf32>
    %216 = vector.extract_strided_slice %0 {offsets = [33, 0], sizes = [1, 32], strides = [1, 1]} : vector<45x128xf32> to vector<1x32xf32>
    %217 = vector.extract_strided_slice %0 {offsets = [34, 0], sizes = [1, 64], strides = [1, 1]} : vector<45x128xf32> to vector<1x64xf32>
    %218 = vector.extract_strided_slice %0 {offsets = [35, 0], sizes = [1, 32], strides = [1, 1]} : vector<45x128xf32> to vector<1x32xf32>
    %cst_67 = arith.constant dense<0.000000e+00> : vector<10xf32>
    %219 = vector.multi_reduction <add>, %210, %cst_67 [1] : vector<10x32xf32> to vector<10xf32>
    %220 = vector.shape_cast %219 : vector<10xf32> to vector<10x1xf32>
    %cst_68 = arith.constant 3.200000e+01 : f32
    %221 = vector.broadcast %cst_68 : f32 to vector<10x1xf32>
    %222 = arith.divf %220, %221 : vector<10x1xf32>
    %223 = vector.broadcast %222 : vector<10x1xf32> to vector<10x32xf32>
    %224 = arith.subf %210, %223 : vector<10x32xf32>
    %225 = arith.mulf %224, %224 : vector<10x32xf32>
    %cst_69 = arith.constant dense<0.000000e+00> : vector<10xf32>
    %226 = vector.multi_reduction <add>, %225, %cst_69 [1] : vector<10x32xf32> to vector<10xf32>
    %227 = vector.shape_cast %226 : vector<10xf32> to vector<10x1xf32>
    %cst_70 = arith.constant 3.200000e+01 : f32
    %228 = vector.broadcast %cst_70 : f32 to vector<10x1xf32>
    %229 = arith.divf %227, %228 : vector<10x1xf32>
    %cst_71 = arith.constant 9.99999997E-7 : f32
    %230 = vector.broadcast %cst_71 : f32 to vector<10x1xf32>
    %231 = arith.addf %229, %230 : vector<10x1xf32>
    %232 = math.rsqrt %231 : vector<10x1xf32>
    %233 = vector.broadcast %232 : vector<10x1xf32> to vector<10x32xf32>
    %234 = arith.mulf %224, %233 : vector<10x32xf32>
    %235 = vector.broadcast %211 : vector<1x32xf32> to vector<10x32xf32>
    %236 = arith.mulf %234, %235 : vector<10x32xf32>
    %237 = vector.broadcast %212 : vector<1x32xf32> to vector<10x32xf32>
    %238 = arith.addf %236, %237 : vector<10x32xf32>
    %239 = arith.truncf %238 : vector<10x32xf32> to vector<10x32xbf16>
    %c1 = arith.constant 1 : index
    %c0_72 = arith.constant 0 : index
    %c0_73 = arith.constant 0 : index
    %240 = vector.load %arg4[%c1, %c0_72, %c0_73] : memref<2x32x96xbf16, #tpu.memory_space<vmem>>, vector<1x32x96xbf16>
    %241 = vector.shape_cast %240 : vector<1x32x96xbf16> to vector<32x96xbf16>
    %cst_74 = arith.constant dense<0.000000e+00> : vector<10x96xf32>
    %242 = tpu.matmul %239, %241, %cst_74 {dimension_numbers = #tpu.dot_dimension_numbers<[1], [0], [0], [1], [0, 0, 1, 1], [], []>} : vector<10x32xbf16>, vector<32x96xbf16>, vector<10x96xf32> -> vector<10x96xf32>
    %243 = vector.broadcast %213 : vector<1x96xf32> to vector<10x96xf32>
    %244 = arith.addf %242, %243 : vector<10x96xf32>
    %245 = vector.extract_strided_slice %244 {offsets = [0, 0], sizes = [10, 8], strides = [1, 1]} : vector<10x96xf32> to vector<10x8xf32>
    %246 = vector.extract_strided_slice %244 {offsets = [0, 32], sizes = [10, 8], strides = [1, 1]} : vector<10x96xf32> to vector<10x8xf32>
    %247 = vector.extract_strided_slice %244 {offsets = [0, 64], sizes = [10, 8], strides = [1, 1]} : vector<10x96xf32> to vector<10x8xf32>
    %248 = arith.truncf %245 : vector<10x8xf32> to vector<10x8xbf16>
    %249 = arith.truncf %246 : vector<10x8xf32> to vector<10x8xbf16>
    %cst_75 = arith.constant dense<0.000000e+00> : vector<10x10xf32>
    %250 = tpu.matmul %248, %249, %cst_75 {dimension_numbers = #tpu.dot_dimension_numbers<[1], [1], [0], [0], [0, 0, 1, 0], [], []>} : vector<10x8xbf16>, vector<10x8xbf16>, vector<10x10xf32> -> vector<10x10xf32>
    %cst_76 = arith.constant 0.353553385 : f32
    %251 = vector.broadcast %cst_76 : f32 to vector<10x10xf32>
    %252 = arith.mulf %250, %251 : vector<10x10xf32>
    %253 = arith.addf %252, %2 : vector<10x10xf32>
    %cst_77 = arith.constant dense<0xFF800000> : vector<10xf32>
    %254 = vector.multi_reduction <maximumf>, %253, %cst_77 [1] : vector<10x10xf32> to vector<10xf32>
    %255 = vector.shape_cast %254 : vector<10xf32> to vector<10x1xf32>
    %256 = vector.broadcast %255 : vector<10x1xf32> to vector<10x10xf32>
    %257 = arith.subf %253, %256 : vector<10x10xf32>
    %258 = math.exp %257 : vector<10x10xf32>
    %cst_78 = arith.constant dense<0.000000e+00> : vector<10xf32>
    %259 = vector.multi_reduction <add>, %258, %cst_78 [1] : vector<10x10xf32> to vector<10xf32>
    %260 = vector.shape_cast %259 : vector<10xf32> to vector<10x1xf32>
    %261 = tpu.reciprocal %260 {approx = true} : vector<10x1xf32> -> vector<10x1xf32>
    %262 = vector.broadcast %261 : vector<10x1xf32> to vector<10x10xf32>
    %263 = arith.mulf %258, %262 : vector<10x10xf32>
    %264 = arith.truncf %263 : vector<10x10xf32> to vector<10x10xbf16>
    %265 = arith.truncf %247 : vector<10x8xf32> to vector<10x8xbf16>
    %cst_79 = arith.constant dense<0.000000e+00> : vector<10x8xf32>
    %266 = tpu.matmul %264, %265, %cst_79 {dimension_numbers = #tpu.dot_dimension_numbers<[1], [0], [0], [1], [0, 0, 1, 1], [], []>} : vector<10x10xbf16>, vector<10x8xbf16>, vector<10x8xf32> -> vector<10x8xf32>
    %267 = vector.extract_strided_slice %244 {offsets = [0, 8], sizes = [10, 8], strides = [1, 1]} : vector<10x96xf32> to vector<10x8xf32>
    %268 = vector.extract_strided_slice %244 {offsets = [0, 40], sizes = [10, 8], strides = [1, 1]} : vector<10x96xf32> to vector<10x8xf32>
    %269 = vector.extract_strided_slice %244 {offsets = [0, 72], sizes = [10, 8], strides = [1, 1]} : vector<10x96xf32> to vector<10x8xf32>
    %270 = arith.truncf %267 : vector<10x8xf32> to vector<10x8xbf16>
    %271 = arith.truncf %268 : vector<10x8xf32> to vector<10x8xbf16>
    %cst_80 = arith.constant dense<0.000000e+00> : vector<10x10xf32>
    %272 = tpu.matmul %270, %271, %cst_80 {dimension_numbers = #tpu.dot_dimension_numbers<[1], [1], [0], [0], [0, 0, 1, 0], [], []>} : vector<10x8xbf16>, vector<10x8xbf16>, vector<10x10xf32> -> vector<10x10xf32>
    %cst_81 = arith.constant 0.353553385 : f32
    %273 = vector.broadcast %cst_81 : f32 to vector<10x10xf32>
    %274 = arith.mulf %272, %273 : vector<10x10xf32>
    %275 = arith.addf %274, %2 : vector<10x10xf32>
    %cst_82 = arith.constant dense<0xFF800000> : vector<10xf32>
    %276 = vector.multi_reduction <maximumf>, %275, %cst_82 [1] : vector<10x10xf32> to vector<10xf32>
    %277 = vector.shape_cast %276 : vector<10xf32> to vector<10x1xf32>
    %278 = vector.broadcast %277 : vector<10x1xf32> to vector<10x10xf32>
    %279 = arith.subf %275, %278 : vector<10x10xf32>
    %280 = math.exp %279 : vector<10x10xf32>
    %cst_83 = arith.constant dense<0.000000e+00> : vector<10xf32>
    %281 = vector.multi_reduction <add>, %280, %cst_83 [1] : vector<10x10xf32> to vector<10xf32>
    %282 = vector.shape_cast %281 : vector<10xf32> to vector<10x1xf32>
    %283 = tpu.reciprocal %282 {approx = true} : vector<10x1xf32> -> vector<10x1xf32>
    %284 = vector.broadcast %283 : vector<10x1xf32> to vector<10x10xf32>
    %285 = arith.mulf %280, %284 : vector<10x10xf32>
    %286 = arith.truncf %285 : vector<10x10xf32> to vector<10x10xbf16>
    %287 = arith.truncf %269 : vector<10x8xf32> to vector<10x8xbf16>
    %cst_84 = arith.constant dense<0.000000e+00> : vector<10x8xf32>
    %288 = tpu.matmul %286, %287, %cst_84 {dimension_numbers = #tpu.dot_dimension_numbers<[1], [0], [0], [1], [0, 0, 1, 1], [], []>} : vector<10x10xbf16>, vector<10x8xbf16>, vector<10x8xf32> -> vector<10x8xf32>
    %289 = vector.extract_strided_slice %244 {offsets = [0, 16], sizes = [10, 8], strides = [1, 1]} : vector<10x96xf32> to vector<10x8xf32>
    %290 = vector.extract_strided_slice %244 {offsets = [0, 48], sizes = [10, 8], strides = [1, 1]} : vector<10x96xf32> to vector<10x8xf32>
    %291 = vector.extract_strided_slice %244 {offsets = [0, 80], sizes = [10, 8], strides = [1, 1]} : vector<10x96xf32> to vector<10x8xf32>
    %292 = arith.truncf %289 : vector<10x8xf32> to vector<10x8xbf16>
    %293 = arith.truncf %290 : vector<10x8xf32> to vector<10x8xbf16>
    %cst_85 = arith.constant dense<0.000000e+00> : vector<10x10xf32>
    %294 = tpu.matmul %292, %293, %cst_85 {dimension_numbers = #tpu.dot_dimension_numbers<[1], [1], [0], [0], [0, 0, 1, 0], [], []>} : vector<10x8xbf16>, vector<10x8xbf16>, vector<10x10xf32> -> vector<10x10xf32>
    %cst_86 = arith.constant 0.353553385 : f32
    %295 = vector.broadcast %cst_86 : f32 to vector<10x10xf32>
    %296 = arith.mulf %294, %295 : vector<10x10xf32>
    %297 = arith.addf %296, %2 : vector<10x10xf32>
    %cst_87 = arith.constant dense<0xFF800000> : vector<10xf32>
    %298 = vector.multi_reduction <maximumf>, %297, %cst_87 [1] : vector<10x10xf32> to vector<10xf32>
    %299 = vector.shape_cast %298 : vector<10xf32> to vector<10x1xf32>
    %300 = vector.broadcast %299 : vector<10x1xf32> to vector<10x10xf32>
    %301 = arith.subf %297, %300 : vector<10x10xf32>
    %302 = math.exp %301 : vector<10x10xf32>
    %cst_88 = arith.constant dense<0.000000e+00> : vector<10xf32>
    %303 = vector.multi_reduction <add>, %302, %cst_88 [1] : vector<10x10xf32> to vector<10xf32>
    %304 = vector.shape_cast %303 : vector<10xf32> to vector<10x1xf32>
    %305 = tpu.reciprocal %304 {approx = true} : vector<10x1xf32> -> vector<10x1xf32>
    %306 = vector.broadcast %305 : vector<10x1xf32> to vector<10x10xf32>
    %307 = arith.mulf %302, %306 : vector<10x10xf32>
    %308 = arith.truncf %307 : vector<10x10xf32> to vector<10x10xbf16>
    %309 = arith.truncf %291 : vector<10x8xf32> to vector<10x8xbf16>
    %cst_89 = arith.constant dense<0.000000e+00> : vector<10x8xf32>
    %310 = tpu.matmul %308, %309, %cst_89 {dimension_numbers = #tpu.dot_dimension_numbers<[1], [0], [0], [1], [0, 0, 1, 1], [], []>} : vector<10x10xbf16>, vector<10x8xbf16>, vector<10x8xf32> -> vector<10x8xf32>
    %311 = vector.extract_strided_slice %244 {offsets = [0, 24], sizes = [10, 8], strides = [1, 1]} : vector<10x96xf32> to vector<10x8xf32>
    %312 = vector.extract_strided_slice %244 {offsets = [0, 56], sizes = [10, 8], strides = [1, 1]} : vector<10x96xf32> to vector<10x8xf32>
    %313 = vector.extract_strided_slice %244 {offsets = [0, 88], sizes = [10, 8], strides = [1, 1]} : vector<10x96xf32> to vector<10x8xf32>
    %314 = arith.truncf %311 : vector<10x8xf32> to vector<10x8xbf16>
    %315 = arith.truncf %312 : vector<10x8xf32> to vector<10x8xbf16>
    %cst_90 = arith.constant dense<0.000000e+00> : vector<10x10xf32>
    %316 = tpu.matmul %314, %315, %cst_90 {dimension_numbers = #tpu.dot_dimension_numbers<[1], [1], [0], [0], [0, 0, 1, 0], [], []>} : vector<10x8xbf16>, vector<10x8xbf16>, vector<10x10xf32> -> vector<10x10xf32>
    %cst_91 = arith.constant 0.353553385 : f32
    %317 = vector.broadcast %cst_91 : f32 to vector<10x10xf32>
    %318 = arith.mulf %316, %317 : vector<10x10xf32>
    %319 = arith.addf %318, %2 : vector<10x10xf32>
    %cst_92 = arith.constant dense<0xFF800000> : vector<10xf32>
    %320 = vector.multi_reduction <maximumf>, %319, %cst_92 [1] : vector<10x10xf32> to vector<10xf32>
    %321 = vector.shape_cast %320 : vector<10xf32> to vector<10x1xf32>
    %322 = vector.broadcast %321 : vector<10x1xf32> to vector<10x10xf32>
    %323 = arith.subf %319, %322 : vector<10x10xf32>
    %324 = math.exp %323 : vector<10x10xf32>
    %cst_93 = arith.constant dense<0.000000e+00> : vector<10xf32>
    %325 = vector.multi_reduction <add>, %324, %cst_93 [1] : vector<10x10xf32> to vector<10xf32>
    %326 = vector.shape_cast %325 : vector<10xf32> to vector<10x1xf32>
    %327 = tpu.reciprocal %326 {approx = true} : vector<10x1xf32> -> vector<10x1xf32>
    %328 = vector.broadcast %327 : vector<10x1xf32> to vector<10x10xf32>
    %329 = arith.mulf %324, %328 : vector<10x10xf32>
    %330 = arith.truncf %329 : vector<10x10xf32> to vector<10x10xbf16>
    %331 = arith.truncf %313 : vector<10x8xf32> to vector<10x8xbf16>
    %cst_94 = arith.constant dense<0.000000e+00> : vector<10x8xf32>
    %332 = tpu.matmul %330, %331, %cst_94 {dimension_numbers = #tpu.dot_dimension_numbers<[1], [0], [0], [1], [0, 0, 1, 1], [], []>} : vector<10x10xbf16>, vector<10x8xbf16>, vector<10x8xf32> -> vector<10x8xf32>
    %333 = tpu.concatenate %266, %288, %310, %332 in 1 : vector<10x8xf32>, vector<10x8xf32>, vector<10x8xf32>, vector<10x8xf32> -> vector<10x32xf32>
    %334 = arith.truncf %333 : vector<10x32xf32> to vector<10x32xbf16>
    %c1_95 = arith.constant 1 : index
    %c0_96 = arith.constant 0 : index
    %c0_97 = arith.constant 0 : index
    %335 = vector.load %arg5[%c1_95, %c0_96, %c0_97] : memref<2x32x32xbf16, #tpu.memory_space<vmem>>, vector<1x32x32xbf16>
    %336 = vector.shape_cast %335 : vector<1x32x32xbf16> to vector<32x32xbf16>
    %cst_98 = arith.constant dense<0.000000e+00> : vector<10x32xf32>
    %337 = tpu.matmul %334, %336, %cst_98 {dimension_numbers = #tpu.dot_dimension_numbers<[1], [0], [0], [1], [0, 0, 1, 1], [], []>} : vector<10x32xbf16>, vector<32x32xbf16>, vector<10x32xf32> -> vector<10x32xf32>
    %338 = arith.addf %210, %337 : vector<10x32xf32>
    %339 = vector.broadcast %214 : vector<1x32xf32> to vector<10x32xf32>
    %340 = arith.addf %338, %339 : vector<10x32xf32>
    %cst_99 = arith.constant dense<0.000000e+00> : vector<10xf32>
    %341 = vector.multi_reduction <add>, %340, %cst_99 [1] : vector<10x32xf32> to vector<10xf32>
    %342 = vector.shape_cast %341 : vector<10xf32> to vector<10x1xf32>
    %cst_100 = arith.constant 3.200000e+01 : f32
    %343 = vector.broadcast %cst_100 : f32 to vector<10x1xf32>
    %344 = arith.divf %342, %343 : vector<10x1xf32>
    %345 = vector.broadcast %344 : vector<10x1xf32> to vector<10x32xf32>
    %346 = arith.subf %340, %345 : vector<10x32xf32>
    %347 = arith.mulf %346, %346 : vector<10x32xf32>
    %cst_101 = arith.constant dense<0.000000e+00> : vector<10xf32>
    %348 = vector.multi_reduction <add>, %347, %cst_101 [1] : vector<10x32xf32> to vector<10xf32>
    %349 = vector.shape_cast %348 : vector<10xf32> to vector<10x1xf32>
    %cst_102 = arith.constant 3.200000e+01 : f32
    %350 = vector.broadcast %cst_102 : f32 to vector<10x1xf32>
    %351 = arith.divf %349, %350 : vector<10x1xf32>
    %cst_103 = arith.constant 9.99999997E-7 : f32
    %352 = vector.broadcast %cst_103 : f32 to vector<10x1xf32>
    %353 = arith.addf %351, %352 : vector<10x1xf32>
    %354 = math.rsqrt %353 : vector<10x1xf32>
    %355 = vector.broadcast %354 : vector<10x1xf32> to vector<10x32xf32>
    %356 = arith.mulf %346, %355 : vector<10x32xf32>
    %357 = vector.broadcast %215 : vector<1x32xf32> to vector<10x32xf32>
    %358 = arith.mulf %356, %357 : vector<10x32xf32>
    %359 = vector.broadcast %216 : vector<1x32xf32> to vector<10x32xf32>
    %360 = arith.addf %358, %359 : vector<10x32xf32>
    %361 = arith.truncf %360 : vector<10x32xf32> to vector<10x32xbf16>
    %c1_104 = arith.constant 1 : index
    %c0_105 = arith.constant 0 : index
    %c0_106 = arith.constant 0 : index
    %362 = vector.load %arg6[%c1_104, %c0_105, %c0_106] : memref<2x32x64xbf16, #tpu.memory_space<vmem>>, vector<1x32x64xbf16>
    %363 = vector.shape_cast %362 : vector<1x32x64xbf16> to vector<32x64xbf16>
    %cst_107 = arith.constant dense<0.000000e+00> : vector<10x64xf32>
    %364 = tpu.matmul %361, %363, %cst_107 {dimension_numbers = #tpu.dot_dimension_numbers<[1], [0], [0], [1], [0, 0, 1, 1], [], []>} : vector<10x32xbf16>, vector<32x64xbf16>, vector<10x64xf32> -> vector<10x64xf32>
    %365 = vector.broadcast %217 : vector<1x64xf32> to vector<10x64xf32>
    %366 = arith.addf %364, %365 : vector<10x64xf32>
    %cst_108 = arith.constant 5.000000e-01 : f32
    %367 = vector.broadcast %cst_108 : f32 to vector<10x64xf32>
    %368 = arith.mulf %367, %366 : vector<10x64xf32>
    %cst_109 = arith.constant 0.707106769 : f32
    %369 = vector.broadcast %cst_109 : f32 to vector<10x64xf32>
    %370 = arith.mulf %366, %369 : vector<10x64xf32>
    %cst_110 = arith.constant 0.000000e+00 : f32
    %371 = vector.broadcast %cst_110 : f32 to vector<10x64xf32>
    %372 = arith.cmpf oge, %370, %371 : vector<10x64xf32>
    %cst_111 = arith.constant 1.000000e+00 : f32
    %cst_112 = arith.constant -1.000000e+00 : f32
    %373 = vector.broadcast %cst_111 : f32 to vector<10x64xf32>
    %374 = vector.broadcast %cst_112 : f32 to vector<10x64xf32>
    %375 = arith.select %372, %373, %374 : vector<10x64xi1>, vector<10x64xf32>
    %376 = math.absf %370 : vector<10x64xf32>
    %cst_113 = arith.constant 0.327591091 : f32
    %377 = vector.broadcast %cst_113 : f32 to vector<10x64xf32>
    %378 = arith.mulf %377, %376 : vector<10x64xf32>
    %cst_114 = arith.constant 1.000000e+00 : f32
    %379 = vector.broadcast %cst_114 : f32 to vector<10x64xf32>
    %380 = arith.addf %379, %378 : vector<10x64xf32>
    %cst_115 = arith.constant 1.000000e+00 : f32
    %381 = vector.broadcast %cst_115 : f32 to vector<10x64xf32>
    %382 = arith.divf %381, %380 : vector<10x64xf32>
    %cst_116 = arith.constant 1.06140542 : f32
    %383 = vector.broadcast %cst_116 : f32 to vector<10x64xf32>
    %384 = arith.mulf %383, %382 : vector<10x64xf32>
    %cst_117 = arith.constant -1.45315206 : f32
    %385 = vector.broadcast %cst_117 : f32 to vector<10x64xf32>
    %386 = arith.addf %384, %385 : vector<10x64xf32>
    %387 = arith.mulf %386, %382 : vector<10x64xf32>
    %cst_118 = arith.constant 1.42141378 : f32
    %388 = vector.broadcast %cst_118 : f32 to vector<10x64xf32>
    %389 = arith.addf %387, %388 : vector<10x64xf32>
    %390 = arith.mulf %389, %382 : vector<10x64xf32>
    %cst_119 = arith.constant -0.284496725 : f32
    %391 = vector.broadcast %cst_119 : f32 to vector<10x64xf32>
    %392 = arith.addf %390, %391 : vector<10x64xf32>
    %393 = arith.mulf %392, %382 : vector<10x64xf32>
    %cst_120 = arith.constant 0.254829586 : f32
    %394 = vector.broadcast %cst_120 : f32 to vector<10x64xf32>
    %395 = arith.addf %393, %394 : vector<10x64xf32>
    %396 = arith.mulf %395, %382 : vector<10x64xf32>
    %cst_121 = arith.constant 0.000000e+00 : f32
    %397 = vector.broadcast %cst_121 : f32 to vector<10x64xf32>
    %398 = arith.subf %397, %376 : vector<10x64xf32>
    %399 = arith.mulf %398, %376 : vector<10x64xf32>
    %400 = math.exp %399 : vector<10x64xf32>
    %401 = arith.mulf %396, %400 : vector<10x64xf32>
    %cst_122 = arith.constant 1.000000e+00 : f32
    %402 = vector.broadcast %cst_122 : f32 to vector<10x64xf32>
    %403 = arith.subf %402, %401 : vector<10x64xf32>
    %404 = arith.mulf %375, %403 : vector<10x64xf32>
    %cst_123 = arith.constant 1.000000e+00 : f32
    %405 = vector.broadcast %cst_123 : f32 to vector<10x64xf32>
    %406 = arith.addf %405, %404 : vector<10x64xf32>
    %407 = arith.mulf %368, %406 : vector<10x64xf32>
    %408 = arith.truncf %407 : vector<10x64xf32> to vector<10x64xbf16>
    %c1_124 = arith.constant 1 : index
    %c0_125 = arith.constant 0 : index
    %c0_126 = arith.constant 0 : index
    %409 = vector.load %arg7[%c1_124, %c0_125, %c0_126] : memref<2x64x32xbf16, #tpu.memory_space<vmem>>, vector<1x64x32xbf16>
    %410 = vector.shape_cast %409 : vector<1x64x32xbf16> to vector<64x32xbf16>
    %cst_127 = arith.constant dense<0.000000e+00> : vector<10x32xf32>
    %411 = tpu.matmul %408, %410, %cst_127 {dimension_numbers = #tpu.dot_dimension_numbers<[1], [0], [0], [1], [0, 0, 1, 1], [], []>} : vector<10x64xbf16>, vector<64x32xbf16>, vector<10x32xf32> -> vector<10x32xf32>
    %412 = arith.addf %340, %411 : vector<10x32xf32>
    %413 = vector.broadcast %218 : vector<1x32xf32> to vector<10x32xf32>
    %414 = arith.addf %412, %413 : vector<10x32xf32>
    %415 = vector.extract_strided_slice %0 {offsets = [36, 0], sizes = [1, 32], strides = [1, 1]} : vector<45x128xf32> to vector<1x32xf32>
    %416 = vector.extract_strided_slice %0 {offsets = [37, 0], sizes = [1, 32], strides = [1, 1]} : vector<45x128xf32> to vector<1x32xf32>
    %cst_128 = arith.constant dense<0.000000e+00> : vector<10xf32>
    %417 = vector.multi_reduction <add>, %414, %cst_128 [1] : vector<10x32xf32> to vector<10xf32>
    %418 = vector.shape_cast %417 : vector<10xf32> to vector<10x1xf32>
    %cst_129 = arith.constant 3.200000e+01 : f32
    %419 = vector.broadcast %cst_129 : f32 to vector<10x1xf32>
    %420 = arith.divf %418, %419 : vector<10x1xf32>
    %421 = vector.broadcast %420 : vector<10x1xf32> to vector<10x32xf32>
    %422 = arith.subf %414, %421 : vector<10x32xf32>
    %423 = arith.mulf %422, %422 : vector<10x32xf32>
    %cst_130 = arith.constant dense<0.000000e+00> : vector<10xf32>
    %424 = vector.multi_reduction <add>, %423, %cst_130 [1] : vector<10x32xf32> to vector<10xf32>
    %425 = vector.shape_cast %424 : vector<10xf32> to vector<10x1xf32>
    %cst_131 = arith.constant 3.200000e+01 : f32
    %426 = vector.broadcast %cst_131 : f32 to vector<10x1xf32>
    %427 = arith.divf %425, %426 : vector<10x1xf32>
    %cst_132 = arith.constant 9.99999997E-7 : f32
    %428 = vector.broadcast %cst_132 : f32 to vector<10x1xf32>
    %429 = arith.addf %427, %428 : vector<10x1xf32>
    %430 = math.rsqrt %429 : vector<10x1xf32>
    %431 = vector.broadcast %430 : vector<10x1xf32> to vector<10x32xf32>
    %432 = arith.mulf %422, %431 : vector<10x32xf32>
    %433 = vector.broadcast %415 : vector<1x32xf32> to vector<10x32xf32>
    %434 = arith.mulf %432, %433 : vector<10x32xf32>
    %435 = vector.broadcast %416 : vector<1x32xf32> to vector<10x32xf32>
    %436 = arith.addf %434, %435 : vector<10x32xf32>
    %437 = vector.extract_strided_slice %0 {offsets = [38, 0], sizes = [1, 64], strides = [1, 1]} : vector<45x128xf32> to vector<1x64xf32>
    %438 = vector.extract_strided_slice %0 {offsets = [39, 0], sizes = [1, 64], strides = [1, 1]} : vector<45x128xf32> to vector<1x64xf32>
    %439 = vector.extract_strided_slice %0 {offsets = [40, 0], sizes = [1, 64], strides = [1, 1]} : vector<45x128xf32> to vector<1x64xf32>
    %440 = vector.extract_strided_slice %0 {offsets = [41, 0], sizes = [1, 32], strides = [1, 1]} : vector<45x128xf32> to vector<1x32xf32>
    %441 = vector.extract_strided_slice %0 {offsets = [42, 0], sizes = [1, 32], strides = [1, 1]} : vector<45x128xf32> to vector<1x32xf32>
    %442 = vector.extract_strided_slice %0 {offsets = [43, 0], sizes = [1, 32], strides = [1, 1]} : vector<45x128xf32> to vector<1x32xf32>
    %443 = vector.extract_strided_slice %0 {offsets = [44, 0], sizes = [1, 8], strides = [1, 1]} : vector<45x128xf32> to vector<1x8xf32>
    %444 = arith.truncf %436 : vector<10x32xf32> to vector<10x32xbf16>
    %c0_133 = arith.constant 0 : index
    %c0_134 = arith.constant 0 : index
    %445 = vector.load %arg8[%c0_133, %c0_134] : memref<32x64xbf16, #tpu.memory_space<vmem>>, vector<32x64xbf16>
    %cst_135 = arith.constant dense<0.000000e+00> : vector<10x64xf32>
    %446 = tpu.matmul %444, %445, %cst_135 {dimension_numbers = #tpu.dot_dimension_numbers<[1], [0], [0], [1], [0, 0, 1, 1], [], []>} : vector<10x32xbf16>, vector<32x64xbf16>, vector<10x64xf32> -> vector<10x64xf32>
    %447 = vector.broadcast %437 : vector<1x64xf32> to vector<10x64xf32>
    %448 = arith.addf %446, %447 : vector<10x64xf32>
    %cst_136 = arith.constant dense<0.000000e+00> : vector<10xf32>
    %449 = vector.multi_reduction <add>, %448, %cst_136 [1] : vector<10x64xf32> to vector<10xf32>
    %450 = vector.shape_cast %449 : vector<10xf32> to vector<10x1xf32>
    %cst_137 = arith.constant 6.400000e+01 : f32
    %451 = vector.broadcast %cst_137 : f32 to vector<10x1xf32>
    %452 = arith.divf %450, %451 : vector<10x1xf32>
    %453 = vector.broadcast %452 : vector<10x1xf32> to vector<10x64xf32>
    %454 = arith.subf %448, %453 : vector<10x64xf32>
    %455 = arith.mulf %454, %454 : vector<10x64xf32>
    %cst_138 = arith.constant dense<0.000000e+00> : vector<10xf32>
    %456 = vector.multi_reduction <add>, %455, %cst_138 [1] : vector<10x64xf32> to vector<10xf32>
    %457 = vector.shape_cast %456 : vector<10xf32> to vector<10x1xf32>
    %cst_139 = arith.constant 6.400000e+01 : f32
    %458 = vector.broadcast %cst_139 : f32 to vector<10x1xf32>
    %459 = arith.divf %457, %458 : vector<10x1xf32>
    %cst_140 = arith.constant 9.99999974E-6 : f32
    %460 = vector.broadcast %cst_140 : f32 to vector<10x1xf32>
    %461 = arith.addf %459, %460 : vector<10x1xf32>
    %462 = math.rsqrt %461 : vector<10x1xf32>
    %463 = vector.broadcast %462 : vector<10x1xf32> to vector<10x64xf32>
    %464 = arith.mulf %454, %463 : vector<10x64xf32>
    %465 = vector.broadcast %438 : vector<1x64xf32> to vector<10x64xf32>
    %466 = arith.mulf %464, %465 : vector<10x64xf32>
    %467 = vector.broadcast %439 : vector<1x64xf32> to vector<10x64xf32>
    %468 = arith.addf %466, %467 : vector<10x64xf32>
    %cst_141 = arith.constant 5.000000e-01 : f32
    %469 = vector.broadcast %cst_141 : f32 to vector<10x64xf32>
    %470 = arith.mulf %469, %468 : vector<10x64xf32>
    %cst_142 = arith.constant 0.707106769 : f32
    %471 = vector.broadcast %cst_142 : f32 to vector<10x64xf32>
    %472 = arith.mulf %468, %471 : vector<10x64xf32>
    %cst_143 = arith.constant 0.000000e+00 : f32
    %473 = vector.broadcast %cst_143 : f32 to vector<10x64xf32>
    %474 = arith.cmpf oge, %472, %473 : vector<10x64xf32>
    %cst_144 = arith.constant 1.000000e+00 : f32
    %cst_145 = arith.constant -1.000000e+00 : f32
    %475 = vector.broadcast %cst_144 : f32 to vector<10x64xf32>
    %476 = vector.broadcast %cst_145 : f32 to vector<10x64xf32>
    %477 = arith.select %474, %475, %476 : vector<10x64xi1>, vector<10x64xf32>
    %478 = math.absf %472 : vector<10x64xf32>
    %cst_146 = arith.constant 0.327591091 : f32
    %479 = vector.broadcast %cst_146 : f32 to vector<10x64xf32>
    %480 = arith.mulf %479, %478 : vector<10x64xf32>
    %cst_147 = arith.constant 1.000000e+00 : f32
    %481 = vector.broadcast %cst_147 : f32 to vector<10x64xf32>
    %482 = arith.addf %481, %480 : vector<10x64xf32>
    %cst_148 = arith.constant 1.000000e+00 : f32
    %483 = vector.broadcast %cst_148 : f32 to vector<10x64xf32>
    %484 = arith.divf %483, %482 : vector<10x64xf32>
    %cst_149 = arith.constant 1.06140542 : f32
    %485 = vector.broadcast %cst_149 : f32 to vector<10x64xf32>
    %486 = arith.mulf %485, %484 : vector<10x64xf32>
    %cst_150 = arith.constant -1.45315206 : f32
    %487 = vector.broadcast %cst_150 : f32 to vector<10x64xf32>
    %488 = arith.addf %486, %487 : vector<10x64xf32>
    %489 = arith.mulf %488, %484 : vector<10x64xf32>
    %cst_151 = arith.constant 1.42141378 : f32
    %490 = vector.broadcast %cst_151 : f32 to vector<10x64xf32>
    %491 = arith.addf %489, %490 : vector<10x64xf32>
    %492 = arith.mulf %491, %484 : vector<10x64xf32>
    %cst_152 = arith.constant -0.284496725 : f32
    %493 = vector.broadcast %cst_152 : f32 to vector<10x64xf32>
    %494 = arith.addf %492, %493 : vector<10x64xf32>
    %495 = arith.mulf %494, %484 : vector<10x64xf32>
    %cst_153 = arith.constant 0.254829586 : f32
    %496 = vector.broadcast %cst_153 : f32 to vector<10x64xf32>
    %497 = arith.addf %495, %496 : vector<10x64xf32>
    %498 = arith.mulf %497, %484 : vector<10x64xf32>
    %cst_154 = arith.constant 0.000000e+00 : f32
    %499 = vector.broadcast %cst_154 : f32 to vector<10x64xf32>
    %500 = arith.subf %499, %478 : vector<10x64xf32>
    %501 = arith.mulf %500, %478 : vector<10x64xf32>
    %502 = math.exp %501 : vector<10x64xf32>
    %503 = arith.mulf %498, %502 : vector<10x64xf32>
    %cst_155 = arith.constant 1.000000e+00 : f32
    %504 = vector.broadcast %cst_155 : f32 to vector<10x64xf32>
    %505 = arith.subf %504, %503 : vector<10x64xf32>
    %506 = arith.mulf %477, %505 : vector<10x64xf32>
    %cst_156 = arith.constant 1.000000e+00 : f32
    %507 = vector.broadcast %cst_156 : f32 to vector<10x64xf32>
    %508 = arith.addf %507, %506 : vector<10x64xf32>
    %509 = arith.mulf %470, %508 : vector<10x64xf32>
    %510 = arith.truncf %509 : vector<10x64xf32> to vector<10x64xbf16>
    %c0_157 = arith.constant 0 : index
    %c0_158 = arith.constant 0 : index
    %511 = vector.load %arg9[%c0_157, %c0_158] : memref<64x32xbf16, #tpu.memory_space<vmem>>, vector<64x32xbf16>
    %cst_159 = arith.constant dense<0.000000e+00> : vector<10x32xf32>
    %512 = tpu.matmul %510, %511, %cst_159 {dimension_numbers = #tpu.dot_dimension_numbers<[1], [0], [0], [1], [0, 0, 1, 1], [], []>} : vector<10x64xbf16>, vector<64x32xbf16>, vector<10x32xf32> -> vector<10x32xf32>
    %513 = vector.broadcast %440 : vector<1x32xf32> to vector<10x32xf32>
    %514 = arith.addf %512, %513 : vector<10x32xf32>
    %cst_160 = arith.constant dense<0.000000e+00> : vector<10xf32>
    %515 = vector.multi_reduction <add>, %514, %cst_160 [1] : vector<10x32xf32> to vector<10xf32>
    %516 = vector.shape_cast %515 : vector<10xf32> to vector<10x1xf32>
    %cst_161 = arith.constant 3.200000e+01 : f32
    %517 = vector.broadcast %cst_161 : f32 to vector<10x1xf32>
    %518 = arith.divf %516, %517 : vector<10x1xf32>
    %519 = vector.broadcast %518 : vector<10x1xf32> to vector<10x32xf32>
    %520 = arith.subf %514, %519 : vector<10x32xf32>
    %521 = arith.mulf %520, %520 : vector<10x32xf32>
    %cst_162 = arith.constant dense<0.000000e+00> : vector<10xf32>
    %522 = vector.multi_reduction <add>, %521, %cst_162 [1] : vector<10x32xf32> to vector<10xf32>
    %523 = vector.shape_cast %522 : vector<10xf32> to vector<10x1xf32>
    %cst_163 = arith.constant 3.200000e+01 : f32
    %524 = vector.broadcast %cst_163 : f32 to vector<10x1xf32>
    %525 = arith.divf %523, %524 : vector<10x1xf32>
    %cst_164 = arith.constant 9.99999974E-6 : f32
    %526 = vector.broadcast %cst_164 : f32 to vector<10x1xf32>
    %527 = arith.addf %525, %526 : vector<10x1xf32>
    %528 = math.rsqrt %527 : vector<10x1xf32>
    %529 = vector.broadcast %528 : vector<10x1xf32> to vector<10x32xf32>
    %530 = arith.mulf %520, %529 : vector<10x32xf32>
    %531 = vector.broadcast %441 : vector<1x32xf32> to vector<10x32xf32>
    %532 = arith.mulf %530, %531 : vector<10x32xf32>
    %533 = vector.broadcast %442 : vector<1x32xf32> to vector<10x32xf32>
    %534 = arith.addf %532, %533 : vector<10x32xf32>
    %cst_165 = arith.constant 5.000000e-01 : f32
    %535 = vector.broadcast %cst_165 : f32 to vector<10x32xf32>
    %536 = arith.mulf %535, %534 : vector<10x32xf32>
    %cst_166 = arith.constant 0.707106769 : f32
    %537 = vector.broadcast %cst_166 : f32 to vector<10x32xf32>
    %538 = arith.mulf %534, %537 : vector<10x32xf32>
    %cst_167 = arith.constant 0.000000e+00 : f32
    %539 = vector.broadcast %cst_167 : f32 to vector<10x32xf32>
    %540 = arith.cmpf oge, %538, %539 : vector<10x32xf32>
    %cst_168 = arith.constant 1.000000e+00 : f32
    %cst_169 = arith.constant -1.000000e+00 : f32
    %541 = vector.broadcast %cst_168 : f32 to vector<10x32xf32>
    %542 = vector.broadcast %cst_169 : f32 to vector<10x32xf32>
    %543 = arith.select %540, %541, %542 : vector<10x32xi1>, vector<10x32xf32>
    %544 = math.absf %538 : vector<10x32xf32>
    %cst_170 = arith.constant 0.327591091 : f32
    %545 = vector.broadcast %cst_170 : f32 to vector<10x32xf32>
    %546 = arith.mulf %545, %544 : vector<10x32xf32>
    %cst_171 = arith.constant 1.000000e+00 : f32
    %547 = vector.broadcast %cst_171 : f32 to vector<10x32xf32>
    %548 = arith.addf %547, %546 : vector<10x32xf32>
    %cst_172 = arith.constant 1.000000e+00 : f32
    %549 = vector.broadcast %cst_172 : f32 to vector<10x32xf32>
    %550 = arith.divf %549, %548 : vector<10x32xf32>
    %cst_173 = arith.constant 1.06140542 : f32
    %551 = vector.broadcast %cst_173 : f32 to vector<10x32xf32>
    %552 = arith.mulf %551, %550 : vector<10x32xf32>
    %cst_174 = arith.constant -1.45315206 : f32
    %553 = vector.broadcast %cst_174 : f32 to vector<10x32xf32>
    %554 = arith.addf %552, %553 : vector<10x32xf32>
    %555 = arith.mulf %554, %550 : vector<10x32xf32>
    %cst_175 = arith.constant 1.42141378 : f32
    %556 = vector.broadcast %cst_175 : f32 to vector<10x32xf32>
    %557 = arith.addf %555, %556 : vector<10x32xf32>
    %558 = arith.mulf %557, %550 : vector<10x32xf32>
    %cst_176 = arith.constant -0.284496725 : f32
    %559 = vector.broadcast %cst_176 : f32 to vector<10x32xf32>
    %560 = arith.addf %558, %559 : vector<10x32xf32>
    %561 = arith.mulf %560, %550 : vector<10x32xf32>
    %cst_177 = arith.constant 0.254829586 : f32
    %562 = vector.broadcast %cst_177 : f32 to vector<10x32xf32>
    %563 = arith.addf %561, %562 : vector<10x32xf32>
    %564 = arith.mulf %563, %550 : vector<10x32xf32>
    %cst_178 = arith.constant 0.000000e+00 : f32
    %565 = vector.broadcast %cst_178 : f32 to vector<10x32xf32>
    %566 = arith.subf %565, %544 : vector<10x32xf32>
    %567 = arith.mulf %566, %544 : vector<10x32xf32>
    %568 = math.exp %567 : vector<10x32xf32>
    %569 = arith.mulf %564, %568 : vector<10x32xf32>
    %cst_179 = arith.constant 1.000000e+00 : f32
    %570 = vector.broadcast %cst_179 : f32 to vector<10x32xf32>
    %571 = arith.subf %570, %569 : vector<10x32xf32>
    %572 = arith.mulf %543, %571 : vector<10x32xf32>
    %cst_180 = arith.constant 1.000000e+00 : f32
    %573 = vector.broadcast %cst_180 : f32 to vector<10x32xf32>
    %574 = arith.addf %573, %572 : vector<10x32xf32>
    %575 = arith.mulf %536, %574 : vector<10x32xf32>
    %576 = arith.truncf %575 : vector<10x32xf32> to vector<10x32xbf16>
    %c0_181 = arith.constant 0 : index
    %c0_182 = arith.constant 0 : index
    %577 = vector.load %arg10[%c0_181, %c0_182] : memref<32x8xbf16, #tpu.memory_space<vmem>>, vector<32x8xbf16>
    %cst_183 = arith.constant dense<0.000000e+00> : vector<10x8xf32>
    %578 = tpu.matmul %576, %577, %cst_183 {dimension_numbers = #tpu.dot_dimension_numbers<[1], [0], [0], [1], [0, 0, 1, 1], [], []>} : vector<10x32xbf16>, vector<32x8xbf16>, vector<10x8xf32> -> vector<10x8xf32>
    %579 = vector.broadcast %443 : vector<1x8xf32> to vector<10x8xf32>
    %580 = arith.addf %578, %579 : vector<10x8xf32>
    %c0_184 = arith.constant 0 : index
    %c0_185 = arith.constant 0 : index
    %581 = vector.load %arg11[%c0_184, %c0_185] : memref<4x1024xf32, #tpu.memory_space<vmem>>, vector<4x1024xf32>
    %582 = vector.extract_strided_slice %580 {offsets = [1, 0], sizes = [4, 8], strides = [1, 1]} : vector<10x8xf32> to vector<4x8xf32>
    %cst_186 = arith.constant dense<0.000000e+00> : vector<8x1024xf32>
    %583 = tpu.matmul %582, %581, %cst_186 {dimension_numbers = #tpu.dot_dimension_numbers<[0], [0], [1], [1], [0, 1, 1, 1], [], []>} : vector<4x8xf32>, vector<4x1024xf32>, vector<8x1024xf32> -> vector<8x1024xf32>
    %c0_187 = arith.constant 0 : index
    %c0_188 = arith.constant 0 : index
    %584 = vector.load %arg12[%c0_187, %c0_188] : memref<16x1024xf32, #tpu.memory_space<vmem>>, vector<8x1024xf32>
    tpu.vector_store %arg12[%c0_187, %c0_188], %583 {strides = array<i32>} : memref<16x1024xf32, #tpu.memory_space<vmem>>, vector<8x1024xf32>,
    %585 = vector.extract_strided_slice %580 {offsets = [6, 0], sizes = [4, 8], strides = [1, 1]} : vector<10x8xf32> to vector<4x8xf32>
    %cst_189 = arith.constant dense<0.000000e+00> : vector<8x1024xf32>
    %586 = tpu.matmul %585, %581, %cst_189 {dimension_numbers = #tpu.dot_dimension_numbers<[0], [0], [1], [1], [0, 1, 1, 1], [], []>} : vector<4x8xf32>, vector<4x1024xf32>, vector<8x1024xf32> -> vector<8x1024xf32>
    %c8 = arith.constant 8 : index
    %c0_190 = arith.constant 0 : index
    %587 = vector.load %arg12[%c8, %c0_190] : memref<16x1024xf32, #tpu.memory_space<vmem>>, vector<8x1024xf32>
    tpu.vector_store %arg12[%c8, %c0_190], %586 {strides = array<i32>} : memref<16x1024xf32, #tpu.memory_space<vmem>>, vector<8x1024xf32>,
    return
  }
  func.func @transform_0(%arg0: i32) -> (i32, i32) {
    %c0_i32 = arith.constant 0 : i32
    %c0_i32_0 = arith.constant 0 : i32
    %c0_i32_1 = arith.constant 0 : i32
    return %c0_i32, %c0_i32_0 : i32, i32
  }
  func.func @transform_1(%arg0: i32) -> (i32, i32) {
    %c0_i32 = arith.constant 0 : i32
    %c0_i32_0 = arith.constant 0 : i32
    %c0_i32_1 = arith.constant 0 : i32
    return %c0_i32, %c0_i32_0 : i32, i32
  }
  func.func @transform_2(%arg0: i32) -> (i32, i32) {
    %c0_i32 = arith.constant 0 : i32
    %c0_i32_0 = arith.constant 0 : i32
    %c0_i32_1 = arith.constant 0 : i32
    return %c0_i32, %c0_i32_0 : i32, i32
  }
  func.func @transform_3(%arg0: i32) -> (i32, i32, i32) {
    %c0_i32 = arith.constant 0 : i32
    %c0_i32_0 = arith.constant 0 : i32
    %c0_i32_1 = arith.constant 0 : i32
    %c0_i32_2 = arith.constant 0 : i32
    return %c0_i32, %c0_i32_0, %c0_i32_1 : i32, i32, i32
  }
  func.func @transform_4(%arg0: i32) -> (i32, i32, i32) {
    %c0_i32 = arith.constant 0 : i32
    %c0_i32_0 = arith.constant 0 : i32
    %c0_i32_1 = arith.constant 0 : i32
    %c0_i32_2 = arith.constant 0 : i32
    return %c0_i32, %c0_i32_0, %c0_i32_1 : i32, i32, i32
  }
  func.func @transform_5(%arg0: i32) -> (i32, i32, i32) {
    %c0_i32 = arith.constant 0 : i32
    %c0_i32_0 = arith.constant 0 : i32
    %c0_i32_1 = arith.constant 0 : i32
    %c0_i32_2 = arith.constant 0 : i32
    return %c0_i32, %c0_i32_0, %c0_i32_1 : i32, i32, i32
  }
  func.func @transform_6(%arg0: i32) -> (i32, i32, i32) {
    %c0_i32 = arith.constant 0 : i32
    %c0_i32_0 = arith.constant 0 : i32
    %c0_i32_1 = arith.constant 0 : i32
    %c0_i32_2 = arith.constant 0 : i32
    return %c0_i32, %c0_i32_0, %c0_i32_1 : i32, i32, i32
  }
  func.func @transform_7(%arg0: i32) -> (i32, i32) {
    %c0_i32 = arith.constant 0 : i32
    %c0_i32_0 = arith.constant 0 : i32
    %c0_i32_1 = arith.constant 0 : i32
    return %c0_i32, %c0_i32_0 : i32, i32
  }
  func.func @transform_8(%arg0: i32) -> (i32, i32) {
    %c0_i32 = arith.constant 0 : i32
    %c0_i32_0 = arith.constant 0 : i32
    %c0_i32_1 = arith.constant 0 : i32
    return %c0_i32, %c0_i32_0 : i32, i32
  }
  func.func @transform_9(%arg0: i32) -> (i32, i32) {
    %c0_i32 = arith.constant 0 : i32
    %c0_i32_0 = arith.constant 0 : i32
    %c0_i32_1 = arith.constant 0 : i32
    return %c0_i32, %c0_i32_0 : i32, i32
  }
  func.func @transform_10(%arg0: i32) -> (i32, i32) {
    %c0_i32 = arith.constant 0 : i32
    %c0_i32_0 = arith.constant 0 : i32
    %c0_i32_1 = arith.constant 0 : i32
    return %c0_i32, %c0_i32_0 : i32, i32
  }
  func.func @transform_11(%arg0: i32) -> (i32, i32) {
    %c0_i32 = arith.constant 0 : i32
    %c0_i32_0 = arith.constant 0 : i32
    %c0_i32_1 = arith.constant 0 : i32
    return %c0_i32, %c0_i32_0 : i32, i32
  }
}

</mosaic_0001>

<llo_original>
// kernel: tile.9
$region0: #{tile.9}
  %s0 = inlined_call_operand.vmem [shape: f32[2,5,32], index: 0, kind: input, shape index: {}]
  %s1 = inlined_call_operand.vmem [shape: f32[10,32], index: 1, kind: output, shape index: {}]
  %v2 = vld [vmem:[%s0] sm:$0x1f]
  %vm3 = vcmask 261120
  %4 = vst.msk [vmem:[%s1] sm:$0x1f] %vm3, %v2
  %s5 = scalar_lea.vmem %s0, 8
  %v6 = vld [vmem:[%s5] sm:$0x1f]
  %vm7 = vcmask 261120
  %s8 = scalar_lea.vmem %s1, 5
  %9 = vst.msk [vmem:[%s8] sm:$0x1f] %vm7, %v6

// kernel: forward.1
$region0: #{forward.1}
  #allocation0 [shape = 'u32[]', space=smem, size = 0x4, offset = 0x4, fixed_abs, tag = 'smem constant byte address 0x4 - core index']
  #allocation1 [shape = 'u32[72,128]{1,0:T(1,128)}', space=vmem, size = 0x9000, scoped, tag = 'internal scratch']
  %s0 = inlined_call_operand.vmem [shape: bf16[10,768], index: 0, kind: input, shape index: {}]
  %s1 = inlined_call_operand.vmem [shape: f32[45,128], index: 1, kind: input, shape index: {}]
  %s2 = inlined_call_operand.vmem [shape: bf16[768,32], index: 2, kind: input, shape index: {}]
  %s3 = inlined_call_operand.vmem [shape: bf16[2,32,96], index: 3, kind: input, shape index: {}]
  %s4 = inlined_call_operand.vmem [shape: bf16[2,32,32], index: 4, kind: input, shape index: {}]
  %s5 = inlined_call_operand.vmem [shape: bf16[2,32,64], index: 5, kind: input, shape index: {}]
  %s6 = inlined_call_operand.vmem [shape: bf16[2,64,32], index: 6, kind: input, shape index: {}]
  %s7 = inlined_call_operand.vmem [shape: bf16[32,64], index: 7, kind: input, shape index: {}]
  %s8 = inlined_call_operand.vmem [shape: bf16[64,32], index: 8, kind: input, shape index: {}]
  %s9 = inlined_call_operand.vmem [shape: bf16[32,8], index: 9, kind: input, shape index: {}]
  %s10 = inlined_call_operand.vmem [shape: f32[4,1024], index: 10, kind: input, shape index: {}]
  %s11 = inlined_call_operand.vmem [shape: f32[16,1024], index: 11, kind: output, shape index: {}]
  %s12 = sld [smem:[#allocation0]]
  $region54: #{forward.1} parent=0
    _
  %s14 = ssub.s32 1, %s12
  %s15 = scalar_select 0, %s14, %s12
  // Predicated region
  $region2: #{forward.1} parent=0 // pred_check
    _
  $region3: #{forward.1} parent=0 // pred_check_branch
    %17 = sbr.rel (0) target = $region5
  $region4: #{forward.1} parent=0 // pred_region
    _
  $region5: #{forward.1} parent=0 // pred_fallthru
    _
  // Predicated region
  $region6: #{forward.1} parent=0 // pred_check
    _
  $region7: #{forward.1} parent=0 // pred_check_branch
    %19 = sbr.rel (0) target = $region9
  $region8: #{forward.1} parent=0 // pred_region
    _
  $region9: #{forward.1} parent=0 // pred_fallthru
    _
  // Predicated region
  $region10: #{forward.1} parent=0 // pred_check
    _
  $region11: #{forward.1} parent=0 // pred_check_branch
    %21 = sbr.rel (0) target = $region13
  $region12: #{forward.1} parent=0 // pred_region
    _
  $region13: #{forward.1} parent=0 // pred_fallthru
    _
  // Predicated region
  $region14: #{forward.1} parent=0 // pred_check
    _
  $region15: #{forward.1} parent=0 // pred_check_branch
    %23 = sbr.rel (0) target = $region17
  $region16: #{forward.1} parent=0 // pred_region
    _
  $region17: #{forward.1} parent=0 // pred_fallthru
    _
  // Predicated region
  $region18: #{forward.1} parent=0 // pred_check
    _
  $region19: #{forward.1} parent=0 // pred_check_branch
    %25 = sbr.rel (0) target = $region21
  $region20: #{forward.1} parent=0 // pred_region
    _
  $region21: #{forward.1} parent=0 // pred_fallthru
    _
  // Predicated region
  $region22: #{forward.1} parent=0 // pred_check
    _
  $region23: #{forward.1} parent=0 // pred_check_branch
    %27 = sbr.rel (0) target = $region25
  $region24: #{forward.1} parent=0 // pred_region
    _
  $region25: #{forward.1} parent=0 // pred_fallthru
    _
  // Predicated region
  $region26: #{forward.1} parent=0 // pred_check
    _
  $region27: #{forward.1} parent=0 // pred_check_branch
    %29 = sbr.rel (0) target = $region29
  $region28: #{forward.1} parent=0 // pred_region
    _
  $region29: #{forward.1} parent=0 // pred_fallthru
    _
  // Predicated region
  $region30: #{forward.1} parent=0 // pred_check
    _
  $region31: #{forward.1} parent=0 // pred_check_branch
    %31 = sbr.rel (0) target = $region33
  $region32: #{forward.1} parent=0 // pred_region
    _
  $region33: #{forward.1} parent=0 // pred_fallthru
    _
  // Predicated region
  $region34: #{forward.1} parent=0 // pred_check
    _
  $region35: #{forward.1} parent=0 // pred_check_branch
    %33 = sbr.rel (0) target = $region37
  $region36: #{forward.1} parent=0 // pred_region
    _
  $region37: #{forward.1} parent=0 // pred_fallthru
    _
  // Predicated region
  $region38: #{forward.1} parent=0 // pred_check
    _
  $region39: #{forward.1} parent=0 // pred_check_branch
    %35 = sbr.rel (0) target = $region41
  $region40: #{forward.1} parent=0 // pred_region
    _
  $region41: #{forward.1} parent=0 // pred_fallthru
    _
  // Predicated region
  $region42: #{forward.1} parent=0 // pred_check
    _
  $region43: #{forward.1} parent=0 // pred_check_branch
    %37 = sbr.rel (0) target = $region45
  $region44: #{forward.1} parent=0 // pred_region
    _
  $region45: #{forward.1} parent=0 // pred_fallthru
    _
  %v39 = vld [vmem:[%s1] sm:$0xff]
  %v40 = vld [vmem:[%s1 + $0x8] sm:$0xff]
  %v41 = vld [vmem:[%s1 + $0x10] sm:$0xff]
  %v42 = vld [vmem:[%s1 + $0x18] sm:$0xff]
  %v43 = vld [vmem:[%s1 + $0x20] sm:$0xff]
  %v44 = vld [vmem:[%s1 + $0x28] sm:$0x1f]
  %v45 = vld [vmem:[%s0] sm:$0xff]
  %v46 = vld [vmem:[%s0 + $0x8] sm:$0xff]
  %v47 = vld [vmem:[%s0 + $0x10] sm:$0xff]
  %v48 = vld [vmem:[%s0 + $0x18] sm:$0x11]
  %v49 = vld [vmem:[%s0 + $0x20] sm:$0x11]
  %v50 = vld [vmem:[%s0 + $0x28] sm:$0x11]
  %v51 = vld [vmem:[%s2] sm:$0xf]
  %v52 = vld [vmem:[%s2 + $0x4] sm:$0xf]
  %v53 = vld [vmem:[%s2 + $0x8] sm:$0xf]
  %v54 = vld [vmem:[%s2 + $0xc] sm:$0xf]
  %v55 = vld [vmem:[%s2 + $0x10] sm:$0xf]
  %v56 = vld [vmem:[%s2 + $0x14] sm:$0xf]
  %v57 = vld [vmem:[%s2 + $0x18] sm:$0xf]
  %v58 = vld [vmem:[%s2 + $0x1c] sm:$0xf]
  %v59 = vld [vmem:[%s2 + $0x20] sm:$0xf]
  %v60 = vld [vmem:[%s2 + $0x24] sm:$0xf]
  %v61 = vld [vmem:[%s2 + $0x28] sm:$0xf]
  %v62 = vld [vmem:[%s2 + $0x2c] sm:$0xf]
  %v63 = vld [vmem:[%s2 + $0x30] sm:$0xf]
  %v64 = vld [vmem:[%s2 + $0x34] sm:$0xf]
  %v65 = vld [vmem:[%s2 + $0x38] sm:$0xf]
  %v66 = vld [vmem:[%s2 + $0x3c] sm:$0xf]
  %v67 = vld [vmem:[%s2 + $0x40] sm:$0xf]
  %v68 = vld [vmem:[%s2 + $0x44] sm:$0xf]
  %v69 = vld [vmem:[%s2 + $0x48] sm:$0xf]
  %v70 = vld [vmem:[%s2 + $0x4c] sm:$0xf]
  %v71 = vld [vmem:[%s2 + $0x50] sm:$0xf]
  %v72 = vld [vmem:[%s2 + $0x54] sm:$0xf]
  %v73 = vld [vmem:[%s2 + $0x58] sm:$0xf]
  %v74 = vld [vmem:[%s2 + $0x5c] sm:$0xf]
  %v75 = vld [vmem:[%s2 + $0x60] sm:$0xf]
  %v76 = vld [vmem:[%s2 + $0x64] sm:$0xf]
  %v77 = vld [vmem:[%s2 + $0x68] sm:$0xf]
  %v78 = vld [vmem:[%s2 + $0x6c] sm:$0xf]
  %v79 = vld [vmem:[%s2 + $0x70] sm:$0xf]
  %v80 = vld [vmem:[%s2 + $0x74] sm:$0xf]
  %v81 = vld [vmem:[%s2 + $0x78] sm:$0xf]
  %v82 = vld [vmem:[%s2 + $0x7c] sm:$0xf]
  %v83 = vld [vmem:[%s2 + $0x80] sm:$0xf]
  %v84 = vld [vmem:[%s2 + $0x84] sm:$0xf]
  %v85 = vld [vmem:[%s2 + $0x88] sm:$0xf]
  %v86 = vld [vmem:[%s2 + $0x8c] sm:$0xf]
  %v87 = vld [vmem:[%s2 + $0x90] sm:$0xf]
  %v88 = vld [vmem:[%s2 + $0x94] sm:$0xf]
  %v89 = vld [vmem:[%s2 + $0x98] sm:$0xf]
  %v90 = vld [vmem:[%s2 + $0x9c] sm:$0xf]
  %v91 = vld [vmem:[%s2 + $0xa0] sm:$0xf]
  %v92 = vld [vmem:[%s2 + $0xa4] sm:$0xf]
  %v93 = vld [vmem:[%s2 + $0xa8] sm:$0xf]
  %v94 = vld [vmem:[%s2 + $0xac] sm:$0xf]
  %v95 = vld [vmem:[%s2 + $0xb0] sm:$0xf]
  %v96 = vld [vmem:[%s2 + $0xb4] sm:$0xf]
  %v97 = vld [vmem:[%s2 + $0xb8] sm:$0xf]
  %v98 = vld [vmem:[%s2 + $0xbc] sm:$0xf]
  %v99 = vld [vmem:[%s2 + $0xc0] sm:$0xf]
  %v100 = vld [vmem:[%s2 + $0xc4] sm:$0xf]
  %v101 = vld [vmem:[%s2 + $0xc8] sm:$0xf]
  %v102 = vld [vmem:[%s2 + $0xcc] sm:$0xf]
  %v103 = vld [vmem:[%s2 + $0xd0] sm:$0xf]
  %v104 = vld [vmem:[%s2 + $0xd4] sm:$0xf]
  %v105 = vld [vmem:[%s2 + $0xd8] sm:$0xf]
  %v106 = vld [vmem:[%s2 + $0xdc] sm:$0xf]
  %v107 = vld [vmem:[%s2 + $0xe0] sm:$0xf]
  %v108 = vld [vmem:[%s2 + $0xe4] sm:$0xf]
  %v109 = vld [vmem:[%s2 + $0xe8] sm:$0xf]
  %v110 = vld [vmem:[%s2 + $0xec] sm:$0xf]
  %v111 = vld [vmem:[%s2 + $0xf0] sm:$0xf]
  %v112 = vld [vmem:[%s2 + $0xf4] sm:$0xf]
  %v113 = vld [vmem:[%s2 + $0xf8] sm:$0xf]
  %v114 = vld [vmem:[%s2 + $0xfc] sm:$0xf]
  %v115 = vld [vmem:[%s2 + $0x100] sm:$0xf]
  %v116 = vld [vmem:[%s2 + $0x104] sm:$0xf]
  %v117 = vld [vmem:[%s2 + $0x108] sm:$0xf]
  %v118 = vld [vmem:[%s2 + $0x10c] sm:$0xf]
  %v119 = vld [vmem:[%s2 + $0x110] sm:$0xf]
  %v120 = vld [vmem:[%s2 + $0x114] sm:$0xf]
  %v121 = vld [vmem:[%s2 + $0x118] sm:$0xf]
  %v122 = vld [vmem:[%s2 + $0x11c] sm:$0xf]
  %v123 = vld [vmem:[%s2 + $0x120] sm:$0xf]
  %v124 = vld [vmem:[%s2 + $0x124] sm:$0xf]
  %v125 = vld [vmem:[%s2 + $0x128] sm:$0xf]
  %v126 = vld [vmem:[%s2 + $0x12c] sm:$0xf]
  %v127 = vld [vmem:[%s2 + $0x130] sm:$0xf]
  %v128 = vld [vmem:[%s2 + $0x134] sm:$0xf]
  %v129 = vld [vmem:[%s2 + $0x138] sm:$0xf]
  %v130 = vld [vmem:[%s2 + $0x13c] sm:$0xf]
  %v131 = vld [vmem:[%s2 + $0x140] sm:$0xf]
  %v132 = vld [vmem:[%s2 + $0x144] sm:$0xf]
  %v133 = vld [vmem:[%s2 + $0x148] sm:$0xf]
  %v134 = vld [vmem:[%s2 + $0x14c] sm:$0xf]
  %v135 = vld [vmem:[%s2 + $0x150] sm:$0xf]
  %v136 = vld [vmem:[%s2 + $0x154] sm:$0xf]
  %v137 = vld [vmem:[%s2 + $0x158] sm:$0xf]
  %v138 = vld [vmem:[%s2 + $0x15c] sm:$0xf]
  %v139 = vld [vmem:[%s2 + $0x160] sm:$0xf]
  %v140 = vld [vmem:[%s2 + $0x164] sm:$0xf]
  %v141 = vld [vmem:[%s2 + $0x168] sm:$0xf]
  %v142 = vld [vmem:[%s2 + $0x16c] sm:$0xf]
  %v143 = vld [vmem:[%s2 + $0x170] sm:$0xf]
  %v144 = vld [vmem:[%s2 + $0x174] sm:$0xf]
  %v145 = vld [vmem:[%s2 + $0x178] sm:$0xf]
  %v146 = vld [vmem:[%s2 + $0x17c] sm:$0xf]
  %v153 = vunpack.c.l.b16 %v45
  %v154 = vunpack.c.h.b16 %v45
  %v155 = vunpack.c.l.b16 %v46
  %v156 = vunpack.c.h.b16 %v46
  %v157 = vunpack.c.l.b16 %v47
  %v158 = vunpack.c.h.b16 %v47
  %v159 = vunpack.c.l.b16 %v48
  %v160 = vunpack.c.h.b16 %v48
  %v161 = vunpack.c.l.b16 %v49
  %v162 = vunpack.c.h.b16 %v49
  %v163 = vunpack.c.l.b16 %v50
  %v164 = vunpack.c.h.b16 %v50
  %v165 = vpack.c.b16 %v159, %v153
  %v166 = vpack.c.b16 %v160, %v154
  %v167 = vpack.c.b16 %v161, %v155
  %v168 = vpack.c.b16 %v162, %v156
  %v169 = vpack.c.b16 %v163, %v157
  %v170 = vpack.c.b16 %v164, %v158
  %v273 = vunpack.c.l.b16 %v51
  %v274 = vunpack.c.l.b16 %v52
  %v275 = vunpack.c.l.b16 %v53
  %v276 = vunpack.c.l.b16 %v54
  %v277 = vunpack.c.l.b16 %v55
  %v278 = vunpack.c.l.b16 %v56
  %v279 = vunpack.c.l.b16 %v57
  %v280 = vunpack.c.l.b16 %v58
  %v281 = vunpack.c.l.b16 %v59
  %v282 = vunpack.c.l.b16 %v60
  %v283 = vunpack.c.l.b16 %v61
  %v284 = vunpack.c.l.b16 %v62
  %v285 = vunpack.c.l.b16 %v63
  %v286 = vunpack.c.l.b16 %v64
  %v287 = vunpack.c.l.b16 %v65
  %v288 = vunpack.c.l.b16 %v66
  %v289 = vunpack.c.l.b16 %v67
  %v290 = vunpack.c.l.b16 %v68
  %v291 = vunpack.c.l.b16 %v69
  %v292 = vunpack.c.l.b16 %v70
  %v293 = vunpack.c.l.b16 %v71
  %v294 = vunpack.c.l.b16 %v72
  %v295 = vunpack.c.l.b16 %v73
  %v296 = vunpack.c.l.b16 %v74
  %v297 = vunpack.c.l.b16 %v75
  %v298 = vunpack.c.l.b16 %v76
  %v299 = vunpack.c.l.b16 %v77
  %v300 = vunpack.c.l.b16 %v78
  %v301 = vunpack.c.l.b16 %v79
  %v302 = vunpack.c.l.b16 %v80
  %v303 = vunpack.c.l.b16 %v81
  %v304 = vunpack.c.l.b16 %v82
  %v305 = vunpack.c.l.b16 %v83
  %v306 = vunpack.c.l.b16 %v84
  %v307 = vunpack.c.l.b16 %v85
  %v308 = vunpack.c.l.b16 %v86
  %v309 = vunpack.c.l.b16 %v87
  %v310 = vunpack.c.l.b16 %v88
  %v311 = vunpack.c.l.b16 %v89
  %v312 = vunpack.c.l.b16 %v90
  %v313 = vunpack.c.l.b16 %v91
  %v314 = vunpack.c.l.b16 %v92
  %v315 = vunpack.c.l.b16 %v93
  %v316 = vunpack.c.l.b16 %v94
  %v317 = vunpack.c.l.b16 %v95
  %v318 = vunpack.c.l.b16 %v96
  %v319 = vunpack.c.l.b16 %v97
  %v320 = vunpack.c.l.b16 %v98
  %v321 = vunpack.c.l.b16 %v99
  %v322 = vunpack.c.l.b16 %v100
  %v323 = vunpack.c.l.b16 %v101
  %v324 = vunpack.c.l.b16 %v102
  %v325 = vunpack.c.l.b16 %v103
  %v326 = vunpack.c.l.b16 %v104
  %v327 = vunpack.c.l.b16 %v105
  %v328 = vunpack.c.l.b16 %v106
  %v329 = vunpack.c.l.b16 %v107
  %v330 = vunpack.c.l.b16 %v108
  %v331 = vunpack.c.l.b16 %v109
  %v332 = vunpack.c.l.b16 %v110
  %v333 = vunpack.c.l.b16 %v111
  %v334 = vunpack.c.l.b16 %v112
  %v335 = vunpack.c.l.b16 %v113
  %v336 = vunpack.c.l.b16 %v114
  %v337 = vunpack.c.l.b16 %v115
  %v338 = vunpack.c.l.b16 %v116
  %v339 = vunpack.c.l.b16 %v117
  %v340 = vunpack.c.l.b16 %v118
  %v341 = vunpack.c.l.b16 %v119
  %v342 = vunpack.c.l.b16 %v120
  %v343 = vunpack.c.l.b16 %v121
  %v344 = vunpack.c.l.b16 %v122
  %v345 = vunpack.c.l.b16 %v123
  %v346 = vunpack.c.l.b16 %v124
  %v347 = vunpack.c.l.b16 %v125
  %v348 = vunpack.c.l.b16 %v126
  %v349 = vunpack.c.l.b16 %v127
  %v350 = vunpack.c.l.b16 %v128
  %v351 = vunpack.c.l.b16 %v129
  %v352 = vunpack.c.l.b16 %v130
  %v353 = vunpack.c.l.b16 %v131
  %v354 = vunpack.c.l.b16 %v132
  %v355 = vunpack.c.l.b16 %v133
  %v356 = vunpack.c.l.b16 %v134
  %v357 = vunpack.c.l.b16 %v135
  %v358 = vunpack.c.l.b16 %v136
  %v359 = vunpack.c.l.b16 %v137
  %v360 = vunpack.c.l.b16 %v138
  %v361 = vunpack.c.l.b16 %v139
  %v362 = vunpack.c.l.b16 %v140
  %v363 = vunpack.c.l.b16 %v141
  %v364 = vunpack.c.l.b16 %v142
  %v365 = vunpack.c.l.b16 %v143
  %v366 = vunpack.c.l.b16 %v144
  %v367 = vunpack.c.l.b16 %v145
  %v368 = vunpack.c.l.b16 %v146
  %v369 = vpack.c.b16 %v274, %v273
  %v370 = vpack.c.b16 %v276, %v275
  %v371 = vpack.c.b16 %v278, %v277
  %v372 = vpack.c.b16 %v280, %v279
  %v373 = vpack.c.b16 %v282, %v281
  %v374 = vpack.c.b16 %v284, %v283
  %v375 = vpack.c.b16 %v286, %v285
  %v376 = vpack.c.b16 %v288, %v287
  %v377 = vpack.c.b16 %v290, %v289
  %v378 = vpack.c.b16 %v292, %v291
  %v379 = vpack.c.b16 %v294, %v293
  %v380 = vpack.c.b16 %v296, %v295
  %v381 = vpack.c.b16 %v298, %v297
  %v382 = vpack.c.b16 %v300, %v299
  %v383 = vpack.c.b16 %v302, %v301
  %v384 = vpack.c.b16 %v304, %v303
  %v385 = vpack.c.b16 %v306, %v305
  %v386 = vpack.c.b16 %v308, %v307
  %v387 = vpack.c.b16 %v310, %v309
  %v388 = vpack.c.b16 %v312, %v311
  %v389 = vpack.c.b16 %v314, %v313
  %v390 = vpack.c.b16 %v316, %v315
  %v391 = vpack.c.b16 %v318, %v317
  %v392 = vpack.c.b16 %v320, %v319
  %v393 = vpack.c.b16 %v322, %v321
  %v394 = vpack.c.b16 %v324, %v323
  %v395 = vpack.c.b16 %v326, %v325
  %v396 = vpack.c.b16 %v328, %v327
  %v397 = vpack.c.b16 %v330, %v329
  %v398 = vpack.c.b16 %v332, %v331
  %v399 = vpack.c.b16 %v334, %v333
  %v400 = vpack.c.b16 %v336, %v335
  %v401 = vpack.c.b16 %v338, %v337
  %v402 = vpack.c.b16 %v340, %v339
  %v403 = vpack.c.b16 %v342, %v341
  %v404 = vpack.c.b16 %v344, %v343
  %v405 = vpack.c.b16 %v346, %v345
  %v406 = vpack.c.b16 %v348, %v347
  %v407 = vpack.c.b16 %v350, %v349
  %v408 = vpack.c.b16 %v352, %v351
  %v409 = vpack.c.b16 %v354, %v353
  %v410 = vpack.c.b16 %v356, %v355
  %v411 = vpack.c.b16 %v358, %v357
  %v412 = vpack.c.b16 %v360, %v359
  %v413 = vpack.c.b16 %v362, %v361
  %v414 = vpack.c.b16 %v364, %v363
  %v415 = vpack.c.b16 %v366, %v365
  %v416 = vpack.c.b16 %v368, %v367
  %465 = vmatpush.bf16.msra.mxu0 %v376
  %466 = vmatpush.bf16.msra.mxu0 %v375
  %467 = vmatpush.bf16.msra.mxu0 %v374
  %468 = vmatpush.bf16.msra.mxu0 %v373
  %469 = vmatpush.bf16.msra.mxu0 %v372
  %470 = vmatpush.bf16.msra.mxu0 %v371
  %471 = vmatpush.bf16.msra.mxu0 %v370
  %472 = vmatpush.bf16.msra.mxu0 %v369
  %473 = vmatmul.bf16.gmra.mxu0 %v165
  %v474 = vpop.f32.mrf.mxu0
  %v475 = vadd.f32 %v39, %v474
  %v476 = vpop.f32.mrf.mxu0
  %v477 = vadd.f32 %v40, %v476
  %478 = vdwg.mxu0
  %479 = vmatpush.bf16.msra.mxu0 %v384
  %480 = vmatpush.bf16.msra.mxu0 %v383
  %481 = vmatpush.bf16.msra.mxu0 %v382
  %482 = vmatpush.bf16.msra.mxu0 %v381
  %483 = vmatpush.bf16.msra.mxu0 %v380
  %484 = vmatpush.bf16.msra.mxu0 %v379
  %485 = vmatpush.bf16.msra.mxu0 %v378
  %486 = vmatpush.bf16.msra.mxu0 %v377
  %487 = vmatmul.bf16.gmra.mxu0 %v166
  %v488 = vpop.f32.mrf.mxu0
  %v489 = vadd.f32 %v475, %v488
  %v490 = vpop.f32.mrf.mxu0
  %v491 = vadd.f32 %v477, %v490
  %492 = vdwg.mxu0
  %493 = vmatpush.bf16.msra.mxu0 %v392
  %494 = vmatpush.bf16.msra.mxu0 %v391
  %495 = vmatpush.bf16.msra.mxu0 %v390
  %496 = vmatpush.bf16.msra.mxu0 %v389
  %497 = vmatpush.bf16.msra.mxu0 %v388
  %498 = vmatpush.bf16.msra.mxu0 %v387
  %499 = vmatpush.bf16.msra.mxu0 %v386
  %500 = vmatpush.bf16.msra.mxu0 %v385
  %501 = vmatmul.bf16.gmra.mxu0 %v167
  %v502 = vpop.f32.mrf.mxu0
  %v503 = vadd.f32 %v489, %v502
  %v504 = vpop.f32.mrf.mxu0
  %v505 = vadd.f32 %v491, %v504
  %506 = vdwg.mxu0
  %507 = vmatpush.bf16.msra.mxu0 %v400
  %508 = vmatpush.bf16.msra.mxu0 %v399
  %509 = vmatpush.bf16.msra.mxu0 %v398
  %510 = vmatpush.bf16.msra.mxu0 %v397
  %511 = vmatpush.bf16.msra.mxu0 %v396
  %512 = vmatpush.bf16.msra.mxu0 %v395
  %513 = vmatpush.bf16.msra.mxu0 %v394
  %514 = vmatpush.bf16.msra.mxu0 %v393
  %515 = vmatmul.bf16.gmra.mxu0 %v168
  %v516 = vpop.f32.mrf.mxu0
  %v517 = vadd.f32 %v503, %v516
  %v518 = vpop.f32.mrf.mxu0
  %v519 = vadd.f32 %v505, %v518
  %520 = vdwg.mxu0
  %521 = vmatpush.bf16.msra.mxu0 %v408
  %522 = vmatpush.bf16.msra.mxu0 %v407
  %523 = vmatpush.bf16.msra.mxu0 %v406
  %524 = vmatpush.bf16.msra.mxu0 %v405
  %525 = vmatpush.bf16.msra.mxu0 %v404
  %526 = vmatpush.bf16.msra.mxu0 %v403
  %527 = vmatpush.bf16.msra.mxu0 %v402
  %528 = vmatpush.bf16.msra.mxu0 %v401
  %529 = vmatmul.bf16.gmra.mxu0 %v169
  %v530 = vpop.f32.mrf.mxu0
  %v531 = vadd.f32 %v517, %v530
  %v532 = vpop.f32.mrf.mxu0
  %v533 = vadd.f32 %v519, %v532
  %534 = vdwg.mxu0
  %535 = vmatpush.bf16.msra.mxu0 %v416
  %536 = vmatpush.bf16.msra.mxu0 %v415
  %537 = vmatpush.bf16.msra.mxu0 %v414
  %538 = vmatpush.bf16.msra.mxu0 %v413
  %539 = vmatpush.bf16.msra.mxu0 %v412
  %540 = vmatpush.bf16.msra.mxu0 %v411
  %541 = vmatpush.bf16.msra.mxu0 %v410
  %542 = vmatpush.bf16.msra.mxu0 %v409
  %543 = vmatmul.bf16.gmra.mxu0 %v170
  %v544 = vpop.f32.mrf.mxu0
  %v545 = vadd.f32 %v531, %v544
  %v546 = vpop.f32.mrf.mxu0
  %v547 = vadd.f32 %v533, %v546
  %548 = vdwg.mxu0
  %vm549 = vcmask 261120
  %v550 = vsel %vm549, %v545, 0.0
  %551 = vadd.xlane.f32.xlu0 %v550
  %v552 = vpop.xlane.xlu0 %551
  %vm553 = vcmask 254976
  %v554 = vsel %vm553, %v547, 0.0
  %555 = vadd.xlane.f32.xlu0 %v554
  %v556 = vpop.xlane.xlu0 %555
  %v557 = vrcp.pop 32.0
  %v558 = vmul.f32 32.0, %v557
  %v559 = vsub.f32 1.0, %v558
  %v560 = vmul.f32 %v557, %v559
  %v561 = vadd.f32 %v557, %v560
  %vm562 = vweird.f32 %v557
  %v563 = vsel %vm562, %v557, %v561
  %v564 = vmul.f32 %v552, %v563
  %v565 = vmul.f32 %v556, %v563
  %v566 = vsub.f32 %v545, %v564
  %v567 = vsub.f32 %v547, %v565
  %v568 = vmul.f32 %v566, %v566
  %v569 = vmul.f32 %v567, %v567
  %v570 = vsel %vm549, %v568, 0.0
  %571 = vadd.xlane.f32.xlu0 %v570
  %v572 = vpop.xlane.xlu0 %571
  %v573 = vsel %vm553, %v569, 0.0
  %574 = vadd.xlane.f32.xlu0 %v573
  %v575 = vpop.xlane.xlu0 %574
  %v576 = vmul.f32 %v572, %v563
  %v577 = vmul.f32 %v575, %v563
  %v578 = vadd.f32 %v576, 1e-06
  %v579 = vadd.f32 %v577, 1e-06
  %v580 = vrsqrt.pop %v578
  %v581 = vmul.f32 %v580, %v578
  %v582 = vmul.f32 %v581, %v580
  %v583 = vmul.f32 0.5, %v582
  %v584 = vsub.f32 1.5, %v583
  %v585 = vmul.f32 %v580, %v584
  %vm586 = vweird.f32 %v578
  %vm587 = vweird.f32 %v580
  %vm588 = vmor %vm586, %vm587
  %v589 = vsel %vm588, %v580, %v585
  %v590 = vrsqrt.pop %v579
  %v591 = vmul.f32 %v590, %v579
  %v592 = vmul.f32 %v591, %v590
  %v593 = vmul.f32 0.5, %v592
  %v594 = vsub.f32 1.5, %v593
  %v595 = vmul.f32 %v590, %v594
  %vm596 = vweird.f32 %v579
  %vm597 = vweird.f32 %v590
  %vm598 = vmor %vm596, %vm597
  %v599 = vsel %vm598, %v590, %v595
  %v600 = vmul.f32 %v566, %v589
  %v601 = vmul.f32 %v567, %v599
  %v602 = vperm.slane %v41, 4
  %v603 = vmul.f32 %v600, %v602
  %v604 = vmul.f32 %v601, %v602
  %v605 = vperm.slane %v41, 5
  %v606 = vadd.f32 %v603, %v605
  %v607 = vadd.f32 %v604, %v605
  %v608 = vpack.c.bf16 %v607, %v606
  %v609 = vld [vmem:[%s3] sm:$0xf]
  %v610 = vld [vmem:[%s3 + $0x4] sm:$0xf]
  %v611 = vld [vmem:[%s3 + $0x8] sm:$0xf]
  %v612 = vld [vmem:[%s3 + $0xc] sm:$0xf]
  %v613 = vperm.slane %v41, 6
  %v618 = vunpack.c.l.b16 %v609
  %v619 = vunpack.c.l.b16 %v610
  %v620 = vunpack.c.l.b16 %v611
  %v621 = vunpack.c.l.b16 %v612
  %v622 = vpack.c.b16 %v619, %v618
  %v623 = vpack.c.b16 %v621, %v620
  %v627 = vsel %vm549, %v608, 0
  %629 = vmatpush.bf16.msra.mxu0 0
  %630 = vmatpush.bf16.msra.mxu0 0
  %631 = vmatpush.bf16.msra.mxu0 0
  %632 = vmatpush.bf16.msra.mxu0 0
  %633 = vmatpush.bf16.msra.mxu0 0
  %634 = vmatpush.bf16.msra.mxu0 0
  %635 = vmatpush.bf16.msra.mxu0 %v623
  %636 = vmatpush.bf16.msra.mxu0 %v622
  %637 = vmatmul.bf16.gmra.mxu0 %v627
  %v638 = vpop.f32.mrf.mxu0
  %v639 = vadd.f32 %v613, %v638
  %v640 = vpop.f32.mrf.mxu0
  %v641 = vadd.f32 %v613, %v640
  %642 = vdwg.mxu0
  %v643 = vpack.c.bf16 %v641, %v639
  %645 = vrot.lane.b32.xlu0 %v643, 96
  %v646 = vpop.permute.xlu0 %645
  %vm647 = vcmask 64512
  %v649 = vsel %vm647, %v643, 0
  %v652 = vsel %vm647, %v646, 0
  %654 = vmatpush.bf16.xpose.msra.mxu0 0
  %655 = vmatpush.bf16.xpose.msra.mxu0 0
  %656 = vmatpush.bf16.xpose.msra.mxu0 0
  %657 = vmatpush.bf16.xpose.msra.mxu0 0
  %658 = vmatpush.bf16.xpose.msra.mxu0 0
  %659 = vmatpush.bf16.xpose.msra.mxu0 0
  %660 = vmatpush.bf16.xpose.msra.mxu0 0
  %661 = vmatpush.bf16.xpose.msra.mxu0 %v652
  %662 = vmatmul.bf16.gmra.mxu0 %v649
  %v663 = vpop.f32.mrf.mxu0
  %v664 = vadd.f32 0.0, %v663
  %v665 = vpop.f32.mrf.mxu0
  %v666 = vadd.f32 0.0, %v665
  %667 = vdwg.mxu0
  %v668 = vmul.f32 %v664, 0.35355338
  %v669 = vmul.f32 %v666, 0.35355338
  %vm672 = vcmask 1045504
  %v673 = vrot.slane %v40, 2
  %v674 = vrot.slane %v41, 2
  %v675 = vsel %vm672, %v673, %v674
  %v678 = vadd.f32 %v668, %v675
  %v679 = vadd.f32 %v669, %v674
  %vm680 = vcmask 80896
  %v681 = vsel %vm680, %v678, -inf
  %682 = vmax.xlane.f32.xlu0 %v681
  %v683 = vpop.xlane.xlu0 %682
  %vm684 = vcmask 74752
  %v685 = vsel %vm684, %v679, -inf
  %686 = vmax.xlane.f32.xlu0 %v685
  %v687 = vpop.xlane.xlu0 %686
  %v688 = vsub.f32 %v678, %v683
  %v689 = vsub.f32 %v679, %v687
  %v690 = vmul.f32 %v688, 1.442695
  %v691 = vpow.pop %v690
  %v692 = vmul.f32 %v689, 1.442695
  %v693 = vpow.pop %v692
  %v694 = vsel %vm680, %v691, 0.0
  %695 = vadd.xlane.f32.xlu0 %v694
  %v696 = vpop.xlane.xlu0 %695
  %v697 = vsel %vm684, %v693, 0.0
  %698 = vadd.xlane.f32.xlu0 %v697
  %v699 = vpop.xlane.xlu0 %698
  %v700 = vrcp.pop %v696
  %v701 = vrcp.pop %v699
  %v702 = vmul.f32 %v691, %v700
  %v703 = vmul.f32 %v693, %v701
  %v704 = vpack.c.bf16 %v703, %v702
  %705 = vrot.lane.b32.xlu0 %v643, 64
  %v706 = vpop.permute.xlu0 %705
  %v708 = vsel %vm680, %v704, 0
  %vm710 = vcmask 1044480
  %v712 = vsel %vm710, %v706, 0
  %714 = vmatpush.bf16.msra.mxu0 0
  %715 = vmatpush.bf16.msra.mxu0 0
  %716 = vmatpush.bf16.msra.mxu0 0
  %717 = vmatpush.bf16.msra.mxu0 0
  %718 = vmatpush.bf16.msra.mxu0 0
  %719 = vmatpush.bf16.msra.mxu0 0
  %720 = vmatpush.bf16.msra.mxu0 0
  %721 = vmatpush.bf16.msra.mxu0 %v712
  %722 = vmatmul.bf16.gmra.mxu0 %v708
  %v723 = vpop.f32.mrf.mxu0
  %v724 = vadd.f32 0.0, %v723
  %v725 = vpop.f32.mrf.mxu0
  %v726 = vadd.f32 0.0, %v725
  %727 = vdwg.mxu0
  %728 = vrot.lane.b32.xlu0 %v643, 120
  %v729 = vpop.permute.xlu0 %728
  %730 = vrot.lane.b32.xlu0 %v643, 88
  %v731 = vpop.permute.xlu0 %730
  %v733 = vsel %vm647, %v729, 0
  %v736 = vsel %vm647, %v731, 0
  %738 = vmatpush.bf16.xpose.msra.mxu0 0
  %739 = vmatpush.bf16.xpose.msra.mxu0 0
  %740 = vmatpush.bf16.xpose.msra.mxu0 0
  %741 = vmatpush.bf16.xpose.msra.mxu0 0
  %742 = vmatpush.bf16.xpose.msra.mxu0 0
  %743 = vmatpush.bf16.xpose.msra.mxu0 0
  %744 = vmatpush.bf16.xpose.msra.mxu0 0
  %745 = vmatpush.bf16.xpose.msra.mxu0 %v736
  %746 = vmatmul.bf16.gmra.mxu0 %v733
  %v747 = vpop.f32.mrf.mxu0
  %v748 = vadd.f32 0.0, %v747
  %v749 = vpop.f32.mrf.mxu0
  %v750 = vadd.f32 0.0, %v749
  %751 = vdwg.mxu0
  %v752 = vmul.f32 %v748, 0.35355338
  %v753 = vmul.f32 %v750, 0.35355338
  %v754 = vadd.f32 %v752, %v675
  %v755 = vadd.f32 %v753, %v674
  %v756 = vsel %vm680, %v754, -inf
  %757 = vmax.xlane.f32.xlu0 %v756
  %v758 = vpop.xlane.xlu0 %757
  %v759 = vsel %vm684, %v755, -inf
  %760 = vmax.xlane.f32.xlu0 %v759
  %v761 = vpop.xlane.xlu0 %760
  %v762 = vsub.f32 %v754, %v758
  %v763 = vsub.f32 %v755, %v761
  %v764 = vmul.f32 %v762, 1.442695
  %v765 = vpow.pop %v764
  %v766 = vmul.f32 %v763, 1.442695
  %v767 = vpow.pop %v766
  %v768 = vsel %vm680, %v765, 0.0
  %769 = vadd.xlane.f32.xlu0 %v768
  %v770 = vpop.xlane.xlu0 %769
  %v771 = vsel %vm684, %v767, 0.0
  %772 = vadd.xlane.f32.xlu0 %v771
  %v773 = vpop.xlane.xlu0 %772
  %v774 = vrcp.pop %v770
  %v775 = vrcp.pop %v773
  %v776 = vmul.f32 %v765, %v774
  %v777 = vmul.f32 %v767, %v775
  %v778 = vpack.c.bf16 %v777, %v776
  %779 = vrot.lane.b32.xlu0 %v643, 56
  %v780 = vpop.permute.xlu0 %779
  %v782 = vsel %vm680, %v778, 0
  %v785 = vsel %vm710, %v780, 0
  %787 = vmatpush.bf16.msra.mxu0 0
  %788 = vmatpush.bf16.msra.mxu0 0
  %789 = vmatpush.bf16.msra.mxu0 0
  %790 = vmatpush.bf16.msra.mxu0 0
  %791 = vmatpush.bf16.msra.mxu0 0
  %792 = vmatpush.bf16.msra.mxu0 0
  %793 = vmatpush.bf16.msra.mxu0 0
  %794 = vmatpush.bf16.msra.mxu0 %v785
  %795 = vmatmul.bf16.gmra.mxu0 %v782
  %v796 = vpop.f32.mrf.mxu0
  %v797 = vadd.f32 0.0, %v796
  %v798 = vpop.f32.mrf.mxu0
  %v799 = vadd.f32 0.0, %v798
  %800 = vdwg.mxu0
  %801 = vrot.lane.b32.xlu0 %v643, 112
  %v802 = vpop.permute.xlu0 %801
  %803 = vrot.lane.b32.xlu0 %v643, 80
  %v804 = vpop.permute.xlu0 %803
  %v806 = vsel %vm647, %v802, 0
  %v809 = vsel %vm647, %v804, 0
  %811 = vmatpush.bf16.xpose.msra.mxu0 0
  %812 = vmatpush.bf16.xpose.msra.mxu0 0
  %813 = vmatpush.bf16.xpose.msra.mxu0 0
  %814 = vmatpush.bf16.xpose.msra.mxu0 0
  %815 = vmatpush.bf16.xpose.msra.mxu0 0
  %816 = vmatpush.bf16.xpose.msra.mxu0 0
  %817 = vmatpush.bf16.xpose.msra.mxu0 0
  %818 = vmatpush.bf16.xpose.msra.mxu0 %v809
  %819 = vmatmul.bf16.gmra.mxu0 %v806
  %v820 = vpop.f32.mrf.mxu0
  %v821 = vadd.f32 0.0, %v820
  %v822 = vpop.f32.mrf.mxu0
  %v823 = vadd.f32 0.0, %v822
  %824 = vdwg.mxu0
  %v825 = vmul.f32 %v821, 0.35355338
  %v826 = vmul.f32 %v823, 0.35355338
  %v827 = vadd.f32 %v825, %v675
  %v828 = vadd.f32 %v826, %v674
  %v829 = vsel %vm680, %v827, -inf
  %830 = vmax.xlane.f32.xlu0 %v829
  %v831 = vpop.xlane.xlu0 %830
  %v832 = vsel %vm684, %v828, -inf
  %833 = vmax.xlane.f32.xlu0 %v832
  %v834 = vpop.xlane.xlu0 %833
  %v835 = vsub.f32 %v827, %v831
  %v836 = vsub.f32 %v828, %v834
  %v837 = vmul.f32 %v835, 1.442695
  %v838 = vpow.pop %v837
  %v839 = vmul.f32 %v836, 1.442695
  %v840 = vpow.pop %v839
  %v841 = vsel %vm680, %v838, 0.0
  %842 = vadd.xlane.f32.xlu0 %v841
  %v843 = vpop.xlane.xlu0 %842
  %v844 = vsel %vm684, %v840, 0.0
  %845 = vadd.xlane.f32.xlu0 %v844
  %v846 = vpop.xlane.xlu0 %845
  %v847 = vrcp.pop %v843
  %v848 = vrcp.pop %v846
  %v849 = vmul.f32 %v838, %v847
  %v850 = vmul.f32 %v840, %v848
  %v851 = vpack.c.bf16 %v850, %v849
  %852 = vrot.lane.b32.xlu0 %v643, 48
  %v853 = vpop.permute.xlu0 %852
  %v855 = vsel %vm680, %v851, 0
  %v858 = vsel %vm710, %v853, 0
  %860 = vmatpush.bf16.msra.mxu0 0
  %861 = vmatpush.bf16.msra.mxu0 0
  %862 = vmatpush.bf16.msra.mxu0 0
  %863 = vmatpush.bf16.msra.mxu0 0
  %864 = vmatpush.bf16.msra.mxu0 0
  %865 = vmatpush.bf16.msra.mxu0 0
  %866 = vmatpush.bf16.msra.mxu0 0
  %867 = vmatpush.bf16.msra.mxu0 %v858
  %868 = vmatmul.bf16.gmra.mxu0 %v855
  %v869 = vpop.f32.mrf.mxu0
  %v870 = vadd.f32 0.0, %v869
  %v871 = vpop.f32.mrf.mxu0
  %v872 = vadd.f32 0.0, %v871
  %873 = vdwg.mxu0
  %874 = vrot.lane.b32.xlu0 %v643, 104
  %v875 = vpop.permute.xlu0 %874
  %876 = vrot.lane.b32.xlu0 %v643, 72
  %v877 = vpop.permute.xlu0 %876
  %v879 = vsel %vm647, %v875, 0
  %v882 = vsel %vm647, %v877, 0
  %884 = vmatpush.bf16.xpose.msra.mxu0 0
  %885 = vmatpush.bf16.xpose.msra.mxu0 0
  %886 = vmatpush.bf16.xpose.msra.mxu0 0
  %887 = vmatpush.bf16.xpose.msra.mxu0 0
  %888 = vmatpush.bf16.xpose.msra.mxu0 0
  %889 = vmatpush.bf16.xpose.msra.mxu0 0
  %890 = vmatpush.bf16.xpose.msra.mxu0 0
  %891 = vmatpush.bf16.xpose.msra.mxu0 %v882
  %892 = vmatmul.bf16.gmra.mxu0 %v879
  %v893 = vpop.f32.mrf.mxu0
  %v894 = vadd.f32 0.0, %v893
  %v895 = vpop.f32.mrf.mxu0
  %v896 = vadd.f32 0.0, %v895
  %897 = vdwg.mxu0
  %v898 = vmul.f32 %v894, 0.35355338
  %v899 = vmul.f32 %v896, 0.35355338
  %v900 = vadd.f32 %v898, %v675
  %v901 = vadd.f32 %v899, %v674
  %v902 = vsel %vm680, %v900, -inf
  %903 = vmax.xlane.f32.xlu0 %v902
  %v904 = vpop.xlane.xlu0 %903
  %v905 = vsel %vm684, %v901, -inf
  %906 = vmax.xlane.f32.xlu0 %v905
  %v907 = vpop.xlane.xlu0 %906
  %v908 = vsub.f32 %v900, %v904
  %v909 = vsub.f32 %v901, %v907
  %v910 = vmul.f32 %v908, 1.442695
  %v911 = vpow.pop %v910
  %v912 = vmul.f32 %v909, 1.442695
  %v913 = vpow.pop %v912
  %v914 = vsel %vm680, %v911, 0.0
  %915 = vadd.xlane.f32.xlu0 %v914
  %v916 = vpop.xlane.xlu0 %915
  %v917 = vsel %vm684, %v913, 0.0
  %918 = vadd.xlane.f32.xlu0 %v917
  %v919 = vpop.xlane.xlu0 %918
  %v920 = vrcp.pop %v916
  %v921 = vrcp.pop %v919
  %v922 = vmul.f32 %v911, %v920
  %v923 = vmul.f32 %v913, %v921
  %v924 = vpack.c.bf16 %v923, %v922
  %925 = vrot.lane.b32.xlu0 %v643, 40
  %v926 = vpop.permute.xlu0 %925
  %v928 = vsel %vm680, %v924, 0
  %v931 = vsel %vm710, %v926, 0
  %933 = vmatpush.bf16.msra.mxu0 0
  %934 = vmatpush.bf16.msra.mxu0 0
  %935 = vmatpush.bf16.msra.mxu0 0
  %936 = vmatpush.bf16.msra.mxu0 0
  %937 = vmatpush.bf16.msra.mxu0 0
  %938 = vmatpush.bf16.msra.mxu0 0
  %939 = vmatpush.bf16.msra.mxu0 0
  %940 = vmatpush.bf16.msra.mxu0 %v931
  %941 = vmatmul.bf16.gmra.mxu0 %v928
  %v942 = vpop.f32.mrf.mxu0
  %v943 = vadd.f32 0.0, %v942
  %v944 = vpop.f32.mrf.mxu0
  %v945 = vadd.f32 0.0, %v944
  %946 = vdwg.mxu0
  %949 = vrot.lane.b32.xlu0 %v797, 8
  %v950 = vpop.permute.xlu0 %949
  %951 = vrot.lane.b32.xlu0 %v799, 8
  %v952 = vpop.permute.xlu0 %951
  %957 = vrot.lane.b32.xlu0 %v870, 16
  %v958 = vpop.permute.xlu0 %957
  %959 = vrot.lane.b32.xlu0 %v872, 16
  %v960 = vpop.permute.xlu0 %959
  %965 = vrot.lane.b32.xlu0 %v943, 24
  %v966 = vpop.permute.xlu0 %965
  %967 = vrot.lane.b32.xlu0 %v945, 24
  %v968 = vpop.permute.xlu0 %967
  %v971 = vsel %vm647, %v724, %v950
  %v972 = vsel %vm647, %v726, %v952
  %vm973 = vcmask 130048
  %v974 = vsel %vm973, %v971, %v958
  %v975 = vsel %vm973, %v972, %v960
  %vm976 = vcmask 195584
  %v977 = vsel %vm976, %v974, %v966
  %v978 = vsel %vm976, %v975, %v968
  %v979 = vpack.c.bf16 %v978, %v977
  %v980 = vld [vmem:[%s4] sm:$0xf]
  %v981 = vld [vmem:[%s4 + $0x4] sm:$0xf]
  %v982 = vld [vmem:[%s4 + $0x8] sm:$0xf]
  %v983 = vld [vmem:[%s4 + $0xc] sm:$0xf]
  %v988 = vunpack.c.l.b16 %v980
  %v989 = vunpack.c.l.b16 %v981
  %v990 = vunpack.c.l.b16 %v982
  %v991 = vunpack.c.l.b16 %v983
  %v992 = vpack.c.b16 %v989, %v988
  %v993 = vpack.c.b16 %v991, %v990
  %v997 = vsel %vm549, %v979, 0
  %999 = vmatpush.bf16.msra.mxu0 0
  %1000 = vmatpush.bf16.msra.mxu0 0
  %1001 = vmatpush.bf16.msra.mxu0 0
  %1002 = vmatpush.bf16.msra.mxu0 0
  %1003 = vmatpush.bf16.msra.mxu0 0
  %1004 = vmatpush.bf16.msra.mxu0 0
  %1005 = vmatpush.bf16.msra.mxu0 %v993
  %1006 = vmatpush.bf16.msra.mxu0 %v992
  %1007 = vmatmul.bf16.gmra.mxu0 %v997
  %v1008 = vpop.f32.mrf.mxu0
  %v1009 = vadd.f32 0.0, %v1008
  %v1010 = vpop.f32.mrf.mxu0
  %v1011 = vadd.f32 0.0, %v1010
  %1012 = vdwg.mxu0
  %v1013 = vadd.f32 %v545, %v1009
  %v1014 = vadd.f32 %v547, %v1011
  %v1015 = vperm.slane %v41, 7
  %v1016 = vadd.f32 %v1013, %v1015
  %v1017 = vadd.f32 %v1014, %v1015
  %v1018 = vsel %vm549, %v1016, 0.0
  %1019 = vadd.xlane.f32.xlu0 %v1018
  %v1020 = vpop.xlane.xlu0 %1019
  %v1021 = vsel %vm553, %v1017, 0.0
  %1022 = vadd.xlane.f32.xlu0 %v1021
  %v1023 = vpop.xlane.xlu0 %1022
  %v1024 = vmul.f32 %v1020, %v563
  %v1025 = vmul.f32 %v1023, %v563
  %v1026 = vsub.f32 %v1016, %v1024
  %v1027 = vsub.f32 %v1017, %v1025
  %v1028 = vmul.f32 %v1026, %v1026
  %v1029 = vmul.f32 %v1027, %v1027
  %v1030 = vsel %vm549, %v1028, 0.0
  %1031 = vadd.xlane.f32.xlu0 %v1030
  %v1032 = vpop.xlane.xlu0 %1031
  %v1033 = vsel %vm553, %v1029, 0.0
  %1034 = vadd.xlane.f32.xlu0 %v1033
  %v1035 = vpop.xlane.xlu0 %1034
  %v1036 = vmul.f32 %v1032, %v563
  %v1037 = vmul.f32 %v1035, %v563
  %v1038 = vadd.f32 %v1036, 1e-06
  %v1039 = vadd.f32 %v1037, 1e-06
  %v1040 = vrsqrt.pop %v1038
  %v1041 = vmul.f32 %v1040, %v1038
  %v1042 = vmul.f32 %v1041, %v1040
  %v1043 = vmul.f32 0.5, %v1042
  %v1044 = vsub.f32 1.5, %v1043
  %v1045 = vmul.f32 %v1040, %v1044
  %vm1046 = vweird.f32 %v1038
  %vm1047 = vweird.f32 %v1040
  %vm1048 = vmor %vm1046, %vm1047
  %v1049 = vsel %vm1048, %v1040, %v1045
  %v1050 = vrsqrt.pop %v1039
  %v1051 = vmul.f32 %v1050, %v1039
  %v1052 = vmul.f32 %v1051, %v1050
  %v1053 = vmul.f32 0.5, %v1052
  %v1054 = vsub.f32 1.5, %v1053
  %v1055 = vmul.f32 %v1050, %v1054
  %vm1056 = vweird.f32 %v1039
  %vm1057 = vweird.f32 %v1050
  %vm1058 = vmor %vm1056, %vm1057
  %v1059 = vsel %vm1058, %v1050, %v1055
  %v1060 = vmul.f32 %v1026, %v1049
  %v1061 = vmul.f32 %v1027, %v1059
  %v1062 = vperm.slane %v42, 0
  %v1063 = vmul.f32 %v1060, %v1062
  %v1064 = vmul.f32 %v1061, %v1062
  %v1065 = vperm.slane %v42, 1
  %v1066 = vadd.f32 %v1063, %v1065
  %v1067 = vadd.f32 %v1064, %v1065
  %v1068 = vpack.c.bf16 %v1067, %v1066
  %v1069 = vld [vmem:[%s5] sm:$0xf]
  %v1070 = vld [vmem:[%s5 + $0x4] sm:$0xf]
  %v1071 = vld [vmem:[%s5 + $0x8] sm:$0xf]
  %v1072 = vld [vmem:[%s5 + $0xc] sm:$0xf]
  %v1073 = vperm.slane %v42, 2
  %v1078 = vunpack.c.l.b16 %v1069
  %v1079 = vunpack.c.l.b16 %v1070
  %v1080 = vunpack.c.l.b16 %v1071
  %v1081 = vunpack.c.l.b16 %v1072
  %v1082 = vpack.c.b16 %v1079, %v1078
  %v1083 = vpack.c.b16 %v1081, %v1080
  %v1087 = vsel %vm549, %v1068, 0
  %1089 = vmatpush.bf16.msra.mxu0 0
  %1090 = vmatpush.bf16.msra.mxu0 0
  %1091 = vmatpush.bf16.msra.mxu0 0
  %1092 = vmatpush.bf16.msra.mxu0 0
  %1093 = vmatpush.bf16.msra.mxu0 0
  %1094 = vmatpush.bf16.msra.mxu0 0
  %1095 = vmatpush.bf16.msra.mxu0 %v1083
  %1096 = vmatpush.bf16.msra.mxu0 %v1082
  %1097 = vmatmul.bf16.gmra.mxu0 %v1087
  %v1098 = vpop.f32.mrf.mxu0
  %v1099 = vadd.f32 %v1073, %v1098
  %v1100 = vpop.f32.mrf.mxu0
  %v1101 = vadd.f32 %v1073, %v1100
  %1102 = vdwg.mxu0
  %v1103 = vmul.f32 %v1099, 0.5
  %v1104 = vmul.f32 %v1101, 0.5
  %v1105 = vmul.f32 %v1099, 0.70710677
  %v1106 = vmul.f32 %v1101, 0.70710677
  %vm1107 = vcmp.ge.f32.partialorder %v1105, 0.0
  %vm1108 = vcmp.ge.f32.partialorder %v1106, 0.0
  %v1109 = vsel %vm1107, 1.0, -1.0
  %v1110 = vsel %vm1108, 1.0, -1.0
  %v1111 = vand.u32 2147483647, %v1105
  %v1112 = vand.u32 2147483647, %v1106
  %v1113 = vmul.f32 %v1111, 0.3275911
  %v1114 = vmul.f32 %v1112, 0.3275911
  %v1115 = vadd.f32 %v1113, 1.0
  %v1116 = vadd.f32 %v1114, 1.0
  %v1117 = vrcp.pop %v1115
  %v1118 = vmul.f32 %v1115, %v1117
  %v1119 = vsub.f32 1.0, %v1118
  %v1120 = vmul.f32 %v1117, %v1119
  %v1121 = vadd.f32 %v1117, %v1120
  %vm1122 = vweird.f32 %v1115
  %vm1123 = vweird.f32 %v1117
  %vm1124 = vmor %vm1122, %vm1123
  %v1125 = vsel %vm1124, %v1117, %v1121
  %v1126 = vand.u32 2147483647, %v1115
  %vm1127 = vcmp.eq.f32.partialorder %v1126, 8.507059e+37
  %v1128 = vand.u32 %v1115, 2147483648
  %v1129 = vor.u32 1.1754944e-38, %v1128
  %v1130 = vsel %vm1127, %v1129, %v1125
  %v1131 = vmul.f32 1.0, %v1130
  %v1132 = vrcp.pop %v1116
  %v1133 = vmul.f32 %v1116, %v1132
  %v1134 = vsub.f32 1.0, %v1133
  %v1135 = vmul.f32 %v1132, %v1134
  %v1136 = vadd.f32 %v1132, %v1135
  %vm1137 = vweird.f32 %v1116
  %vm1138 = vweird.f32 %v1132
  %vm1139 = vmor %vm1137, %vm1138
  %v1140 = vsel %vm1139, %v1132, %v1136
  %v1141 = vand.u32 2147483647, %v1116
  %vm1142 = vcmp.eq.f32.partialorder %v1141, 8.507059e+37
  %v1143 = vand.u32 %v1116, 2147483648
  %v1144 = vor.u32 1.1754944e-38, %v1143
  %v1145 = vsel %vm1142, %v1144, %v1140
  %v1146 = vmul.f32 1.0, %v1145
  %v1147 = vmul.f32 %v1131, 1.0614054
  %v1148 = vmul.f32 %v1146, 1.0614054
  %v1149 = vadd.f32 %v1147, -1.4531521
  %v1150 = vadd.f32 %v1148, -1.4531521
  %v1151 = vmul.f32 %v1149, %v1131
  %v1152 = vmul.f32 %v1150, %v1146
  %v1153 = vadd.f32 %v1151, 1.4214138
  %v1154 = vadd.f32 %v1152, 1.4214138
  %v1155 = vmul.f32 %v1153, %v1131
  %v1156 = vmul.f32 %v1154, %v1146
  %v1157 = vadd.f32 %v1155, -0.28449672
  %v1158 = vadd.f32 %v1156, -0.28449672
  %v1159 = vmul.f32 %v1157, %v1131
  %v1160 = vmul.f32 %v1158, %v1146
  %v1161 = vadd.f32 %v1159, 0.2548296
  %v1162 = vadd.f32 %v1160, 0.2548296
  %v1163 = vmul.f32 %v1161, %v1131
  %v1164 = vmul.f32 %v1162, %v1146
  %v1165 = vsub.f32 0.0, %v1111
  %v1166 = vsub.f32 0.0, %v1112
  %v1167 = vmul.f32 %v1165, %v1111
  %v1168 = vmul.f32 %v1166, %v1112
  %v1169 = vmul.f32 %v1167, 1.442695
  %v1170 = vpow.pop %v1169
  %v1171 = vmul.f32 %v1168, 1.442695
  %v1172 = vpow.pop %v1171
  %v1173 = vmul.f32 %v1163, %v1170
  %v1174 = vmul.f32 %v1164, %v1172
  %v1175 = vsub.f32 1.0, %v1173
  %v1176 = vsub.f32 1.0, %v1174
  %v1177 = vmul.f32 %v1109, %v1175
  %v1178 = vmul.f32 %v1110, %v1176
  %v1179 = vadd.f32 %v1177, 1.0
  %v1180 = vadd.f32 %v1178, 1.0
  %v1181 = vmul.f32 %v1103, %v1179
  %v1182 = vmul.f32 %v1104, %v1180
  %v1183 = vpack.c.bf16 %v1182, %v1181
  %v1184 = vld [vmem:[%s6] sm:$0xf]
  %v1185 = vld [vmem:[%s6 + $0x4] sm:$0xf]
  %v1186 = vld [vmem:[%s6 + $0x8] sm:$0xf]
  %v1187 = vld [vmem:[%s6 + $0xc] sm:$0xf]
  %v1188 = vld [vmem:[%s6 + $0x10] sm:$0xf]
  %v1189 = vld [vmem:[%s6 + $0x14] sm:$0xf]
  %v1190 = vld [vmem:[%s6 + $0x18] sm:$0xf]
  %v1191 = vld [vmem:[%s6 + $0x1c] sm:$0xf]
  %v1200 = vunpack.c.l.b16 %v1184
  %v1201 = vunpack.c.l.b16 %v1185
  %v1202 = vunpack.c.l.b16 %v1186
  %v1203 = vunpack.c.l.b16 %v1187
  %v1204 = vunpack.c.l.b16 %v1188
  %v1205 = vunpack.c.l.b16 %v1189
  %v1206 = vunpack.c.l.b16 %v1190
  %v1207 = vunpack.c.l.b16 %v1191
  %v1208 = vpack.c.b16 %v1201, %v1200
  %v1209 = vpack.c.b16 %v1203, %v1202
  %v1210 = vpack.c.b16 %v1205, %v1204
  %v1211 = vpack.c.b16 %v1207, %v1206
  %vm1216 = vcmask 523264
  %v1218 = vsel %vm1216, %v1183, 0
  %1220 = vmatpush.bf16.msra.mxu0 0
  %1221 = vmatpush.bf16.msra.mxu0 0
  %1222 = vmatpush.bf16.msra.mxu0 0
  %1223 = vmatpush.bf16.msra.mxu0 0
  %1224 = vmatpush.bf16.msra.mxu0 %v1211
  %1225 = vmatpush.bf16.msra.mxu0 %v1210
  %1226 = vmatpush.bf16.msra.mxu0 %v1209
  %1227 = vmatpush.bf16.msra.mxu0 %v1208
  %1228 = vmatmul.bf16.gmra.mxu0 %v1218
  %v1229 = vpop.f32.mrf.mxu0
  %v1230 = vadd.f32 0.0, %v1229
  %v1231 = vpop.f32.mrf.mxu0
  %v1232 = vadd.f32 0.0, %v1231
  %1233 = vdwg.mxu0
  %v1234 = vadd.f32 %v1016, %v1230
  %v1235 = vadd.f32 %v1017, %v1232
  %v1236 = vperm.slane %v42, 3
  %v1237 = vadd.f32 %v1234, %v1236
  %v1238 = vadd.f32 %v1235, %v1236
  %v1239 = vsel %vm549, %v1237, 0.0
  %1240 = vadd.xlane.f32.xlu0 %v1239
  %v1241 = vpop.xlane.xlu0 %1240
  %v1242 = vsel %vm553, %v1238, 0.0
  %1243 = vadd.xlane.f32.xlu0 %v1242
  %v1244 = vpop.xlane.xlu0 %1243
  %v1245 = vmul.f32 %v1241, %v563
  %v1246 = vmul.f32 %v1244, %v563
  %v1247 = vsub.f32 %v1237, %v1245
  %v1248 = vsub.f32 %v1238, %v1246
  %v1249 = vmul.f32 %v1247, %v1247
  %v1250 = vmul.f32 %v1248, %v1248
  %v1251 = vsel %vm549, %v1249, 0.0
  %1252 = vadd.xlane.f32.xlu0 %v1251
  %v1253 = vpop.xlane.xlu0 %1252
  %v1254 = vsel %vm553, %v1250, 0.0
  %1255 = vadd.xlane.f32.xlu0 %v1254
  %v1256 = vpop.xlane.xlu0 %1255
  %v1257 = vmul.f32 %v1253, %v563
  %v1258 = vmul.f32 %v1256, %v563
  %v1259 = vadd.f32 %v1257, 1e-06
  %v1260 = vadd.f32 %v1258, 1e-06
  %v1261 = vrsqrt.pop %v1259
  %v1262 = vmul.f32 %v1261, %v1259
  %v1263 = vmul.f32 %v1262, %v1261
  %v1264 = vmul.f32 0.5, %v1263
  %v1265 = vsub.f32 1.5, %v1264
  %v1266 = vmul.f32 %v1261, %v1265
  %vm1267 = vweird.f32 %v1259
  %vm1268 = vweird.f32 %v1261
  %vm1269 = vmor %vm1267, %vm1268
  %v1270 = vsel %vm1269, %v1261, %v1266
  %v1271 = vrsqrt.pop %v1260
  %v1272 = vmul.f32 %v1271, %v1260
  %v1273 = vmul.f32 %v1272, %v1271
  %v1274 = vmul.f32 0.5, %v1273
  %v1275 = vsub.f32 1.5, %v1274
  %v1276 = vmul.f32 %v1271, %v1275
  %vm1277 = vweird.f32 %v1260
  %vm1278 = vweird.f32 %v1271
  %vm1279 = vmor %vm1277, %vm1278
  %v1280 = vsel %vm1279, %v1271, %v1276
  %v1281 = vmul.f32 %v1247, %v1270
  %v1282 = vmul.f32 %v1248, %v1280
  %v1283 = vperm.slane %v42, 4
  %v1284 = vmul.f32 %v1281, %v1283
  %v1285 = vmul.f32 %v1282, %v1283
  %v1286 = vperm.slane %v42, 5
  %v1287 = vadd.f32 %v1284, %v1286
  %v1288 = vadd.f32 %v1285, %v1286
  %v1289 = vpack.c.bf16 %v1288, %v1287
  %s1290 = scalar_lea.vmem %s3, 16
  %v1291 = vld [vmem:[%s1290] sm:$0xf]
  %v1292 = vld [vmem:[%s1290 + $0x4] sm:$0xf]
  %v1293 = vld [vmem:[%s1290 + $0x8] sm:$0xf]
  %v1294 = vld [vmem:[%s1290 + $0xc] sm:$0xf]
  %v1295 = vperm.slane %v42, 6
  %v1300 = vunpack.c.l.b16 %v1291
  %v1301 = vunpack.c.l.b16 %v1292
  %v1302 = vunpack.c.l.b16 %v1293
  %v1303 = vunpack.c.l.b16 %v1294
  %v1304 = vpack.c.b16 %v1301, %v1300
  %v1305 = vpack.c.b16 %v1303, %v1302
  %v1309 = vsel %vm549, %v1289, 0
  %1311 = vmatpush.bf16.msra.mxu0 0
  %1312 = vmatpush.bf16.msra.mxu0 0
  %1313 = vmatpush.bf16.msra.mxu0 0
  %1314 = vmatpush.bf16.msra.mxu0 0
  %1315 = vmatpush.bf16.msra.mxu0 0
  %1316 = vmatpush.bf16.msra.mxu0 0
  %1317 = vmatpush.bf16.msra.mxu0 %v1305
  %1318 = vmatpush.bf16.msra.mxu0 %v1304
  %1319 = vmatmul.bf16.gmra.mxu0 %v1309
  %v1320 = vpop.f32.mrf.mxu0
  %v1321 = vadd.f32 %v1295, %v1320
  %v1322 = vpop.f32.mrf.mxu0
  %v1323 = vadd.f32 %v1295, %v1322
  %1324 = vdwg.mxu0
  %v1325 = vpack.c.bf16 %v1323, %v1321
  %1327 = vrot.lane.b32.xlu0 %v1325, 96
  %v1328 = vpop.permute.xlu0 %1327
  %v1330 = vsel %vm647, %v1325, 0
  %v1333 = vsel %vm647, %v1328, 0
  %1335 = vmatpush.bf16.xpose.msra.mxu0 0
  %1336 = vmatpush.bf16.xpose.msra.mxu0 0
  %1337 = vmatpush.bf16.xpose.msra.mxu0 0
  %1338 = vmatpush.bf16.xpose.msra.mxu0 0
  %1339 = vmatpush.bf16.xpose.msra.mxu0 0
  %1340 = vmatpush.bf16.xpose.msra.mxu0 0
  %1341 = vmatpush.bf16.xpose.msra.mxu0 0
  %1342 = vmatpush.bf16.xpose.msra.mxu0 %v1333
  %1343 = vmatmul.bf16.gmra.mxu0 %v1330
  %v1344 = vpop.f32.mrf.mxu0
  %v1345 = vadd.f32 0.0, %v1344
  %v1346 = vpop.f32.mrf.mxu0
  %v1347 = vadd.f32 0.0, %v1346
  %1348 = vdwg.mxu0
  %v1349 = vmul.f32 %v1345, 0.35355338
  %v1350 = vmul.f32 %v1347, 0.35355338
  %v1351 = vadd.f32 %v1349, %v675
  %v1352 = vadd.f32 %v1350, %v674
  %v1353 = vsel %vm680, %v1351, -inf
  %1354 = vmax.xlane.f32.xlu0 %v1353
  %v1355 = vpop.xlane.xlu0 %1354
  %v1356 = vsel %vm684, %v1352, -inf
  %1357 = vmax.xlane.f32.xlu0 %v1356
  %v1358 = vpop.xlane.xlu0 %1357
  %v1359 = vsub.f32 %v1351, %v1355
  %v1360 = vsub.f32 %v1352, %v1358
  %v1361 = vmul.f32 %v1359, 1.442695
  %v1362 = vpow.pop %v1361
  %v1363 = vmul.f32 %v1360, 1.442695
  %v1364 = vpow.pop %v1363
  %v1365 = vsel %vm680, %v1362, 0.0
  %1366 = vadd.xlane.f32.xlu0 %v1365
  %v1367 = vpop.xlane.xlu0 %1366
  %v1368 = vsel %vm684, %v1364, 0.0
  %1369 = vadd.xlane.f32.xlu0 %v1368
  %v1370 = vpop.xlane.xlu0 %1369
  %v1371 = vrcp.pop %v1367
  %v1372 = vrcp.pop %v1370
  %v1373 = vmul.f32 %v1362, %v1371
  %v1374 = vmul.f32 %v1364, %v1372
  %v1375 = vpack.c.bf16 %v1374, %v1373
  %1376 = vrot.lane.b32.xlu0 %v1325, 64
  %v1377 = vpop.permute.xlu0 %1376
  %v1379 = vsel %vm680, %v1375, 0
  %v1382 = vsel %vm710, %v1377, 0
  %1384 = vmatpush.bf16.msra.mxu0 0
  %1385 = vmatpush.bf16.msra.mxu0 0
  %1386 = vmatpush.bf16.msra.mxu0 0
  %1387 = vmatpush.bf16.msra.mxu0 0
  %1388 = vmatpush.bf16.msra.mxu0 0
  %1389 = vmatpush.bf16.msra.mxu0 0
  %1390 = vmatpush.bf16.msra.mxu0 0
  %1391 = vmatpush.bf16.msra.mxu0 %v1382
  %1392 = vmatmul.bf16.gmra.mxu0 %v1379
  %v1393 = vpop.f32.mrf.mxu0
  %v1394 = vadd.f32 0.0, %v1393
  %v1395 = vpop.f32.mrf.mxu0
  %v1396 = vadd.f32 0.0, %v1395
  %1397 = vdwg.mxu0
  %1398 = vrot.lane.b32.xlu0 %v1325, 120
  %v1399 = vpop.permute.xlu0 %1398
  %1400 = vrot.lane.b32.xlu0 %v1325, 88
  %v1401 = vpop.permute.xlu0 %1400
  %v1403 = vsel %vm647, %v1399, 0
  %v1406 = vsel %vm647, %v1401, 0
  %1408 = vmatpush.bf16.xpose.msra.mxu0 0
  %1409 = vmatpush.bf16.xpose.msra.mxu0 0
  %1410 = vmatpush.bf16.xpose.msra.mxu0 0
  %1411 = vmatpush.bf16.xpose.msra.mxu0 0
  %1412 = vmatpush.bf16.xpose.msra.mxu0 0
  %1413 = vmatpush.bf16.xpose.msra.mxu0 0
  %1414 = vmatpush.bf16.xpose.msra.mxu0 0
  %1415 = vmatpush.bf16.xpose.msra.mxu0 %v1406
  %1416 = vmatmul.bf16.gmra.mxu0 %v1403
  %v1417 = vpop.f32.mrf.mxu0
  %v1418 = vadd.f32 0.0, %v1417
  %v1419 = vpop.f32.mrf.mxu0
  %v1420 = vadd.f32 0.0, %v1419
  %1421 = vdwg.mxu0
  %v1422 = vmul.f32 %v1418, 0.35355338
  %v1423 = vmul.f32 %v1420, 0.35355338
  %v1424 = vadd.f32 %v1422, %v675
  %v1425 = vadd.f32 %v1423, %v674
  %v1426 = vsel %vm680, %v1424, -inf
  %1427 = vmax.xlane.f32.xlu0 %v1426
  %v1428 = vpop.xlane.xlu0 %1427
  %v1429 = vsel %vm684, %v1425, -inf
  %1430 = vmax.xlane.f32.xlu0 %v1429
  %v1431 = vpop.xlane.xlu0 %1430
  %v1432 = vsub.f32 %v1424, %v1428
  %v1433 = vsub.f32 %v1425, %v1431
  %v1434 = vmul.f32 %v1432, 1.442695
  %v1435 = vpow.pop %v1434
  %v1436 = vmul.f32 %v1433, 1.442695
  %v1437 = vpow.pop %v1436
  %v1438 = vsel %vm680, %v1435, 0.0
  %1439 = vadd.xlane.f32.xlu0 %v1438
  %v1440 = vpop.xlane.xlu0 %1439
  %v1441 = vsel %vm684, %v1437, 0.0
  %1442 = vadd.xlane.f32.xlu0 %v1441
  %v1443 = vpop.xlane.xlu0 %1442
  %v1444 = vrcp.pop %v1440
  %v1445 = vrcp.pop %v1443
  %v1446 = vmul.f32 %v1435, %v1444
  %v1447 = vmul.f32 %v1437, %v1445
  %v1448 = vpack.c.bf16 %v1447, %v1446
  %1449 = vrot.lane.b32.xlu0 %v1325, 56
  %v1450 = vpop.permute.xlu0 %1449
  %v1452 = vsel %vm680, %v1448, 0
  %v1455 = vsel %vm710, %v1450, 0
  %1457 = vmatpush.bf16.msra.mxu0 0
  %1458 = vmatpush.bf16.msra.mxu0 0
  %1459 = vmatpush.bf16.msra.mxu0 0
  %1460 = vmatpush.bf16.msra.mxu0 0
  %1461 = vmatpush.bf16.msra.mxu0 0
  %1462 = vmatpush.bf16.msra.mxu0 0
  %1463 = vmatpush.bf16.msra.mxu0 0
  %1464 = vmatpush.bf16.msra.mxu0 %v1455
  %1465 = vmatmul.bf16.gmra.mxu0 %v1452
  %v1466 = vpop.f32.mrf.mxu0
  %v1467 = vadd.f32 0.0, %v1466
  %v1468 = vpop.f32.mrf.mxu0
  %v1469 = vadd.f32 0.0, %v1468
  %1470 = vdwg.mxu0
  %1471 = vrot.lane.b32.xlu0 %v1325, 112
  %v1472 = vpop.permute.xlu0 %1471
  %1473 = vrot.lane.b32.xlu0 %v1325, 80
  %v1474 = vpop.permute.xlu0 %1473
  %v1476 = vsel %vm647, %v1472, 0
  %v1479 = vsel %vm647, %v1474, 0
  %1481 = vmatpush.bf16.xpose.msra.mxu0 0
  %1482 = vmatpush.bf16.xpose.msra.mxu0 0
  %1483 = vmatpush.bf16.xpose.msra.mxu0 0
  %1484 = vmatpush.bf16.xpose.msra.mxu0 0
  %1485 = vmatpush.bf16.xpose.msra.mxu0 0
  %1486 = vmatpush.bf16.xpose.msra.mxu0 0
  %1487 = vmatpush.bf16.xpose.msra.mxu0 0
  %1488 = vmatpush.bf16.xpose.msra.mxu0 %v1479
  %1489 = vmatmul.bf16.gmra.mxu0 %v1476
  %v1490 = vpop.f32.mrf.mxu0
  %v1491 = vadd.f32 0.0, %v1490
  %v1492 = vpop.f32.mrf.mxu0
  %v1493 = vadd.f32 0.0, %v1492
  %1494 = vdwg.mxu0
  %v1495 = vmul.f32 %v1491, 0.35355338
  %v1496 = vmul.f32 %v1493, 0.35355338
  %v1497 = vadd.f32 %v1495, %v675
  %v1498 = vadd.f32 %v1496, %v674
  %v1499 = vsel %vm680, %v1497, -inf
  %1500 = vmax.xlane.f32.xlu0 %v1499
  %v1501 = vpop.xlane.xlu0 %1500
  %v1502 = vsel %vm684, %v1498, -inf
  %1503 = vmax.xlane.f32.xlu0 %v1502
  %v1504 = vpop.xlane.xlu0 %1503
  %v1505 = vsub.f32 %v1497, %v1501
  %v1506 = vsub.f32 %v1498, %v1504
  %v1507 = vmul.f32 %v1505, 1.442695
  %v1508 = vpow.pop %v1507
  %v1509 = vmul.f32 %v1506, 1.442695
  %v1510 = vpow.pop %v1509
  %v1511 = vsel %vm680, %v1508, 0.0
  %1512 = vadd.xlane.f32.xlu0 %v1511
  %v1513 = vpop.xlane.xlu0 %1512
  %v1514 = vsel %vm684, %v1510, 0.0
  %1515 = vadd.xlane.f32.xlu0 %v1514
  %v1516 = vpop.xlane.xlu0 %1515
  %v1517 = vrcp.pop %v1513
  %v1518 = vrcp.pop %v1516
  %v1519 = vmul.f32 %v1508, %v1517
  %v1520 = vmul.f32 %v1510, %v1518
  %v1521 = vpack.c.bf16 %v1520, %v1519
  %1522 = vrot.lane.b32.xlu0 %v1325, 48
  %v1523 = vpop.permute.xlu0 %1522
  %v1525 = vsel %vm680, %v1521, 0
  %v1528 = vsel %vm710, %v1523, 0
  %1530 = vmatpush.bf16.msra.mxu0 0
  %1531 = vmatpush.bf16.msra.mxu0 0
  %1532 = vmatpush.bf16.msra.mxu0 0
  %1533 = vmatpush.bf16.msra.mxu0 0
  %1534 = vmatpush.bf16.msra.mxu0 0
  %1535 = vmatpush.bf16.msra.mxu0 0
  %1536 = vmatpush.bf16.msra.mxu0 0
  %1537 = vmatpush.bf16.msra.mxu0 %v1528
  %1538 = vmatmul.bf16.gmra.mxu0 %v1525
  %v1539 = vpop.f32.mrf.mxu0
  %v1540 = vadd.f32 0.0, %v1539
  %v1541 = vpop.f32.mrf.mxu0
  %v1542 = vadd.f32 0.0, %v1541
  %1543 = vdwg.mxu0
  %1544 = vrot.lane.b32.xlu0 %v1325, 104
  %v1545 = vpop.permute.xlu0 %1544
  %1546 = vrot.lane.b32.xlu0 %v1325, 72
  %v1547 = vpop.permute.xlu0 %1546
  %v1549 = vsel %vm647, %v1545, 0
  %v1552 = vsel %vm647, %v1547, 0
  %1554 = vmatpush.bf16.xpose.msra.mxu0 0
  %1555 = vmatpush.bf16.xpose.msra.mxu0 0
  %1556 = vmatpush.bf16.xpose.msra.mxu0 0
  %1557 = vmatpush.bf16.xpose.msra.mxu0 0
  %1558 = vmatpush.bf16.xpose.msra.mxu0 0
  %1559 = vmatpush.bf16.xpose.msra.mxu0 0
  %1560 = vmatpush.bf16.xpose.msra.mxu0 0
  %1561 = vmatpush.bf16.xpose.msra.mxu0 %v1552
  %1562 = vmatmul.bf16.gmra.mxu0 %v1549
  %v1563 = vpop.f32.mrf.mxu0
  %v1564 = vadd.f32 0.0, %v1563
  %v1565 = vpop.f32.mrf.mxu0
  %v1566 = vadd.f32 0.0, %v1565
  %1567 = vdwg.mxu0
  %v1568 = vmul.f32 %v1564, 0.35355338
  %v1569 = vmul.f32 %v1566, 0.35355338
  %v1570 = vadd.f32 %v1568, %v675
  %v1571 = vadd.f32 %v1569, %v674
  %v1572 = vsel %vm680, %v1570, -inf
  %1573 = vmax.xlane.f32.xlu0 %v1572
  %v1574 = vpop.xlane.xlu0 %1573
  %v1575 = vsel %vm684, %v1571, -inf
  %1576 = vmax.xlane.f32.xlu0 %v1575
  %v1577 = vpop.xlane.xlu0 %1576
  %v1578 = vsub.f32 %v1570, %v1574
  %v1579 = vsub.f32 %v1571, %v1577
  %v1580 = vmul.f32 %v1578, 1.442695
  %v1581 = vpow.pop %v1580
  %v1582 = vmul.f32 %v1579, 1.442695
  %v1583 = vpow.pop %v1582
  %v1584 = vsel %vm680, %v1581, 0.0
  %1585 = vadd.xlane.f32.xlu0 %v1584
  %v1586 = vpop.xlane.xlu0 %1585
  %v1587 = vsel %vm684, %v1583, 0.0
  %1588 = vadd.xlane.f32.xlu0 %v1587
  %v1589 = vpop.xlane.xlu0 %1588
  %v1590 = vrcp.pop %v1586
  %v1591 = vrcp.pop %v1589
  %v1592 = vmul.f32 %v1581, %v1590
  %v1593 = vmul.f32 %v1583, %v1591
  %v1594 = vpack.c.bf16 %v1593, %v1592
  %1595 = vrot.lane.b32.xlu0 %v1325, 40
  %v1596 = vpop.permute.xlu0 %1595
  %v1598 = vsel %vm680, %v1594, 0
  %v1601 = vsel %vm710, %v1596, 0
  %1603 = vmatpush.bf16.msra.mxu0 0
  %1604 = vmatpush.bf16.msra.mxu0 0
  %1605 = vmatpush.bf16.msra.mxu0 0
  %1606 = vmatpush.bf16.msra.mxu0 0
  %1607 = vmatpush.bf16.msra.mxu0 0
  %1608 = vmatpush.bf16.msra.mxu0 0
  %1609 = vmatpush.bf16.msra.mxu0 0
  %1610 = vmatpush.bf16.msra.mxu0 %v1601
  %1611 = vmatmul.bf16.gmra.mxu0 %v1598
  %v1612 = vpop.f32.mrf.mxu0
  %v1613 = vadd.f32 0.0, %v1612
  %v1614 = vpop.f32.mrf.mxu0
  %v1615 = vadd.f32 0.0, %v1614
  %1616 = vdwg.mxu0
  %1619 = vrot.lane.b32.xlu0 %v1467, 8
  %v1620 = vpop.permute.xlu0 %1619
  %1621 = vrot.lane.b32.xlu0 %v1469, 8
  %v1622 = vpop.permute.xlu0 %1621
  %1627 = vrot.lane.b32.xlu0 %v1540, 16
  %v1628 = vpop.permute.xlu0 %1627
  %1629 = vrot.lane.b32.xlu0 %v1542, 16
  %v1630 = vpop.permute.xlu0 %1629
  %1635 = vrot.lane.b32.xlu0 %v1613, 24
  %v1636 = vpop.permute.xlu0 %1635
  %1637 = vrot.lane.b32.xlu0 %v1615, 24
  %v1638 = vpop.permute.xlu0 %1637
  %v1641 = vsel %vm647, %v1394, %v1620
  %v1642 = vsel %vm647, %v1396, %v1622
  %v1643 = vsel %vm973, %v1641, %v1628
  %v1644 = vsel %vm973, %v1642, %v1630
  %v1645 = vsel %vm976, %v1643, %v1636
  %v1646 = vsel %vm976, %v1644, %v1638
  %v1647 = vpack.c.bf16 %v1646, %v1645
  %s1648 = scalar_lea.vmem %s4, 16
  %v1649 = vld [vmem:[%s1648] sm:$0xf]
  %v1650 = vld [vmem:[%s1648 + $0x4] sm:$0xf]
  %v1651 = vld [vmem:[%s1648 + $0x8] sm:$0xf]
  %v1652 = vld [vmem:[%s1648 + $0xc] sm:$0xf]
  %v1657 = vunpack.c.l.b16 %v1649
  %v1658 = vunpack.c.l.b16 %v1650
  %v1659 = vunpack.c.l.b16 %v1651
  %v1660 = vunpack.c.l.b16 %v1652
  %v1661 = vpack.c.b16 %v1658, %v1657
  %v1662 = vpack.c.b16 %v1660, %v1659
  %v1666 = vsel %vm549, %v1647, 0
  %1668 = vmatpush.bf16.msra.mxu0 0
  %1669 = vmatpush.bf16.msra.mxu0 0
  %1670 = vmatpush.bf16.msra.mxu0 0
  %1671 = vmatpush.bf16.msra.mxu0 0
  %1672 = vmatpush.bf16.msra.mxu0 0
  %1673 = vmatpush.bf16.msra.mxu0 0
  %1674 = vmatpush.bf16.msra.mxu0 %v1662
  %1675 = vmatpush.bf16.msra.mxu0 %v1661
  %1676 = vmatmul.bf16.gmra.mxu0 %v1666
  %v1677 = vpop.f32.mrf.mxu0
  %v1678 = vadd.f32 0.0, %v1677
  %v1679 = vpop.f32.mrf.mxu0
  %v1680 = vadd.f32 0.0, %v1679
  %1681 = vdwg.mxu0
  %v1682 = vadd.f32 %v1237, %v1678
  %v1683 = vadd.f32 %v1238, %v1680
  %v1684 = vperm.slane %v42, 7
  %v1685 = vadd.f32 %v1682, %v1684
  %v1686 = vadd.f32 %v1683, %v1684
  %v1687 = vsel %vm549, %v1685, 0.0
  %1688 = vadd.xlane.f32.xlu0 %v1687
  %v1689 = vpop.xlane.xlu0 %1688
  %v1690 = vsel %vm553, %v1686, 0.0
  %1691 = vadd.xlane.f32.xlu0 %v1690
  %v1692 = vpop.xlane.xlu0 %1691
  %v1693 = vmul.f32 %v1689, %v563
  %v1694 = vmul.f32 %v1692, %v563
  %v1695 = vsub.f32 %v1685, %v1693
  %v1696 = vsub.f32 %v1686, %v1694
  %v1697 = vmul.f32 %v1695, %v1695
  %v1698 = vmul.f32 %v1696, %v1696
  %v1699 = vsel %vm549, %v1697, 0.0
  %1700 = vadd.xlane.f32.xlu0 %v1699
  %v1701 = vpop.xlane.xlu0 %1700
  %v1702 = vsel %vm553, %v1698, 0.0
  %1703 = vadd.xlane.f32.xlu0 %v1702
  %v1704 = vpop.xlane.xlu0 %1703
  %v1705 = vmul.f32 %v1701, %v563
  %v1706 = vmul.f32 %v1704, %v563
  %v1707 = vadd.f32 %v1705, 1e-06
  %v1708 = vadd.f32 %v1706, 1e-06
  %v1709 = vrsqrt.pop %v1707
  %v1710 = vmul.f32 %v1709, %v1707
  %v1711 = vmul.f32 %v1710, %v1709
  %v1712 = vmul.f32 0.5, %v1711
  %v1713 = vsub.f32 1.5, %v1712
  %v1714 = vmul.f32 %v1709, %v1713
  %vm1715 = vweird.f32 %v1707
  %vm1716 = vweird.f32 %v1709
  %vm1717 = vmor %vm1715, %vm1716
  %v1718 = vsel %vm1717, %v1709, %v1714
  %v1719 = vrsqrt.pop %v1708
  %v1720 = vmul.f32 %v1719, %v1708
  %v1721 = vmul.f32 %v1720, %v1719
  %v1722 = vmul.f32 0.5, %v1721
  %v1723 = vsub.f32 1.5, %v1722
  %v1724 = vmul.f32 %v1719, %v1723
  %vm1725 = vweird.f32 %v1708
  %vm1726 = vweird.f32 %v1719
  %vm1727 = vmor %vm1725, %vm1726
  %v1728 = vsel %vm1727, %v1719, %v1724
  %v1729 = vmul.f32 %v1695, %v1718
  %v1730 = vmul.f32 %v1696, %v1728
  %v1731 = vperm.slane %v43, 0
  %v1732 = vmul.f32 %v1729, %v1731
  %v1733 = vmul.f32 %v1730, %v1731
  %v1734 = vperm.slane %v43, 1
  %v1735 = vadd.f32 %v1732, %v1734
  %v1736 = vadd.f32 %v1733, %v1734
  %v1737 = vpack.c.bf16 %v1736, %v1735
  %s1738 = scalar_lea.vmem %s5, 16
  %v1739 = vld [vmem:[%s1738] sm:$0xf]
  %v1740 = vld [vmem:[%s1738 + $0x4] sm:$0xf]
  %v1741 = vld [vmem:[%s1738 + $0x8] sm:$0xf]
  %v1742 = vld [vmem:[%s1738 + $0xc] sm:$0xf]
  %v1743 = vperm.slane %v43, 2
  %v1748 = vunpack.c.l.b16 %v1739
  %v1749 = vunpack.c.l.b16 %v1740
  %v1750 = vunpack.c.l.b16 %v1741
  %v1751 = vunpack.c.l.b16 %v1742
  %v1752 = vpack.c.b16 %v1749, %v1748
  %v1753 = vpack.c.b16 %v1751, %v1750
  %v1757 = vsel %vm549, %v1737, 0
  %1759 = vmatpush.bf16.msra.mxu0 0
  %1760 = vmatpush.bf16.msra.mxu0 0
  %1761 = vmatpush.bf16.msra.mxu0 0
  %1762 = vmatpush.bf16.msra.mxu0 0
  %1763 = vmatpush.bf16.msra.mxu0 0
  %1764 = vmatpush.bf16.msra.mxu0 0
  %1765 = vmatpush.bf16.msra.mxu0 %v1753
  %1766 = vmatpush.bf16.msra.mxu0 %v1752
  %1767 = vmatmul.bf16.gmra.mxu0 %v1757
  %v1768 = vpop.f32.mrf.mxu0
  %v1769 = vadd.f32 %v1743, %v1768
  %v1770 = vpop.f32.mrf.mxu0
  %v1771 = vadd.f32 %v1743, %v1770
  %1772 = vdwg.mxu0
  %v1773 = vmul.f32 %v1769, 0.5
  %v1774 = vmul.f32 %v1771, 0.5
  %v1775 = vmul.f32 %v1769, 0.70710677
  %v1776 = vmul.f32 %v1771, 0.70710677
  %vm1777 = vcmp.ge.f32.partialorder %v1775, 0.0
  %vm1778 = vcmp.ge.f32.partialorder %v1776, 0.0
  %v1779 = vsel %vm1777, 1.0, -1.0
  %v1780 = vsel %vm1778, 1.0, -1.0
  %v1781 = vand.u32 2147483647, %v1775
  %v1782 = vand.u32 2147483647, %v1776
  %v1783 = vmul.f32 %v1781, 0.3275911
  %v1784 = vmul.f32 %v1782, 0.3275911
  %v1785 = vadd.f32 %v1783, 1.0
  %v1786 = vadd.f32 %v1784, 1.0
  %v1787 = vrcp.pop %v1785
  %v1788 = vmul.f32 %v1785, %v1787
  %v1789 = vsub.f32 1.0, %v1788
  %v1790 = vmul.f32 %v1787, %v1789
  %v1791 = vadd.f32 %v1787, %v1790
  %vm1792 = vweird.f32 %v1785
  %vm1793 = vweird.f32 %v1787
  %vm1794 = vmor %vm1792, %vm1793
  %v1795 = vsel %vm1794, %v1787, %v1791
  %v1796 = vand.u32 2147483647, %v1785
  %vm1797 = vcmp.eq.f32.partialorder %v1796, 8.507059e+37
  %v1798 = vand.u32 %v1785, 2147483648
  %v1799 = vor.u32 1.1754944e-38, %v1798
  %v1800 = vsel %vm1797, %v1799, %v1795
  %v1801 = vmul.f32 1.0, %v1800
  %v1802 = vrcp.pop %v1786
  %v1803 = vmul.f32 %v1786, %v1802
  %v1804 = vsub.f32 1.0, %v1803
  %v1805 = vmul.f32 %v1802, %v1804
  %v1806 = vadd.f32 %v1802, %v1805
  %vm1807 = vweird.f32 %v1786
  %vm1808 = vweird.f32 %v1802
  %vm1809 = vmor %vm1807, %vm1808
  %v1810 = vsel %vm1809, %v1802, %v1806
  %v1811 = vand.u32 2147483647, %v1786
  %vm1812 = vcmp.eq.f32.partialorder %v1811, 8.507059e+37
  %v1813 = vand.u32 %v1786, 2147483648
  %v1814 = vor.u32 1.1754944e-38, %v1813
  %v1815 = vsel %vm1812, %v1814, %v1810
  %v1816 = vmul.f32 1.0, %v1815
  %v1817 = vmul.f32 %v1801, 1.0614054
  %v1818 = vmul.f32 %v1816, 1.0614054
  %v1819 = vadd.f32 %v1817, -1.4531521
  %v1820 = vadd.f32 %v1818, -1.4531521
  %v1821 = vmul.f32 %v1819, %v1801
  %v1822 = vmul.f32 %v1820, %v1816
  %v1823 = vadd.f32 %v1821, 1.4214138
  %v1824 = vadd.f32 %v1822, 1.4214138
  %v1825 = vmul.f32 %v1823, %v1801
  %v1826 = vmul.f32 %v1824, %v1816
  %v1827 = vadd.f32 %v1825, -0.28449672
  %v1828 = vadd.f32 %v1826, -0.28449672
  %v1829 = vmul.f32 %v1827, %v1801
  %v1830 = vmul.f32 %v1828, %v1816
  %v1831 = vadd.f32 %v1829, 0.2548296
  %v1832 = vadd.f32 %v1830, 0.2548296
  %v1833 = vmul.f32 %v1831, %v1801
  %v1834 = vmul.f32 %v1832, %v1816
  %v1835 = vsub.f32 0.0, %v1781
  %v1836 = vsub.f32 0.0, %v1782
  %v1837 = vmul.f32 %v1835, %v1781
  %v1838 = vmul.f32 %v1836, %v1782
  %v1839 = vmul.f32 %v1837, 1.442695
  %v1840 = vpow.pop %v1839
  %v1841 = vmul.f32 %v1838, 1.442695
  %v1842 = vpow.pop %v1841
  %v1843 = vmul.f32 %v1833, %v1840
  %v1844 = vmul.f32 %v1834, %v1842
  %v1845 = vsub.f32 1.0, %v1843
  %v1846 = vsub.f32 1.0, %v1844
  %v1847 = vmul.f32 %v1779, %v1845
  %v1848 = vmul.f32 %v1780, %v1846
  %v1849 = vadd.f32 %v1847, 1.0
  %v1850 = vadd.f32 %v1848, 1.0
  %v1851 = vmul.f32 %v1773, %v1849
  %v1852 = vmul.f32 %v1774, %v1850
  %v1853 = vpack.c.bf16 %v1852, %v1851
  %s1854 = scalar_lea.vmem %s6, 32
  %v1855 = vld [vmem:[%s1854] sm:$0xf]
  %v1856 = vld [vmem:[%s1854 + $0x4] sm:$0xf]
  %v1857 = vld [vmem:[%s1854 + $0x8] sm:$0xf]
  %v1858 = vld [vmem:[%s1854 + $0xc] sm:$0xf]
  %v1859 = vld [vmem:[%s1854 + $0x10] sm:$0xf]
  %v1860 = vld [vmem:[%s1854 + $0x14] sm:$0xf]
  %v1861 = vld [vmem:[%s1854 + $0x18] sm:$0xf]
  %v1862 = vld [vmem:[%s1854 + $0x1c] sm:$0xf]
  %v1871 = vunpack.c.l.b16 %v1855
  %v1872 = vunpack.c.l.b16 %v1856
  %v1873 = vunpack.c.l.b16 %v1857
  %v1874 = vunpack.c.l.b16 %v1858
  %v1875 = vunpack.c.l.b16 %v1859
  %v1876 = vunpack.c.l.b16 %v1860
  %v1877 = vunpack.c.l.b16 %v1861
  %v1878 = vunpack.c.l.b16 %v1862
  %v1879 = vpack.c.b16 %v1872, %v1871
  %v1880 = vpack.c.b16 %v1874, %v1873
  %v1881 = vpack.c.b16 %v1876, %v1875
  %v1882 = vpack.c.b16 %v1878, %v1877
  %v1888 = vsel %vm1216, %v1853, 0
  %1890 = vmatpush.bf16.msra.mxu0 0
  %1891 = vmatpush.bf16.msra.mxu0 0
  %1892 = vmatpush.bf16.msra.mxu0 0
  %1893 = vmatpush.bf16.msra.mxu0 0
  %1894 = vmatpush.bf16.msra.mxu0 %v1882
  %1895 = vmatpush.bf16.msra.mxu0 %v1881
  %1896 = vmatpush.bf16.msra.mxu0 %v1880
  %1897 = vmatpush.bf16.msra.mxu0 %v1879
  %1898 = vmatmul.bf16.gmra.mxu0 %v1888
  %v1899 = vpop.f32.mrf.mxu0
  %v1900 = vadd.f32 0.0, %v1899
  %v1901 = vpop.f32.mrf.mxu0
  %v1902 = vadd.f32 0.0, %v1901
  %1903 = vdwg.mxu0
  %v1904 = vadd.f32 %v1685, %v1900
  %v1905 = vadd.f32 %v1686, %v1902
  %v1906 = vperm.slane %v43, 3
  %v1907 = vadd.f32 %v1904, %v1906
  %v1908 = vadd.f32 %v1905, %v1906
  %v1909 = vsel %vm549, %v1907, 0.0
  %1910 = vadd.xlane.f32.xlu0 %v1909
  %v1911 = vpop.xlane.xlu0 %1910
  %v1912 = vsel %vm553, %v1908, 0.0
  %1913 = vadd.xlane.f32.xlu0 %v1912
  %v1914 = vpop.xlane.xlu0 %1913
  %v1915 = vmul.f32 %v1911, %v563
  %v1916 = vmul.f32 %v1914, %v563
  %v1917 = vsub.f32 %v1907, %v1915
  %v1918 = vsub.f32 %v1908, %v1916
  %v1919 = vmul.f32 %v1917, %v1917
  %v1920 = vmul.f32 %v1918, %v1918
  %v1921 = vsel %vm549, %v1919, 0.0
  %1922 = vadd.xlane.f32.xlu0 %v1921
  %v1923 = vpop.xlane.xlu0 %1922
  %v1924 = vsel %vm553, %v1920, 0.0
  %1925 = vadd.xlane.f32.xlu0 %v1924
  %v1926 = vpop.xlane.xlu0 %1925
  %v1927 = vmul.f32 %v1923, %v563
  %v1928 = vmul.f32 %v1926, %v563
  %v1929 = vadd.f32 %v1927, 1e-06
  %v1930 = vadd.f32 %v1928, 1e-06
  %v1931 = vrsqrt.pop %v1929
  %v1932 = vmul.f32 %v1931, %v1929
  %v1933 = vmul.f32 %v1932, %v1931
  %v1934 = vmul.f32 0.5, %v1933
  %v1935 = vsub.f32 1.5, %v1934
  %v1936 = vmul.f32 %v1931, %v1935
  %vm1937 = vweird.f32 %v1929
  %vm1938 = vweird.f32 %v1931
  %vm1939 = vmor %vm1937, %vm1938
  %v1940 = vsel %vm1939, %v1931, %v1936
  %v1941 = vrsqrt.pop %v1930
  %v1942 = vmul.f32 %v1941, %v1930
  %v1943 = vmul.f32 %v1942, %v1941
  %v1944 = vmul.f32 0.5, %v1943
  %v1945 = vsub.f32 1.5, %v1944
  %v1946 = vmul.f32 %v1941, %v1945
  %vm1947 = vweird.f32 %v1930
  %vm1948 = vweird.f32 %v1941
  %vm1949 = vmor %vm1947, %vm1948
  %v1950 = vsel %vm1949, %v1941, %v1946
  %v1951 = vmul.f32 %v1917, %v1940
  %v1952 = vmul.f32 %v1918, %v1950
  %v1953 = vperm.slane %v43, 4
  %v1954 = vmul.f32 %v1951, %v1953
  %v1955 = vmul.f32 %v1952, %v1953
  %v1956 = vperm.slane %v43, 5
  %v1957 = vadd.f32 %v1954, %v1956
  %v1958 = vadd.f32 %v1955, %v1956
  %v1959 = vpack.c.bf16 %v1958, %v1957
  %v1960 = vld [vmem:[%s7] sm:$0xf]
  %v1961 = vld [vmem:[%s7 + $0x4] sm:$0xf]
  %v1962 = vld [vmem:[%s7 + $0x8] sm:$0xf]
  %v1963 = vld [vmem:[%s7 + $0xc] sm:$0xf]
  %v1964 = vperm.slane %v43, 6
  %v1969 = vunpack.c.l.b16 %v1960
  %v1970 = vunpack.c.l.b16 %v1961
  %v1971 = vunpack.c.l.b16 %v1962
  %v1972 = vunpack.c.l.b16 %v1963
  %v1973 = vpack.c.b16 %v1970, %v1969
  %v1974 = vpack.c.b16 %v1972, %v1971
  %v1978 = vsel %vm549, %v1959, 0
  %1980 = vmatpush.bf16.msra.mxu0 0
  %1981 = vmatpush.bf16.msra.mxu0 0
  %1982 = vmatpush.bf16.msra.mxu0 0
  %1983 = vmatpush.bf16.msra.mxu0 0
  %1984 = vmatpush.bf16.msra.mxu0 0
  %1985 = vmatpush.bf16.msra.mxu0 0
  %1986 = vmatpush.bf16.msra.mxu0 %v1974
  %1987 = vmatpush.bf16.msra.mxu0 %v1973
  %1988 = vmatmul.bf16.gmra.mxu0 %v1978
  %v1989 = vpop.f32.mrf.mxu0
  %v1990 = vadd.f32 %v1964, %v1989
  %v1991 = vpop.f32.mrf.mxu0
  %v1992 = vadd.f32 %v1964, %v1991
  %1993 = vdwg.mxu0
  %v1994 = vsel %vm1216, %v1990, 0.0
  %1995 = vadd.xlane.f32.xlu0 %v1994
  %v1996 = vpop.xlane.xlu0 %1995
  %vm1997 = vcmask 517120
  %v1998 = vsel %vm1997, %v1992, 0.0
  %1999 = vadd.xlane.f32.xlu0 %v1998
  %v2000 = vpop.xlane.xlu0 %1999
  %v2001 = vrcp.pop 64.0
  %v2002 = vmul.f32 64.0, %v2001
  %v2003 = vsub.f32 1.0, %v2002
  %v2004 = vmul.f32 %v2001, %v2003
  %v2005 = vadd.f32 %v2001, %v2004
  %vm2006 = vweird.f32 %v2001
  %v2007 = vsel %vm2006, %v2001, %v2005
  %v2008 = vmul.f32 %v1996, %v2007
  %v2009 = vmul.f32 %v2000, %v2007
  %v2010 = vsub.f32 %v1990, %v2008
  %v2011 = vsub.f32 %v1992, %v2009
  %v2012 = vmul.f32 %v2010, %v2010
  %v2013 = vmul.f32 %v2011, %v2011
  %v2014 = vsel %vm1216, %v2012, 0.0
  %2015 = vadd.xlane.f32.xlu0 %v2014
  %v2016 = vpop.xlane.xlu0 %2015
  %v2017 = vsel %vm1997, %v2013, 0.0
  %2018 = vadd.xlane.f32.xlu0 %v2017
  %v2019 = vpop.xlane.xlu0 %2018
  %v2020 = vmul.f32 %v2016, %v2007
  %v2021 = vmul.f32 %v2019, %v2007
  %v2022 = vadd.f32 %v2020, 1e-05
  %v2023 = vadd.f32 %v2021, 1e-05
  %v2024 = vrsqrt.pop %v2022
  %v2025 = vmul.f32 %v2024, %v2022
  %v2026 = vmul.f32 %v2025, %v2024
  %v2027 = vmul.f32 0.5, %v2026
  %v2028 = vsub.f32 1.5, %v2027
  %v2029 = vmul.f32 %v2024, %v2028
  %vm2030 = vweird.f32 %v2022
  %vm2031 = vweird.f32 %v2024
  %vm2032 = vmor %vm2030, %vm2031
  %v2033 = vsel %vm2032, %v2024, %v2029
  %v2034 = vrsqrt.pop %v2023
  %v2035 = vmul.f32 %v2034, %v2023
  %v2036 = vmul.f32 %v2035, %v2034
  %v2037 = vmul.f32 0.5, %v2036
  %v2038 = vsub.f32 1.5, %v2037
  %v2039 = vmul.f32 %v2034, %v2038
  %vm2040 = vweird.f32 %v2023
  %vm2041 = vweird.f32 %v2034
  %vm2042 = vmor %vm2040, %vm2041
  %v2043 = vsel %vm2042, %v2034, %v2039
  %v2044 = vmul.f32 %v2010, %v2033
  %v2045 = vmul.f32 %v2011, %v2043
  %v2046 = vperm.slane %v43, 7
  %v2047 = vmul.f32 %v2044, %v2046
  %v2048 = vmul.f32 %v2045, %v2046
  %v2049 = vperm.slane %v44, 0
  %v2050 = vadd.f32 %v2047, %v2049
  %v2051 = vadd.f32 %v2048, %v2049
  %v2052 = vmul.f32 %v2050, 0.5
  %v2053 = vmul.f32 %v2051, 0.5
  %v2054 = vmul.f32 %v2050, 0.70710677
  %v2055 = vmul.f32 %v2051, 0.70710677
  %vm2056 = vcmp.ge.f32.partialorder %v2054, 0.0
  %vm2057 = vcmp.ge.f32.partialorder %v2055, 0.0
  %v2058 = vsel %vm2056, 1.0, -1.0
  %v2059 = vsel %vm2057, 1.0, -1.0
  %v2060 = vand.u32 2147483647, %v2054
  %v2061 = vand.u32 2147483647, %v2055
  %v2062 = vmul.f32 %v2060, 0.3275911
  %v2063 = vmul.f32 %v2061, 0.3275911
  %v2064 = vadd.f32 %v2062, 1.0
  %v2065 = vadd.f32 %v2063, 1.0
  %v2066 = vrcp.pop %v2064
  %v2067 = vmul.f32 %v2064, %v2066
  %v2068 = vsub.f32 1.0, %v2067
  %v2069 = vmul.f32 %v2066, %v2068
  %v2070 = vadd.f32 %v2066, %v2069
  %vm2071 = vweird.f32 %v2064
  %vm2072 = vweird.f32 %v2066
  %vm2073 = vmor %vm2071, %vm2072
  %v2074 = vsel %vm2073, %v2066, %v2070
  %v2075 = vand.u32 2147483647, %v2064
  %vm2076 = vcmp.eq.f32.partialorder %v2075, 8.507059e+37
  %v2077 = vand.u32 %v2064, 2147483648
  %v2078 = vor.u32 1.1754944e-38, %v2077
  %v2079 = vsel %vm2076, %v2078, %v2074
  %v2080 = vmul.f32 1.0, %v2079
  %v2081 = vrcp.pop %v2065
  %v2082 = vmul.f32 %v2065, %v2081
  %v2083 = vsub.f32 1.0, %v2082
  %v2084 = vmul.f32 %v2081, %v2083
  %v2085 = vadd.f32 %v2081, %v2084
  %vm2086 = vweird.f32 %v2065
  %vm2087 = vweird.f32 %v2081
  %vm2088 = vmor %vm2086, %vm2087
  %v2089 = vsel %vm2088, %v2081, %v2085
  %v2090 = vand.u32 2147483647, %v2065
  %vm2091 = vcmp.eq.f32.partialorder %v2090, 8.507059e+37
  %v2092 = vand.u32 %v2065, 2147483648
  %v2093 = vor.u32 1.1754944e-38, %v2092
  %v2094 = vsel %vm2091, %v2093, %v2089
  %v2095 = vmul.f32 1.0, %v2094
  %v2096 = vmul.f32 %v2080, 1.0614054
  %v2097 = vmul.f32 %v2095, 1.0614054
  %v2098 = vadd.f32 %v2096, -1.4531521
  %v2099 = vadd.f32 %v2097, -1.4531521
  %v2100 = vmul.f32 %v2098, %v2080
  %v2101 = vmul.f32 %v2099, %v2095
  %v2102 = vadd.f32 %v2100, 1.4214138
  %v2103 = vadd.f32 %v2101, 1.4214138
  %v2104 = vmul.f32 %v2102, %v2080
  %v2105 = vmul.f32 %v2103, %v2095
  %v2106 = vadd.f32 %v2104, -0.28449672
  %v2107 = vadd.f32 %v2105, -0.28449672
  %v2108 = vmul.f32 %v2106, %v2080
  %v2109 = vmul.f32 %v2107, %v2095
  %v2110 = vadd.f32 %v2108, 0.2548296
  %v2111 = vadd.f32 %v2109, 0.2548296
  %v2112 = vmul.f32 %v2110, %v2080
  %v2113 = vmul.f32 %v2111, %v2095
  %v2114 = vsub.f32 0.0, %v2060
  %v2115 = vsub.f32 0.0, %v2061
  %v2116 = vmul.f32 %v2114, %v2060
  %v2117 = vmul.f32 %v2115, %v2061
  %v2118 = vmul.f32 %v2116, 1.442695
  %v2119 = vpow.pop %v2118
  %v2120 = vmul.f32 %v2117, 1.442695
  %v2121 = vpow.pop %v2120
  %v2122 = vmul.f32 %v2112, %v2119
  %v2123 = vmul.f32 %v2113, %v2121
  %v2124 = vsub.f32 1.0, %v2122
  %v2125 = vsub.f32 1.0, %v2123
  %v2126 = vmul.f32 %v2058, %v2124
  %v2127 = vmul.f32 %v2059, %v2125
  %v2128 = vadd.f32 %v2126, 1.0
  %v2129 = vadd.f32 %v2127, 1.0
  %v2130 = vmul.f32 %v2052, %v2128
  %v2131 = vmul.f32 %v2053, %v2129
  %v2132 = vpack.c.bf16 %v2131, %v2130
  %v2133 = vld [vmem:[%s8] sm:$0xf]
  %v2134 = vld [vmem:[%s8 + $0x4] sm:$0xf]
  %v2135 = vld [vmem:[%s8 + $0x8] sm:$0xf]
  %v2136 = vld [vmem:[%s8 + $0xc] sm:$0xf]
  %v2137 = vld [vmem:[%s8 + $0x10] sm:$0xf]
  %v2138 = vld [vmem:[%s8 + $0x14] sm:$0xf]
  %v2139 = vld [vmem:[%s8 + $0x18] sm:$0xf]
  %v2140 = vld [vmem:[%s8 + $0x1c] sm:$0xf]
  %v2141 = vperm.slane %v44, 1
  %v2150 = vunpack.c.l.b16 %v2133
  %v2151 = vunpack.c.l.b16 %v2134
  %v2152 = vunpack.c.l.b16 %v2135
  %v2153 = vunpack.c.l.b16 %v2136
  %v2154 = vunpack.c.l.b16 %v2137
  %v2155 = vunpack.c.l.b16 %v2138
  %v2156 = vunpack.c.l.b16 %v2139
  %v2157 = vunpack.c.l.b16 %v2140
  %v2158 = vpack.c.b16 %v2151, %v2150
  %v2159 = vpack.c.b16 %v2153, %v2152
  %v2160 = vpack.c.b16 %v2155, %v2154
  %v2161 = vpack.c.b16 %v2157, %v2156
  %v2167 = vsel %vm1216, %v2132, 0
  %2169 = vmatpush.bf16.msra.mxu0 0
  %2170 = vmatpush.bf16.msra.mxu0 0
  %2171 = vmatpush.bf16.msra.mxu0 0
  %2172 = vmatpush.bf16.msra.mxu0 0
  %2173 = vmatpush.bf16.msra.mxu0 %v2161
  %2174 = vmatpush.bf16.msra.mxu0 %v2160
  %2175 = vmatpush.bf16.msra.mxu0 %v2159
  %2176 = vmatpush.bf16.msra.mxu0 %v2158
  %2177 = vmatmul.bf16.gmra.mxu0 %v2167
  %v2178 = vpop.f32.mrf.mxu0
  %v2179 = vadd.f32 %v2141, %v2178
  %v2180 = vpop.f32.mrf.mxu0
  %v2181 = vadd.f32 %v2141, %v2180
  %2182 = vdwg.mxu0
  %v2183 = vsel %vm549, %v2179, 0.0
  %2184 = vadd.xlane.f32.xlu0 %v2183
  %v2185 = vpop.xlane.xlu0 %2184
  %v2186 = vsel %vm553, %v2181, 0.0
  %2187 = vadd.xlane.f32.xlu0 %v2186
  %v2188 = vpop.xlane.xlu0 %2187
  %v2189 = vmul.f32 %v2185, %v563
  %v2190 = vmul.f32 %v2188, %v563
  %v2191 = vsub.f32 %v2179, %v2189
  %v2192 = vsub.f32 %v2181, %v2190
  %v2193 = vmul.f32 %v2191, %v2191
  %v2194 = vmul.f32 %v2192, %v2192
  %v2195 = vsel %vm549, %v2193, 0.0
  %2196 = vadd.xlane.f32.xlu0 %v2195
  %v2197 = vpop.xlane.xlu0 %2196
  %v2198 = vsel %vm553, %v2194, 0.0
  %2199 = vadd.xlane.f32.xlu0 %v2198
  %v2200 = vpop.xlane.xlu0 %2199
  %v2201 = vmul.f32 %v2197, %v563
  %v2202 = vmul.f32 %v2200, %v563
  %v2203 = vadd.f32 %v2201, 1e-05
  %v2204 = vadd.f32 %v2202, 1e-05
  %v2205 = vrsqrt.pop %v2203
  %v2206 = vmul.f32 %v2205, %v2203
  %v2207 = vmul.f32 %v2206, %v2205
  %v2208 = vmul.f32 0.5, %v2207
  %v2209 = vsub.f32 1.5, %v2208
  %v2210 = vmul.f32 %v2205, %v2209
  %vm2211 = vweird.f32 %v2203
  %vm2212 = vweird.f32 %v2205
  %vm2213 = vmor %vm2211, %vm2212
  %v2214 = vsel %vm2213, %v2205, %v2210
  %v2215 = vrsqrt.pop %v2204
  %v2216 = vmul.f32 %v2215, %v2204
  %v2217 = vmul.f32 %v2216, %v2215
  %v2218 = vmul.f32 0.5, %v2217
  %v2219 = vsub.f32 1.5, %v2218
  %v2220 = vmul.f32 %v2215, %v2219
  %vm2221 = vweird.f32 %v2204
  %vm2222 = vweird.f32 %v2215
  %vm2223 = vmor %vm2221, %vm2222
  %v2224 = vsel %vm2223, %v2215, %v2220
  %v2225 = vmul.f32 %v2191, %v2214
  %v2226 = vmul.f32 %v2192, %v2224
  %v2227 = vperm.slane %v44, 2
  %v2228 = vmul.f32 %v2225, %v2227
  %v2229 = vmul.f32 %v2226, %v2227
  %v2230 = vperm.slane %v44, 3
  %v2231 = vadd.f32 %v2228, %v2230
  %v2232 = vadd.f32 %v2229, %v2230
  %v2233 = vmul.f32 %v2231, 0.5
  %v2234 = vmul.f32 %v2232, 0.5
  %v2235 = vmul.f32 %v2231, 0.70710677
  %v2236 = vmul.f32 %v2232, 0.70710677
  %vm2237 = vcmp.ge.f32.partialorder %v2235, 0.0
  %vm2238 = vcmp.ge.f32.partialorder %v2236, 0.0
  %v2239 = vsel %vm2237, 1.0, -1.0
  %v2240 = vsel %vm2238, 1.0, -1.0
  %v2241 = vand.u32 2147483647, %v2235
  %v2242 = vand.u32 2147483647, %v2236
  %v2243 = vmul.f32 %v2241, 0.3275911
  %v2244 = vmul.f32 %v2242, 0.3275911
  %v2245 = vadd.f32 %v2243, 1.0
  %v2246 = vadd.f32 %v2244, 1.0
  %v2247 = vrcp.pop %v2245
  %v2248 = vmul.f32 %v2245, %v2247
  %v2249 = vsub.f32 1.0, %v2248
  %v2250 = vmul.f32 %v2247, %v2249
  %v2251 = vadd.f32 %v2247, %v2250
  %vm2252 = vweird.f32 %v2245
  %vm2253 = vweird.f32 %v2247
  %vm2254 = vmor %vm2252, %vm2253
  %v2255 = vsel %vm2254, %v2247, %v2251
  %v2256 = vand.u32 2147483647, %v2245
  %vm2257 = vcmp.eq.f32.partialorder %v2256, 8.507059e+37
  %v2258 = vand.u32 %v2245, 2147483648
  %v2259 = vor.u32 1.1754944e-38, %v2258
  %v2260 = vsel %vm2257, %v2259, %v2255
  %v2261 = vmul.f32 1.0, %v2260
  %v2262 = vrcp.pop %v2246
  %v2263 = vmul.f32 %v2246, %v2262
  %v2264 = vsub.f32 1.0, %v2263
  %v2265 = vmul.f32 %v2262, %v2264
  %v2266 = vadd.f32 %v2262, %v2265
  %vm2267 = vweird.f32 %v2246
  %vm2268 = vweird.f32 %v2262
  %vm2269 = vmor %vm2267, %vm2268
  %v2270 = vsel %vm2269, %v2262, %v2266
  %v2271 = vand.u32 2147483647, %v2246
  %vm2272 = vcmp.eq.f32.partialorder %v2271, 8.507059e+37
  %v2273 = vand.u32 %v2246, 2147483648
  %v2274 = vor.u32 1.1754944e-38, %v2273
  %v2275 = vsel %vm2272, %v2274, %v2270
  %v2276 = vmul.f32 1.0, %v2275
  %v2277 = vmul.f32 %v2261, 1.0614054
  %v2278 = vmul.f32 %v2276, 1.0614054
  %v2279 = vadd.f32 %v2277, -1.4531521
  %v2280 = vadd.f32 %v2278, -1.4531521
  %v2281 = vmul.f32 %v2279, %v2261
  %v2282 = vmul.f32 %v2280, %v2276
  %v2283 = vadd.f32 %v2281, 1.4214138
  %v2284 = vadd.f32 %v2282, 1.4214138
  %v2285 = vmul.f32 %v2283, %v2261
  %v2286 = vmul.f32 %v2284, %v2276
  %v2287 = vadd.f32 %v2285, -0.28449672
  %v2288 = vadd.f32 %v2286, -0.28449672
  %v2289 = vmul.f32 %v2287, %v2261
  %v2290 = vmul.f32 %v2288, %v2276
  %v2291 = vadd.f32 %v2289, 0.2548296
  %v2292 = vadd.f32 %v2290, 0.2548296
  %v2293 = vmul.f32 %v2291, %v2261
  %v2294 = vmul.f32 %v2292, %v2276
  %v2295 = vsub.f32 0.0, %v2241
  %v2296 = vsub.f32 0.0, %v2242
  %v2297 = vmul.f32 %v2295, %v2241
  %v2298 = vmul.f32 %v2296, %v2242
  %v2299 = vmul.f32 %v2297, 1.442695
  %v2300 = vpow.pop %v2299
  %v2301 = vmul.f32 %v2298, 1.442695
  %v2302 = vpow.pop %v2301
  %v2303 = vmul.f32 %v2293, %v2300
  %v2304 = vmul.f32 %v2294, %v2302
  %v2305 = vsub.f32 1.0, %v2303
  %v2306 = vsub.f32 1.0, %v2304
  %v2307 = vmul.f32 %v2239, %v2305
  %v2308 = vmul.f32 %v2240, %v2306
  %v2309 = vadd.f32 %v2307, 1.0
  %v2310 = vadd.f32 %v2308, 1.0
  %v2311 = vmul.f32 %v2233, %v2309
  %v2312 = vmul.f32 %v2234, %v2310
  %v2313 = vpack.c.bf16 %v2312, %v2311
  %v2314 = vld [vmem:[%s9] sm:$0xf]
  %v2315 = vld [vmem:[%s9 + $0x4] sm:$0xf]
  %v2316 = vld [vmem:[%s9 + $0x8] sm:$0xf]
  %v2317 = vld [vmem:[%s9 + $0xc] sm:$0xf]
  %v2318 = vperm.slane %v44, 4
  %v2323 = vunpack.c.l.b16 %v2314
  %v2324 = vunpack.c.l.b16 %v2315
  %v2325 = vunpack.c.l.b16 %v2316
  %v2326 = vunpack.c.l.b16 %v2317
  %v2327 = vpack.c.b16 %v2324, %v2323
  %v2328 = vpack.c.b16 %v2326, %v2325
  %v2332 = vsel %vm549, %v2313, 0
  %2334 = vmatpush.bf16.msra.mxu0 0
  %2335 = vmatpush.bf16.msra.mxu0 0
  %2336 = vmatpush.bf16.msra.mxu0 0
  %2337 = vmatpush.bf16.msra.mxu0 0
  %2338 = vmatpush.bf16.msra.mxu0 0
  %2339 = vmatpush.bf16.msra.mxu0 0
  %2340 = vmatpush.bf16.msra.mxu0 %v2328
  %2341 = vmatpush.bf16.msra.mxu0 %v2327
  %2342 = vmatmul.bf16.gmra.mxu0 %v2332
  %v2343 = vpop.f32.mrf.mxu0
  %v2344 = vadd.f32 %v2318, %v2343
  %v2345 = vpop.f32.mrf.mxu0
  %v2346 = vadd.f32 %v2318, %v2345
  %2347 = vdwg.mxu0
  %v2348 = vld [vmem:[%s10] sm:$0xff]
  %v2349 = vld [vmem:[%s10 + $0x8] sm:$0xff]
  %v2350 = vld [vmem:[%s10 + $0x10] sm:$0xff]
  %v2351 = vld [vmem:[%s10 + $0x18] sm:$0xff]
  %v2353 = vrot.slane %v2344, 1
  %2355 = vxpose.xlu0.b32.start [1/16] %v2353, 128
  %2356 = vxpose.xlu0.b32.cont [2/16] 0.0, 128
  %2357 = vxpose.xlu0.b32.cont [3/16] 0.0, 128
  %2358 = vxpose.xlu0.b32.cont [4/16] 0.0, 128
  %2359 = vxpose.xlu0.b32.cont [5/16] 0.0, 128
  %2360 = vxpose.xlu0.b32.cont [6/16] 0.0, 128
  %2361 = vxpose.xlu0.b32.cont [7/16] 0.0, 128
  %2362 = vxpose.xlu0.b32.cont [8/16] 0.0, 128
  %2363 = vxpose.xlu0.b32.cont [9/16] 0.0, 128
  %2364 = vxpose.xlu0.b32.cont [10/16] 0.0, 128
  %2365 = vxpose.xlu0.b32.cont [11/16] 0.0, 128
  %2366 = vxpose.xlu0.b32.cont [12/16] 0.0, 128
  %2367 = vxpose.xlu0.b32.cont [13/16] 0.0, 128
  %2368 = vxpose.xlu0.b32.cont [14/16] 0.0, 128
  %2369 = vxpose.xlu0.b32.cont [15/16] 0.0, 128
  %2370 = vxpose.xlu0.b32.end [16/16] 0.0, 128
  %v2371 = vpop.trf.xlu0
  %v2372 = vpop.trf.xlu0
  %v2373 = vpop.trf.xlu0
  %v2374 = vpop.trf.xlu0
  %v2375 = vpop.trf.xlu0
  %v2376 = vpop.trf.xlu0
  %v2377 = vpop.trf.xlu0
  %v2378 = vpop.trf.xlu0
  %v2379 = vpop.trf.xlu0
  %v2380 = vpop.trf.xlu0
  %v2381 = vpop.trf.xlu0
  %v2382 = vpop.trf.xlu0
  %v2383 = vpop.trf.xlu0
  %v2384 = vpop.trf.xlu0
  %v2385 = vpop.trf.xlu0
  %v2386 = vpop.trf.xlu0
  %2391 = vst [vmem:[#allocation1] ss:$2 sm:$0xff] %v2348
  %s2392 = scalar_lea.vmem [#allocation1], 16
  %2393 = vst [vmem:[%s2392] ss:$2 sm:$0xff] %v2349
  %s2394 = scalar_lea.vmem [#allocation1], 32
  %2395 = vst [vmem:[%s2394] ss:$2 sm:$0xff] %v2350
  %s2396 = scalar_lea.vmem [#allocation1], 48
  %2397 = vst [vmem:[%s2396] ss:$2 sm:$0xff] %v2351
  %v2398 = vld.sshfl [vmem:[#allocation1] sm:$0xff pattern:$0x75316420]
  %v2399 = vld.sshfl [vmem:[#allocation1 + $0x8] sm:$0xff pattern:$0x75316420]
  %v2400 = vld.sshfl [vmem:[#allocation1 + $0x10] sm:$0xff pattern:$0x75316420]
  %v2401 = vld.sshfl [vmem:[#allocation1 + $0x18] sm:$0xff pattern:$0x75316420]
  %v2402 = vld.sshfl [vmem:[#allocation1 + $0x20] sm:$0xff pattern:$0x75316420]
  %v2403 = vld.sshfl [vmem:[#allocation1 + $0x28] sm:$0xff pattern:$0x75316420]
  %v2404 = vld.sshfl [vmem:[#allocation1 + $0x30] sm:$0xff pattern:$0x75316420]
  %v2405 = vld.sshfl [vmem:[#allocation1 + $0x38] sm:$0xff pattern:$0x75316420]
  %vm2406 = vcmask 31744
  %v2408 = vsel %vm2406, %v2371, 0
  %vm2410 = vcmask 1043456
  %v2411 = vsel %vm2410, %v2398, 0
  %v2413 = vsel %vm2410, %v2399, 0
  %v2415 = vsel %vm2410, %v2400, 0
  %v2417 = vsel %vm2410, %v2401, 0
  %v2419 = vsel %vm2410, %v2402, 0
  %v2421 = vsel %vm2410, %v2403, 0
  %v2423 = vsel %vm2410, %v2404, 0
  %v2425 = vsel %vm2410, %v2405, 0
  %2427 = vmatpush.msra.mxu0 0.0
  %2428 = vmatpush.msra.mxu0 0.0
  %2429 = vmatpush.msra.mxu0 0.0
  %2430 = vmatpush.msra.mxu0 0.0
  %2431 = vmatpush.msra.mxu0 0.0
  %2432 = vmatpush.msra.mxu0 0.0
  %2433 = vmatpush.msra.mxu0 0.0
  %2434 = vmatpush.msra.mxu0 0.0
  %2435 = vmatpush.msra.mxu0 0.0
  %2436 = vmatpush.msra.mxu0 0.0
  %2437 = vmatpush.msra.mxu0 0.0
  %2438 = vmatpush.msra.mxu0 0.0
  %2439 = vmatpush.msra.mxu0 0.0
  %2440 = vmatpush.msra.mxu0 0.0
  %2441 = vmatpush.msra.mxu0 0.0
  %2442 = vmatpush.msra.mxu0 %v2411
  %2443 = vmatmul.f32.gmra.mxu0 %v2408
  %v2444 = vpop.f32.mrf.mxu0
  %v2445 = vadd.f32 0.0, %v2444
  %2446 = vdwg.mxu0
  %2447 = vmatpush.msra.mxu0 0.0
  %2448 = vmatpush.msra.mxu0 0.0
  %2449 = vmatpush.msra.mxu0 0.0
  %2450 = vmatpush.msra.mxu0 0.0
  %2451 = vmatpush.msra.mxu0 0.0
  %2452 = vmatpush.msra.mxu0 0.0
  %2453 = vmatpush.msra.mxu0 0.0
  %2454 = vmatpush.msra.mxu0 0.0
  %2455 = vmatpush.msra.mxu0 0.0
  %2456 = vmatpush.msra.mxu0 0.0
  %2457 = vmatpush.msra.mxu0 0.0
  %2458 = vmatpush.msra.mxu0 0.0
  %2459 = vmatpush.msra.mxu0 0.0
  %2460 = vmatpush.msra.mxu0 0.0
  %2461 = vmatpush.msra.mxu0 0.0
  %2462 = vmatpush.msra.mxu0 %v2413
  %2463 = vmatmul.f32.gmra.mxu0 %v2408
  %v2464 = vpop.f32.mrf.mxu0
  %v2465 = vadd.f32 0.0, %v2464
  %2466 = vdwg.mxu0
  %2467 = vmatpush.msra.mxu0 0.0
  %2468 = vmatpush.msra.mxu0 0.0
  %2469 = vmatpush.msra.mxu0 0.0
  %2470 = vmatpush.msra.mxu0 0.0
  %2471 = vmatpush.msra.mxu0 0.0
  %2472 = vmatpush.msra.mxu0 0.0
  %2473 = vmatpush.msra.mxu0 0.0
  %2474 = vmatpush.msra.mxu0 0.0
  %2475 = vmatpush.msra.mxu0 0.0
  %2476 = vmatpush.msra.mxu0 0.0
  %2477 = vmatpush.msra.mxu0 0.0
  %2478 = vmatpush.msra.mxu0 0.0
  %2479 = vmatpush.msra.mxu0 0.0
  %2480 = vmatpush.msra.mxu0 0.0
  %2481 = vmatpush.msra.mxu0 0.0
  %2482 = vmatpush.msra.mxu0 %v2415
  %2483 = vmatmul.f32.gmra.mxu0 %v2408
  %v2484 = vpop.f32.mrf.mxu0
  %v2485 = vadd.f32 0.0, %v2484
  %2486 = vdwg.mxu0
  %2487 = vmatpush.msra.mxu0 0.0
  %2488 = vmatpush.msra.mxu0 0.0
  %2489 = vmatpush.msra.mxu0 0.0
  %2490 = vmatpush.msra.mxu0 0.0
  %2491 = vmatpush.msra.mxu0 0.0
  %2492 = vmatpush.msra.mxu0 0.0
  %2493 = vmatpush.msra.mxu0 0.0
  %2494 = vmatpush.msra.mxu0 0.0
  %2495 = vmatpush.msra.mxu0 0.0
  %2496 = vmatpush.msra.mxu0 0.0
  %2497 = vmatpush.msra.mxu0 0.0
  %2498 = vmatpush.msra.mxu0 0.0
  %2499 = vmatpush.msra.mxu0 0.0
  %2500 = vmatpush.msra.mxu0 0.0
  %2501 = vmatpush.msra.mxu0 0.0
  %2502 = vmatpush.msra.mxu0 %v2417
  %2503 = vmatmul.f32.gmra.mxu0 %v2408
  %v2504 = vpop.f32.mrf.mxu0
  %v2505 = vadd.f32 0.0, %v2504
  %2506 = vdwg.mxu0
  %2507 = vmatpush.msra.mxu0 0.0
  %2508 = vmatpush.msra.mxu0 0.0
  %2509 = vmatpush.msra.mxu0 0.0
  %2510 = vmatpush.msra.mxu0 0.0
  %2511 = vmatpush.msra.mxu0 0.0
  %2512 = vmatpush.msra.mxu0 0.0
  %2513 = vmatpush.msra.mxu0 0.0
  %2514 = vmatpush.msra.mxu0 0.0
  %2515 = vmatpush.msra.mxu0 0.0
  %2516 = vmatpush.msra.mxu0 0.0
  %2517 = vmatpush.msra.mxu0 0.0
  %2518 = vmatpush.msra.mxu0 0.0
  %2519 = vmatpush.msra.mxu0 0.0
  %2520 = vmatpush.msra.mxu0 0.0
  %2521 = vmatpush.msra.mxu0 0.0
  %2522 = vmatpush.msra.mxu0 %v2419
  %2523 = vmatmul.f32.gmra.mxu0 %v2408
  %v2524 = vpop.f32.mrf.mxu0
  %v2525 = vadd.f32 0.0, %v2524
  %2526 = vdwg.mxu0
  %2527 = vmatpush.msra.mxu0 0.0
  %2528 = vmatpush.msra.mxu0 0.0
  %2529 = vmatpush.msra.mxu0 0.0
  %2530 = vmatpush.msra.mxu0 0.0
  %2531 = vmatpush.msra.mxu0 0.0
  %2532 = vmatpush.msra.mxu0 0.0
  %2533 = vmatpush.msra.mxu0 0.0
  %2534 = vmatpush.msra.mxu0 0.0
  %2535 = vmatpush.msra.mxu0 0.0
  %2536 = vmatpush.msra.mxu0 0.0
  %2537 = vmatpush.msra.mxu0 0.0
  %2538 = vmatpush.msra.mxu0 0.0
  %2539 = vmatpush.msra.mxu0 0.0
  %2540 = vmatpush.msra.mxu0 0.0
  %2541 = vmatpush.msra.mxu0 0.0
  %2542 = vmatpush.msra.mxu0 %v2421
  %2543 = vmatmul.f32.gmra.mxu0 %v2408
  %v2544 = vpop.f32.mrf.mxu0
  %v2545 = vadd.f32 0.0, %v2544
  %2546 = vdwg.mxu0
  %2547 = vmatpush.msra.mxu0 0.0
  %2548 = vmatpush.msra.mxu0 0.0
  %2549 = vmatpush.msra.mxu0 0.0
  %2550 = vmatpush.msra.mxu0 0.0
  %2551 = vmatpush.msra.mxu0 0.0
  %2552 = vmatpush.msra.mxu0 0.0
  %2553 = vmatpush.msra.mxu0 0.0
  %2554 = vmatpush.msra.mxu0 0.0
  %2555 = vmatpush.msra.mxu0 0.0
  %2556 = vmatpush.msra.mxu0 0.0
  %2557 = vmatpush.msra.mxu0 0.0
  %2558 = vmatpush.msra.mxu0 0.0
  %2559 = vmatpush.msra.mxu0 0.0
  %2560 = vmatpush.msra.mxu0 0.0
  %2561 = vmatpush.msra.mxu0 0.0
  %2562 = vmatpush.msra.mxu0 %v2423
  %2563 = vmatmul.f32.gmra.mxu0 %v2408
  %v2564 = vpop.f32.mrf.mxu0
  %v2565 = vadd.f32 0.0, %v2564
  %2566 = vdwg.mxu0
  %2567 = vmatpush.msra.mxu0 0.0
  %2568 = vmatpush.msra.mxu0 0.0
  %2569 = vmatpush.msra.mxu0 0.0
  %2570 = vmatpush.msra.mxu0 0.0
  %2571 = vmatpush.msra.mxu0 0.0
  %2572 = vmatpush.msra.mxu0 0.0
  %2573 = vmatpush.msra.mxu0 0.0
  %2574 = vmatpush.msra.mxu0 0.0
  %2575 = vmatpush.msra.mxu0 0.0
  %2576 = vmatpush.msra.mxu0 0.0
  %2577 = vmatpush.msra.mxu0 0.0
  %2578 = vmatpush.msra.mxu0 0.0
  %2579 = vmatpush.msra.mxu0 0.0
  %2580 = vmatpush.msra.mxu0 0.0
  %2581 = vmatpush.msra.mxu0 0.0
  %2582 = vmatpush.msra.mxu0 %v2425
  %2583 = vmatmul.f32.gmra.mxu0 %v2408
  %v2584 = vpop.f32.mrf.mxu0
  %v2585 = vadd.f32 0.0, %v2584
  %2586 = vdwg.mxu0
  %2587 = vst [vmem:[%s11] sm:$0xff] %v2445
  %2588 = vst [vmem:[%s11 + $0x8] sm:$0xff] %v2465
  %2589 = vst [vmem:[%s11 + $0x10] sm:$0xff] %v2485
  %2590 = vst [vmem:[%s11 + $0x18] sm:$0xff] %v2505
  %2591 = vst [vmem:[%s11 + $0x20] sm:$0xff] %v2525
  %2592 = vst [vmem:[%s11 + $0x28] sm:$0xff] %v2545
  %2593 = vst [vmem:[%s11 + $0x30] sm:$0xff] %v2565
  %2594 = vst [vmem:[%s11 + $0x38] sm:$0xff] %v2585
  %vm2596 = vcmask 1041408
  %v2597 = vrot.slane %v2344, 6
  %v2598 = vrot.slane %v2346, 6
  %v2599 = vsel %vm2596, %v2597, %v2598
  %2601 = vxpose.xlu0.b32.start [1/16] %v2599, 128
  %2602 = vxpose.xlu0.b32.cont [2/16] 0.0, 128
  %2603 = vxpose.xlu0.b32.cont [3/16] 0.0, 128
  %2604 = vxpose.xlu0.b32.cont [4/16] 0.0, 128
  %2605 = vxpose.xlu0.b32.cont [5/16] 0.0, 128
  %2606 = vxpose.xlu0.b32.cont [6/16] 0.0, 128
  %2607 = vxpose.xlu0.b32.cont [7/16] 0.0, 128
  %2608 = vxpose.xlu0.b32.cont [8/16] 0.0, 128
  %2609 = vxpose.xlu0.b32.cont [9/16] 0.0, 128
  %2610 = vxpose.xlu0.b32.cont [10/16] 0.0, 128
  %2611 = vxpose.xlu0.b32.cont [11/16] 0.0, 128
  %2612 = vxpose.xlu0.b32.cont [12/16] 0.0, 128
  %2613 = vxpose.xlu0.b32.cont [13/16] 0.0, 128
  %2614 = vxpose.xlu0.b32.cont [14/16] 0.0, 128
  %2615 = vxpose.xlu0.b32.cont [15/16] 0.0, 128
  %2616 = vxpose.xlu0.b32.end [16/16] 0.0, 128
  %v2617 = vpop.trf.xlu0
  %v2618 = vpop.trf.xlu0
  %v2619 = vpop.trf.xlu0
  %v2620 = vpop.trf.xlu0
  %v2621 = vpop.trf.xlu0
  %v2622 = vpop.trf.xlu0
  %v2623 = vpop.trf.xlu0
  %v2624 = vpop.trf.xlu0
  %v2625 = vpop.trf.xlu0
  %v2626 = vpop.trf.xlu0
  %v2627 = vpop.trf.xlu0
  %v2628 = vpop.trf.xlu0
  %v2629 = vpop.trf.xlu0
  %v2630 = vpop.trf.xlu0
  %v2631 = vpop.trf.xlu0
  %v2632 = vpop.trf.xlu0
  %2633 = vst [vmem:[#allocation1] ss:$2 sm:$0xff] %v2348
  %s2634 = scalar_lea.vmem [#allocation1], 16
  %2635 = vst [vmem:[%s2634] ss:$2 sm:$0xff] %v2349
  %s2636 = scalar_lea.vmem [#allocation1], 32
  %2637 = vst [vmem:[%s2636] ss:$2 sm:$0xff] %v2350
  %s2638 = scalar_lea.vmem [#allocation1], 48
  %2639 = vst [vmem:[%s2638] ss:$2 sm:$0xff] %v2351
  %v2640 = vld.sshfl [vmem:[#allocation1] sm:$0xff pattern:$0x75316420]
  %v2641 = vld.sshfl [vmem:[#allocation1 + $0x8] sm:$0xff pattern:$0x75316420]
  %v2642 = vld.sshfl [vmem:[#allocation1 + $0x10] sm:$0xff pattern:$0x75316420]
  %v2643 = vld.sshfl [vmem:[#allocation1 + $0x18] sm:$0xff pattern:$0x75316420]
  %v2644 = vld.sshfl [vmem:[#allocation1 + $0x20] sm:$0xff pattern:$0x75316420]
  %v2645 = vld.sshfl [vmem:[#allocation1 + $0x28] sm:$0xff pattern:$0x75316420]
  %v2646 = vld.sshfl [vmem:[#allocation1 + $0x30] sm:$0xff pattern:$0x75316420]
  %v2647 = vld.sshfl [vmem:[#allocation1 + $0x38] sm:$0xff pattern:$0x75316420]
  %v2649 = vsel %vm2406, %v2617, 0
  %v2651 = vsel %vm2410, %v2640, 0
  %v2653 = vsel %vm2410, %v2641, 0
  %v2655 = vsel %vm2410, %v2642, 0
  %v2657 = vsel %vm2410, %v2643, 0
  %v2659 = vsel %vm2410, %v2644, 0
  %v2661 = vsel %vm2410, %v2645, 0
  %v2663 = vsel %vm2410, %v2646, 0
  %v2665 = vsel %vm2410, %v2647, 0
  %2667 = vmatpush.msra.mxu0 0.0
  %2668 = vmatpush.msra.mxu0 0.0
  %2669 = vmatpush.msra.mxu0 0.0
  %2670 = vmatpush.msra.mxu0 0.0
  %2671 = vmatpush.msra.mxu0 0.0
  %2672 = vmatpush.msra.mxu0 0.0
  %2673 = vmatpush.msra.mxu0 0.0
  %2674 = vmatpush.msra.mxu0 0.0
  %2675 = vmatpush.msra.mxu0 0.0
  %2676 = vmatpush.msra.mxu0 0.0
  %2677 = vmatpush.msra.mxu0 0.0
  %2678 = vmatpush.msra.mxu0 0.0
  %2679 = vmatpush.msra.mxu0 0.0
  %2680 = vmatpush.msra.mxu0 0.0
  %2681 = vmatpush.msra.mxu0 0.0
  %2682 = vmatpush.msra.mxu0 %v2651
  %2683 = vmatmul.f32.gmra.mxu0 %v2649
  %v2684 = vpop.f32.mrf.mxu0
  %v2685 = vadd.f32 0.0, %v2684
  %2686 = vdwg.mxu0
  %2687 = vmatpush.msra.mxu0 0.0
  %2688 = vmatpush.msra.mxu0 0.0
  %2689 = vmatpush.msra.mxu0 0.0
  %2690 = vmatpush.msra.mxu0 0.0
  %2691 = vmatpush.msra.mxu0 0.0
  %2692 = vmatpush.msra.mxu0 0.0
  %2693 = vmatpush.msra.mxu0 0.0
  %2694 = vmatpush.msra.mxu0 0.0
  %2695 = vmatpush.msra.mxu0 0.0
  %2696 = vmatpush.msra.mxu0 0.0
  %2697 = vmatpush.msra.mxu0 0.0
  %2698 = vmatpush.msra.mxu0 0.0
  %2699 = vmatpush.msra.mxu0 0.0
  %2700 = vmatpush.msra.mxu0 0.0
  %2701 = vmatpush.msra.mxu0 0.0
  %2702 = vmatpush.msra.mxu0 %v2653
  %2703 = vmatmul.f32.gmra.mxu0 %v2649
  %v2704 = vpop.f32.mrf.mxu0
  %v2705 = vadd.f32 0.0, %v2704
  %2706 = vdwg.mxu0
  %2707 = vmatpush.msra.mxu0 0.0
  %2708 = vmatpush.msra.mxu0 0.0
  %2709 = vmatpush.msra.mxu0 0.0
  %2710 = vmatpush.msra.mxu0 0.0
  %2711 = vmatpush.msra.mxu0 0.0
  %2712 = vmatpush.msra.mxu0 0.0
  %2713 = vmatpush.msra.mxu0 0.0
  %2714 = vmatpush.msra.mxu0 0.0
  %2715 = vmatpush.msra.mxu0 0.0
  %2716 = vmatpush.msra.mxu0 0.0
  %2717 = vmatpush.msra.mxu0 0.0
  %2718 = vmatpush.msra.mxu0 0.0
  %2719 = vmatpush.msra.mxu0 0.0
  %2720 = vmatpush.msra.mxu0 0.0
  %2721 = vmatpush.msra.mxu0 0.0
  %2722 = vmatpush.msra.mxu0 %v2655
  %2723 = vmatmul.f32.gmra.mxu0 %v2649
  %v2724 = vpop.f32.mrf.mxu0
  %v2725 = vadd.f32 0.0, %v2724
  %2726 = vdwg.mxu0
  %2727 = vmatpush.msra.mxu0 0.0
  %2728 = vmatpush.msra.mxu0 0.0
  %2729 = vmatpush.msra.mxu0 0.0
  %2730 = vmatpush.msra.mxu0 0.0
  %2731 = vmatpush.msra.mxu0 0.0
  %2732 = vmatpush.msra.mxu0 0.0
  %2733 = vmatpush.msra.mxu0 0.0
  %2734 = vmatpush.msra.mxu0 0.0
  %2735 = vmatpush.msra.mxu0 0.0
  %2736 = vmatpush.msra.mxu0 0.0
  %2737 = vmatpush.msra.mxu0 0.0
  %2738 = vmatpush.msra.mxu0 0.0
  %2739 = vmatpush.msra.mxu0 0.0
  %2740 = vmatpush.msra.mxu0 0.0
  %2741 = vmatpush.msra.mxu0 0.0
  %2742 = vmatpush.msra.mxu0 %v2657
  %2743 = vmatmul.f32.gmra.mxu0 %v2649
  %v2744 = vpop.f32.mrf.mxu0
  %v2745 = vadd.f32 0.0, %v2744
  %2746 = vdwg.mxu0
  %2747 = vmatpush.msra.mxu0 0.0
  %2748 = vmatpush.msra.mxu0 0.0
  %2749 = vmatpush.msra.mxu0 0.0
  %2750 = vmatpush.msra.mxu0 0.0
  %2751 = vmatpush.msra.mxu0 0.0
  %2752 = vmatpush.msra.mxu0 0.0
  %2753 = vmatpush.msra.mxu0 0.0
  %2754 = vmatpush.msra.mxu0 0.0
  %2755 = vmatpush.msra.mxu0 0.0
  %2756 = vmatpush.msra.mxu0 0.0
  %2757 = vmatpush.msra.mxu0 0.0
  %2758 = vmatpush.msra.mxu0 0.0
  %2759 = vmatpush.msra.mxu0 0.0
  %2760 = vmatpush.msra.mxu0 0.0
  %2761 = vmatpush.msra.mxu0 0.0
  %2762 = vmatpush.msra.mxu0 %v2659
  %2763 = vmatmul.f32.gmra.mxu0 %v2649
  %v2764 = vpop.f32.mrf.mxu0
  %v2765 = vadd.f32 0.0, %v2764
  %2766 = vdwg.mxu0
  %2767 = vmatpush.msra.mxu0 0.0
  %2768 = vmatpush.msra.mxu0 0.0
  %2769 = vmatpush.msra.mxu0 0.0
  %2770 = vmatpush.msra.mxu0 0.0
  %2771 = vmatpush.msra.mxu0 0.0
  %2772 = vmatpush.msra.mxu0 0.0
  %2773 = vmatpush.msra.mxu0 0.0
  %2774 = vmatpush.msra.mxu0 0.0
  %2775 = vmatpush.msra.mxu0 0.0
  %2776 = vmatpush.msra.mxu0 0.0
  %2777 = vmatpush.msra.mxu0 0.0
  %2778 = vmatpush.msra.mxu0 0.0
  %2779 = vmatpush.msra.mxu0 0.0
  %2780 = vmatpush.msra.mxu0 0.0
  %2781 = vmatpush.msra.mxu0 0.0
  %2782 = vmatpush.msra.mxu0 %v2661
  %2783 = vmatmul.f32.gmra.mxu0 %v2649
  %v2784 = vpop.f32.mrf.mxu0
  %v2785 = vadd.f32 0.0, %v2784
  %2786 = vdwg.mxu0
  %2787 = vmatpush.msra.mxu0 0.0
  %2788 = vmatpush.msra.mxu0 0.0
  %2789 = vmatpush.msra.mxu0 0.0
  %2790 = vmatpush.msra.mxu0 0.0
  %2791 = vmatpush.msra.mxu0 0.0
  %2792 = vmatpush.msra.mxu0 0.0
  %2793 = vmatpush.msra.mxu0 0.0
  %2794 = vmatpush.msra.mxu0 0.0
  %2795 = vmatpush.msra.mxu0 0.0
  %2796 = vmatpush.msra.mxu0 0.0
  %2797 = vmatpush.msra.mxu0 0.0
  %2798 = vmatpush.msra.mxu0 0.0
  %2799 = vmatpush.msra.mxu0 0.0
  %2800 = vmatpush.msra.mxu0 0.0
  %2801 = vmatpush.msra.mxu0 0.0
  %2802 = vmatpush.msra.mxu0 %v2663
  %2803 = vmatmul.f32.gmra.mxu0 %v2649
  %v2804 = vpop.f32.mrf.mxu0
  %v2805 = vadd.f32 0.0, %v2804
  %2806 = vdwg.mxu0
  %2807 = vmatpush.msra.mxu0 0.0
  %2808 = vmatpush.msra.mxu0 0.0
  %2809 = vmatpush.msra.mxu0 0.0
  %2810 = vmatpush.msra.mxu0 0.0
  %2811 = vmatpush.msra.mxu0 0.0
  %2812 = vmatpush.msra.mxu0 0.0
  %2813 = vmatpush.msra.mxu0 0.0
  %2814 = vmatpush.msra.mxu0 0.0
  %2815 = vmatpush.msra.mxu0 0.0
  %2816 = vmatpush.msra.mxu0 0.0
  %2817 = vmatpush.msra.mxu0 0.0
  %2818 = vmatpush.msra.mxu0 0.0
  %2819 = vmatpush.msra.mxu0 0.0
  %2820 = vmatpush.msra.mxu0 0.0
  %2821 = vmatpush.msra.mxu0 0.0
  %2822 = vmatpush.msra.mxu0 %v2665
  %2823 = vmatmul.f32.gmra.mxu0 %v2649
  %v2824 = vpop.f32.mrf.mxu0
  %v2825 = vadd.f32 0.0, %v2824
  %2826 = vdwg.mxu0
  %2827 = vst [vmem:[%s11 + $0x40] sm:$0xff] %v2685
  %2828 = vst [vmem:[%s11 + $0x48] sm:$0xff] %v2705
  %2829 = vst [vmem:[%s11 + $0x50] sm:$0xff] %v2725
  %2830 = vst [vmem:[%s11 + $0x58] sm:$0xff] %v2745
  %2831 = vst [vmem:[%s11 + $0x60] sm:$0xff] %v2765
  %2832 = vst [vmem:[%s11 + $0x68] sm:$0xff] %v2785
  %2833 = vst [vmem:[%s11 + $0x70] sm:$0xff] %v2805
  %2834 = vst [vmem:[%s11 + $0x78] sm:$0xff] %v2825
  // Predicated region
  $region46: #{forward.1} parent=0 // pred_check
    _
  $region47: #{forward.1} parent=0 // pred_check_branch
    %2836 = sbr.rel (0) target = $region49
  $region48: #{forward.1} parent=0 // pred_region
    _
  $region49: #{forward.1} parent=0 // pred_fallthru
    _
  // Predicated region
  $region50: #{forward.1} parent=0 // pred_check
    _
  $region51: #{forward.1} parent=0 // pred_check_branch
    %2838 = sbr.rel (0) target = $region53
  $region52: #{forward.1} parent=0 // pred_region
    _
  $region53: #{forward.1} parent=0 // pred_fallthru
    _

</llo_original>
